<compile_context>
chip_gen: v5e
topology: v5e:2x2
jax: 0.10.0
libtpu: 0.0.40
codegen_flags: <defaults>
</compile_context>

<pallas_src>
import functools

import jax
import jax.numpy as jnp
from jax import lax
from jax.experimental import pallas as pl
from jax.experimental.pallas import tpu as pltpu

VMEM_LIMIT = 48 * 1024 * 1024          # safe on v5e/v6e (128 MiB) and v7x (64 MiB)
MM_TM, MM_TN, MM_TK = 512, 512, 512    # dense-linear tiles (bf16 operands)
GCN_TM, GCN_TK = 256, 256              # fused GCN-layer tiles
GRAM_T = 256                           # z_u @ z_u^T output tile


def _rnd(n, m):
    return ((n + m - 1) // m) * m


def _pad2(x, r, c):
    return jnp.pad(x, ((0, r - x.shape[0]), (0, c - x.shape[1])))


def _pad3(x, a, b, c):
    return jnp.pad(x, ((0, a - x.shape[0]), (0, b - x.shape[1]), (0, c - x.shape[2])))


# --------------------------------------------------------------------------
# Kernel 1: tiled dense linear  y = relu?(a @ b + bias)
# --------------------------------------------------------------------------
def _matmul_kernel(a_ref, b_ref, bias_ref, o_ref, acc_ref, *, relu):
    k = pl.program_id(2)

    @pl.when(k == 0)
    def _():
        acc_ref[...] = jnp.zeros_like(acc_ref)

    acc_ref[...] += jnp.dot(a_ref[...], b_ref[...],
                            preferred_element_type=jnp.float32)

    @pl.when(k == pl.num_programs(2) - 1)
    def _():
        y = acc_ref[...] + bias_ref[...]
        if relu:
            y = jnp.maximum(y, 0.0)
        o_ref[...] = y


def pallas_matmul(a, b, bias, relu=False):
    """y = relu?(a @ b + bias); a:(M,K) b:(K,N) bias:(N,). bf16 in, f32 acc."""
    M, K = a.shape
    K2, N = b.shape
    assert K == K2
    tm = min(MM_TM, _rnd(M, 8))
    tn = min(MM_TN, _rnd(N, 128))
    tk = min(MM_TK, _rnd(K, 128))
    Mp, Np, Kp = _rnd(M, tm), _rnd(N, tn), _rnd(K, tk)

    a_p = _pad2(a.astype(jnp.float32), Mp, Kp).astype(jnp.bfloat16)
    b_p = _pad2(b.astype(jnp.float32), Kp, Np).astype(jnp.bfloat16)
    bias_p = _pad2(bias.reshape(1, -1).astype(jnp.float32), 1, Np)

    out = pl.pallas_call(
        functools.partial(_matmul_kernel, relu=relu),
        out_shape=jax.ShapeDtypeStruct((Mp, Np), jnp.float32),
        grid_spec=pltpu.PrefetchScalarGridSpec(
            num_scalar_prefetch=0,
            grid=(Mp // tm, Np // tn, Kp // tk),
            in_specs=[
                pl.BlockSpec((tm, tk), lambda i, j, k: (i, k)),
                pl.BlockSpec((tk, tn), lambda i, j, k: (k, j)),
                pl.BlockSpec((1, tn), lambda i, j, k: (0, j)),
            ],
            out_specs=pl.BlockSpec((tm, tn), lambda i, j, k: (i, j)),
            scratch_shapes=[pltpu.VMEM((tm, tn), jnp.float32)],
        ),
        compiler_params=pltpu.CompilerParams(
            dimension_semantics=("parallel", "parallel", "arbitrary"),
            vmem_limit_bytes=VMEM_LIMIT),
    )(a_p, b_p, bias_p)
    return out[:M, :N]


# --------------------------------------------------------------------------
# Kernel 2: fused GCN layer   out[s] = relu?( adj @ (h[s] @ W) + b )
#   h is (S, N, Din) -- S independent samples sharing the same graph.
#   Both GEMMs run in one kernel; the HW intermediate never touches HBM.
# --------------------------------------------------------------------------
def _gcn_layer_kernel(adj_ref, h_ref, w_ref, b_ref, o_ref, acc_ref, *, relu):
    k = pl.program_id(1)

    @pl.when(k == 0)
    def _():
        acc_ref[...] = jnp.zeros_like(acc_ref)

    adj_b = adj_ref[...]
    w = w_ref[...]
    h = h_ref[...]
    for s in range(h_ref.shape[0]):          # S is tiny (K+J <= 2); static unroll
        hw = jnp.dot(h[s], w, preferred_element_type=jnp.float32)
        acc_ref[s] += jnp.dot(adj_b, hw.astype(jnp.bfloat16),
                              preferred_element_type=jnp.float32)

    @pl.when(k == pl.num_programs(1) - 1)
    def _():
        y = acc_ref[...] + b_ref[...]        # (S,tm,Dout) + (1,Dout) broadcast
        if relu:
            y = jnp.maximum(y, 0.0)
        o_ref[...] = y


def fused_gcn_layer(adj, h, W, b, relu):
    """adj:(N,N) h:(S,N,Din) W:(Din,Dout) b:(Dout,) -> (S,N,Dout)."""
    S, N, Din = h.shape
    assert W.shape[0] == Din
    Dout = W.shape[1]
    tm = min(GCN_TM, _rnd(N, 8))
    tk = min(GCN_TK, _rnd(N, 128))
    Mp, Kp = _rnd(N, tm), _rnd(N, tk)
    Dinp, Doutp = _rnd(Din, 128), _rnd(Dout, 128)

    adj_p = _pad2(adj.astype(jnp.float32), Mp, Kp).astype(jnp.bfloat16)
    h_p = _pad3(h.astype(jnp.float32), S, Kp, Dinp).astype(jnp.bfloat16)
    w_p = _pad2(W.astype(jnp.float32), Dinp, Doutp).astype(jnp.bfloat16)
    b_p = _pad2(b.reshape(1, -1).astype(jnp.float32), 1, Doutp)

    out = pl.pallas_call(
        functools.partial(_gcn_layer_kernel, relu=relu),
        out_shape=jax.ShapeDtypeStruct((S, Mp, Doutp), jnp.float32),
        grid_spec=pltpu.PrefetchScalarGridSpec(
            num_scalar_prefetch=0,
            grid=(Mp // tm, Kp // tk),
            in_specs=[
                pl.BlockSpec((tm, tk), lambda i, k: (i, k)),
                pl.BlockSpec((S, tk, Dinp), lambda i, k: (0, k, 0)),
                pl.BlockSpec((Dinp, Doutp), lambda i, k: (0, 0)),
                pl.BlockSpec((1, Doutp), lambda i, k: (0, 0)),
            ],
            out_specs=pl.BlockSpec((S, tm, Doutp), lambda i, k: (0, i, 0)),
            scratch_shapes=[pltpu.VMEM((S, tm, Doutp), jnp.float32)],
        ),
        compiler_params=pltpu.CompilerParams(
            dimension_semantics=("parallel", "arbitrary"),
            vmem_limit_bytes=VMEM_LIMIT),
    )(adj_p, h_p, w_p, b_p)
    return out[:, :N, :Dout]


# --------------------------------------------------------------------------
# Kernel 3: batched Gram matrix  out[k] = z[k] @ z[k]^T  (no host transpose)
# --------------------------------------------------------------------------
def _gram_kernel(zl_ref, zr_ref, o_ref):
    o_ref[0] = lax.dot_general(zl_ref[0], zr_ref[0],
                               (((1,), (1,)), ((), ())),
                               preferred_element_type=jnp.float32)


def pallas_batched_gram(z):
    """z:(K,N,D) -> (K,N,N) with out[k] = z[k] @ z[k]^T."""
    Kb, N, D = z.shape
    t = min(GRAM_T, _rnd(N, 128))
    Np, Dp = _rnd(N, t), _rnd(D, 128)
    z_p = _pad3(z.astype(jnp.float32), Kb, Np, Dp).astype(jnp.bfloat16)

    out = pl.pallas_call(
        _gram_kernel,
        out_shape=jax.ShapeDtypeStruct((Kb, Np, Np), jnp.float32),
        grid_spec=pltpu.PrefetchScalarGridSpec(
            num_scalar_prefetch=0,
            grid=(Kb, Np // t, Np // t),
            in_specs=[
                pl.BlockSpec((1, t, Dp), lambda k, i, j: (k, i, 0)),
                pl.BlockSpec((1, t, Dp), lambda k, i, j: (k, j, 0)),
            ],
            out_specs=pl.BlockSpec((1, t, t), lambda k, i, j: (k, i, j)),
        ),
        compiler_params=pltpu.CompilerParams(
            dimension_semantics=("parallel", "parallel", "parallel"),
            vmem_limit_bytes=VMEM_LIMIT),
    )(z_p, z_p)
    return out[:, :N, :N]


# --------------------------------------------------------------------------
# Kernel 4: fused L1 row-normalize + matmul
#   out[k] = normalize(x, p=1, dim=1) @ z[k]
# --------------------------------------------------------------------------
def _norm_mm_kernel(x_ref, z_ref, o_ref):
    xb = x_ref[...]
    s = jnp.sum(jnp.abs(xb), axis=1, keepdims=True)
    w = xb / jnp.maximum(s, 1e-12)           # matches F.normalize(p=1, eps=1e-12)
    o_ref[0] = jnp.dot(w.astype(jnp.bfloat16), z_ref[0],
                       preferred_element_type=jnp.float32)


def pallas_norm_matmul(x, z):
    """x:(N,A) z:(K,A,D) -> (K,N,D)."""
    N, A = x.shape
    Kb, A2, D = z.shape
    assert A == A2
    tm = min(256, _rnd(N, 8))
    Np, Ap, Dp = _rnd(N, tm), _rnd(A, 128), _rnd(D, 128)
    x_p = _pad2(x.astype(jnp.float32), Np, Ap)
    z_p = _pad3(z.astype(jnp.float32), Kb, Ap, Dp).astype(jnp.bfloat16)

    out = pl.pallas_call(
        _norm_mm_kernel,
        out_shape=jax.ShapeDtypeStruct((Kb, Np, Dp), jnp.float32),
        grid_spec=pltpu.PrefetchScalarGridSpec(
            num_scalar_prefetch=0,
            grid=(Kb, Np // tm),
            in_specs=[
                pl.BlockSpec((tm, Ap), lambda k, i: (i, 0)),
                pl.BlockSpec((1, Ap, Dp), lambda k, i: (k, 0, 0)),
            ],
            out_specs=pl.BlockSpec((1, tm, Dp), lambda k, i: (k, i, 0)),
        ),
        compiler_params=pltpu.CompilerParams(
            dimension_semantics=("parallel", "parallel"),
            vmem_limit_bytes=VMEM_LIMIT),
    )(x_p, z_p)
    return out[:, :N, :D]


# --------------------------------------------------------------------------
# Kernel 5: sigma = exp(0.5*logv); z = mu + sigma*eps (row-tiled elementwise)
# TODO(synk): could be folded into the producer GCN/MLP GEMM epilogues and use
# in-kernel pltpu.prng_* for eps; kept standalone since mu/logv come from
# different producer kernels.
# --------------------------------------------------------------------------
def _sigma_z_kernel(logv_ref, mu_ref, eps_ref, sigma_ref, z_ref):
    sigma = jnp.exp(0.5 * logv_ref[...])
    sigma_ref[...] = sigma
    z_ref[...] = mu_ref[...] + sigma * eps_ref[...]


def pallas_sigma_and_sample(logv, mu, eps):
    M, D = logv.shape
    tm = min(512, _rnd(M, 8))
    Mp = _rnd(M, tm)
    pad = lambda v: _pad2(v.astype(jnp.float32), Mp, D)
    spec = pl.BlockSpec((tm, D), lambda i: (i, 0))
    sig, z = pl.pallas_call(
        _sigma_z_kernel,
        out_shape=(jax.ShapeDtypeStruct((Mp, D), jnp.float32),
                   jax.ShapeDtypeStruct((Mp, D), jnp.float32)),
        grid_spec=pltpu.PrefetchScalarGridSpec(
            num_scalar_prefetch=0,
            grid=(Mp // tm,),
            in_specs=[spec, spec, spec],
            out_specs=(spec, spec),
        ),
        compiler_params=pltpu.CompilerParams(
            dimension_semantics=("parallel",),
            vmem_limit_bytes=VMEM_LIMIT),
    )(pad(logv), pad(mu), pad(eps))
    return sig[:M], z[:M]


# --------------------------------------------------------------------------
# Sub-module forward passes
# --------------------------------------------------------------------------
def mlp_forward(layers, x):
    """DenseModel: Linear + ReLU (except last layer); handles 2-D / 3-D input."""
    orig_shape = x.shape
    h = x.reshape(-1, orig_shape[-1])
    for i, (W, b) in enumerate(layers):
        h = pallas_matmul(h, W, b, relu=(i < len(layers) - 1))
    return h.reshape(orig_shape[:-1] + (h.shape[-1],))


def gcn_forward(layers, adj, x):
    """GCN: h <- act(adj @ (h @ W) + b), fused per layer; 2-D or 3-D input."""
    squeeze = (x.ndim == 2)
    h = x[None] if squeeze else jnp.transpose(x, (1, 0, 2))   # (S, N, Din)
    for i, (W, b) in enumerate(layers):
        h = fused_gcn_layer(adj, h, W, b, relu=(i < len(layers) - 1))
    return h[0] if squeeze else jnp.transpose(h, (1, 0, 2))


# --------------------------------------------------------------------------
# Parameter init (deterministic, xavier-uniform weights, zero bias)
# --------------------------------------------------------------------------
def xavier_uniform(key, shape):
    fan_in, fan_out = shape
    limit = (6.0 / (fan_in + fan_out)) ** 0.5
    return jax.random.uniform(key, shape, jnp.float32, -limit, limit)


def init_stack(key, in_dim, hid_dim, out_dim, n_layers):
    dims = [in_dim] + [hid_dim] * (n_layers - 1) + [out_dim]
    layers = []
    for i in range(n_layers):
        key, k = jax.random.split(key)
        W = xavier_uniform(k, (dims[i], dims[i + 1]))
        b = jnp.zeros((dims[i + 1],), jnp.float32)
        layers.append((W, b))
    return layers


def init_params(key, num_nodes, input_dim, num_hidden, out_dim, noise_dim,
                encoder_layers, decoder_layers):
    k1, k2, k3, k4, k5 = jax.random.split(key, 5)
    return {
        "node_mu_nn": init_stack(k1, input_dim + noise_dim, num_hidden, out_dim, encoder_layers),
        "node_var_nn": init_stack(k2, input_dim, num_hidden, out_dim, encoder_layers),
        "attr_mu_nn": init_stack(k3, num_nodes + noise_dim, num_hidden, out_dim, 2),
        "attr_var_nn": init_stack(k4, num_nodes, num_hidden, out_dim, 2),
        "decoder": init_stack(k5, 2 * out_dim, num_hidden, input_dim, decoder_layers),
    }


# --------------------------------------------------------------------------
# SeeGera_Independent forward
# --------------------------------------------------------------------------
def seegera_forward(params, adj, x, key, K=1, J=1, noise_dim=5):
    # TODO(synk): Bernoulli/Normal sampling (torch.distributions) is done with
    # jax.random host-side glue rather than in-kernel PRNG.
    N, attr_dim = x.shape
    out_dim = params["node_var_nn"][-1][0].shape[1]
    kn1, kn2, ke1, ke2 = jax.random.split(key, 4)

    # ---------------- node branch ----------------
    node_mu_input = jnp.broadcast_to(x[:, None, :], (N, K + J, attr_dim))
    node_noise = jax.random.bernoulli(kn1, 0.5, (N, K + J, noise_dim)).astype(jnp.float32)
    noised_node_mu_input = jnp.concatenate([node_noise, node_mu_input], axis=2)
    node_mu = gcn_forward(params["node_mu_nn"], adj, noised_node_mu_input)   # (N, K+J, out)
    node_mu_iw = node_mu[:, :K, :]
    node_mu_star = node_mu[:, K:, :]
    node_mu_iw_vec = jnp.mean(node_mu_iw, axis=1)

    node_logv = gcn_forward(params["node_var_nn"], adj, x)                   # (N, out)
    node_logv_iw = jnp.broadcast_to(node_logv[:, None, :], (N, K, out_dim))
    eps_node = jax.random.normal(ke1, (N, K, out_dim), jnp.float32)
    sig2d, z2d = pallas_sigma_and_sample(node_logv_iw.reshape(N * K, out_dim),
                                         node_mu_iw.reshape(N * K, out_dim),
                                         eps_node.reshape(N * K, out_dim))
    node_sigma_iw1 = sig2d.reshape(N, K, out_dim)
    node_z_samples_iw = z2d.reshape(N, K, out_dim)
    merged_node_sigma = jnp.broadcast_to(node_sigma_iw1[:, :, None, :], (N, K, J + 1, out_dim))
    merged_node_z_samples = jnp.broadcast_to(node_z_samples_iw[:, :, None, :], (N, K, J + 1, out_dim))
    node_mu_star1 = jnp.broadcast_to(node_mu_star[:, None, :, :], (N, K, J, out_dim))
    merged_node_mu = jnp.concatenate([node_mu_star1, node_mu_iw[:, :, None, :]], axis=2)

    # ---------------- attr branch ----------------
    xt = x.T                                                                 # (attr_dim, N)
    attr_mu_input = jnp.broadcast_to(xt[:, None, :], (attr_dim, K + J, N))
    attr_noise = jax.random.bernoulli(kn2, 0.5, (attr_dim, K + J, noise_dim)).astype(jnp.float32)
    noised_attr_mu_input = jnp.concatenate([attr_noise, attr_mu_input], axis=2)
    attr_mu = mlp_forward(params["attr_mu_nn"], noised_attr_mu_input)        # (attr_dim, K+J, out)
    attr_mu_iw = attr_mu[:, :K, :]
    attr_mu_star = attr_mu[:, K:, :]
    attr_mu_iw_vec = jnp.mean(attr_mu_iw, axis=1)

    attr_logv = mlp_forward(params["attr_var_nn"], xt)                       # (attr_dim, out)
    attr_logv_iw = jnp.broadcast_to(attr_logv[:, None, :], (attr_dim, K, out_dim))
    eps_attr = jax.random.normal(ke2, (attr_dim, K, out_dim), jnp.float32)
    asig2d, az2d = pallas_sigma_and_sample(attr_logv_iw.reshape(attr_dim * K, out_dim),
                                           attr_mu_iw.reshape(attr_dim * K, out_dim),
                                           eps_attr.reshape(attr_dim * K, out_dim))
    attr_sigma_iw1 = asig2d.reshape(attr_dim, K, out_dim)
    attr_z_samples_iw = az2d.reshape(attr_dim, K, out_dim)
    merged_attr_sigma = jnp.broadcast_to(attr_sigma_iw1[:, :, None, :], (attr_dim, K, J + 1, out_dim))
    merged_attr_z_samples = jnp.broadcast_to(attr_z_samples_iw[:, :, None, :], (attr_dim, K, J + 1, out_dim))
    attr_mu_star1 = jnp.broadcast_to(attr_mu_star[:, None, :, :], (attr_dim, K, J, out_dim))
    merged_attr_mu = jnp.concatenate([attr_mu_star1, attr_mu_iw[:, :, None, :]], axis=2)

    # ---------------- decode (dropout = 0.0 -> identity), batched over K ----
    z_u_k = jnp.transpose(node_z_samples_iw, (1, 0, 2))      # (K, N, out)
    z_a_k = jnp.transpose(attr_z_samples_iw, (1, 0, 2))      # (K, attr_dim, out)
    logits_node = pallas_batched_gram(z_u_k)                 # (K, N, N)
    fine_grained = pallas_norm_matmul(x, z_a_k)              # (K, N, out)  (L1-norm fused)
    concat_features = jnp.concatenate(
        [node_z_samples_iw, jnp.transpose(fine_grained, (1, 0, 2))], axis=2)  # (N, K, 2*out)
    logits_attr = gcn_forward(params["decoder"], adj, concat_features)        # (N, K, attr_dim)

    reconstruct_node_logits = jnp.transpose(logits_node, (1, 2, 0))           # (N, N, K)
    reconstruct_attr_logits = jnp.transpose(logits_attr, (0, 2, 1))           # (N, attr_dim, K)

    return (merged_node_mu, merged_node_sigma, merged_node_z_samples, node_logv_iw,
            node_z_samples_iw, merged_attr_mu, merged_attr_sigma, merged_attr_z_samples,
            attr_logv_iw, attr_z_samples_iw, reconstruct_node_logits,
            reconstruct_attr_logits, node_mu_iw_vec, attr_mu_iw_vec)


seegera_forward_jit = jax.jit(seegera_forward, static_argnames=("K", "J", "noise_dim"))


# --------------------------------------------------------------------------
if __name__ == "__main__":
    # Small synthetic configuration consistent with the module's __init__.
    num_nodes, input_dim = 16, 12
    num_hidden, out_dim, noise_dim = 32, 16, 5
    K, J = 1, 1
    encoder_layers = decoder_layers = 2

    root = jax.random.PRNGKey(0)
    kp, kx, ka, kf = jax.random.split(root, 4)

    params = init_params(kp, num_nodes, input_dim, num_hidden, out_dim,
                         noise_dim, encoder_layers, decoder_layers)

    # node features
    x = jax.random.normal(kx, (num_nodes, input_dim), jnp.float32)

    # symmetric normalized adjacency with self-loops (deterministic)
    a_raw = jax.random.bernoulli(ka, 0.3, (num_nodes, num_nodes)).astype(jnp.float32)
    a_sym = jnp.clip(a_raw + a_raw.T, 0.0, 1.0) + jnp.eye(num_nodes, dtype=jnp.float32)
    deg = jnp.sum(a_sym, axis=1)
    d_inv_sqrt = 1.0 / jnp.sqrt(deg)
    adj = a_sym * d_inv_sqrt[:, None] * d_inv_sqrt[None, :]

    outputs = seegera_forward_jit(params, adj, x, kf, K=K, J=J, noise_dim=noise_dim)
    outputs = jax.block_until_ready(outputs)

    # light sanity checks on output shapes / values
    assert outputs[0].shape == (num_nodes, K, J + 1, out_dim)        # merged_node_mu
    assert outputs[10].shape == (num_nodes, num_nodes, K)            # reconstruct_node_logits
    assert outputs[11].shape == (num_nodes, input_dim, K)            # reconstruct_attr_logits
    assert outputs[13].shape == (input_dim, out_dim)                 # attr_mu_iw_vec
    assert all(bool(jnp.all(jnp.isfinite(o))) for o in outputs)

    print("KERNEL_OK")
</pallas_src>

<mosaic_0001>
module attributes {stable_mosaic.version = 11 : i64} {
  func.func @_gcn_layer_kernel(%arg0: i32, %arg1: i32, %arg2: memref<16x128xbf16, #tpu.memory_space<vmem>>, %arg3: memref<2x128x128xbf16, #tpu.memory_space<vmem>>, %arg4: memref<128x128xbf16, #tpu.memory_space<vmem>>, %arg5: memref<1x128xf32, #tpu.memory_space<vmem>>, %arg6: memref<2x16x128xf32, #tpu.memory_space<vmem>>, %arg7: memref<2x16x128xf32, #tpu.memory_space<vmem>>) attributes {dimension_semantics = [#tpu.dimension_semantics<parallel>, #tpu.dimension_semantics<arbitrary>], iteration_bounds = array<i64: 1, 1>, scalar_prefetch = 0 : i64, scratch_operands = 1 : i64, tpu.core_type = #tpu.core_type<tc>, window_params = [{transform_indices = @transform_0, window_bounds = array<i64: 16, 128>}, {transform_indices = @transform_1, window_bounds = array<i64: 2, 128, 128>}, {pipeline_mode = #tpu.pipeline_mode<synchronous>, transform_indices = @transform_2, window_bounds = array<i64: 128, 128>}, {pipeline_mode = #tpu.pipeline_mode<synchronous>, transform_indices = @transform_3, window_bounds = array<i64: 1, 128>}, {transform_indices = @transform_4, window_bounds = array<i64: 2, 16, 128>}]} {
    %c0_i32 = arith.constant 0 : i32
    %0 = arith.cmpi eq, %arg1, %c0_i32 : i32
    %1 = arith.extui %0 : i1 to i32
    %c0_i32_0 = arith.constant 0 : i32
    %2 = arith.cmpi ne, %1, %c0_i32_0 : i32
    scf.if %2 {
      %cst_23 = arith.constant 0.000000e+00 : f32
      %31 = vector.broadcast %cst_23 : f32 to vector<2x16x128xf32>
      %c0_24 = arith.constant 0 : index
      %c0_25 = arith.constant 0 : index
      %c0_26 = arith.constant 0 : index
      %32 = vector.load %arg7[%c0_24, %c0_25, %c0_26] : memref<2x16x128xf32, #tpu.memory_space<vmem>>, vector<2x16x128xf32>
      tpu.vector_store %arg7[%c0_24, %c0_25, %c0_26], %31 {strides = array<i32>} : memref<2x16x128xf32, #tpu.memory_space<vmem>>, vector<2x16x128xf32>,
    } else {
    }
    %c0 = arith.constant 0 : index
    %c0_1 = arith.constant 0 : index
    %3 = vector.load %arg2[%c0, %c0_1] : memref<16x128xbf16, #tpu.memory_space<vmem>>, vector<16x128xbf16>
    %c0_2 = arith.constant 0 : index
    %c0_3 = arith.constant 0 : index
    %4 = vector.load %arg4[%c0_2, %c0_3] : memref<128x128xbf16, #tpu.memory_space<vmem>>, vector<128x128xbf16>
    %c0_4 = arith.constant 0 : index
    %c0_5 = arith.constant 0 : index
    %c0_6 = arith.constant 0 : index
    %5 = vector.load %arg3[%c0_4, %c0_5, %c0_6] : memref<2x128x128xbf16, #tpu.memory_space<vmem>>, vector<2x128x128xbf16>
    %6 = vector.extract_strided_slice %5 {offsets = [0, 0, 0], sizes = [1, 128, 128], strides = [1, 1, 1]} : vector<2x128x128xbf16> to vector<1x128x128xbf16>
    %7 = vector.shape_cast %6 : vector<1x128x128xbf16> to vector<128x128xbf16>
    %cst = arith.constant dense<0.000000e+00> : vector<128x128xf32>
    %8 = tpu.matmul %7, %4, %cst {dimension_numbers = #tpu.dot_dimension_numbers<[1], [0], [0], [1], [0, 0, 1, 1], [], []>} : vector<128x128xbf16>, vector<128x128xbf16>, vector<128x128xf32> -> vector<128x128xf32>
    %c0_7 = arith.constant 0 : index
    %c0_8 = arith.constant 0 : index
    %c0_9 = arith.constant 0 : index
    %9 = vector.load %arg7[%c0_7, %c0_8, %c0_9] : memref<2x16x128xf32, #tpu.memory_space<vmem>>, vector<1x16x128xf32>
    %10 = vector.shape_cast %9 : vector<1x16x128xf32> to vector<16x128xf32>
    %11 = arith.truncf %8 : vector<128x128xf32> to vector<128x128xbf16>
    %cst_10 = arith.constant dense<0.000000e+00> : vector<16x128xf32>
    %12 = tpu.matmul %3, %11, %cst_10 {dimension_numbers = #tpu.dot_dimension_numbers<[1], [0], [0], [1], [0, 0, 1, 1], [], []>} : vector<16x128xbf16>, vector<128x128xbf16>, vector<16x128xf32> -> vector<16x128xf32>
    %13 = arith.addf %10, %12 : vector<16x128xf32>
    %c0_11 = arith.constant 0 : index
    %c0_12 = arith.constant 0 : index
    %c0_13 = arith.constant 0 : index
    %14 = vector.load %arg7[%c0_11, %c0_12, %c0_13] : memref<2x16x128xf32, #tpu.memory_space<vmem>>, vector<1x16x128xf32>
    %15 = vector.shape_cast %14 : vector<1x16x128xf32> to vector<16x128xf32>
    %16 = vector.shape_cast %13 : vector<16x128xf32> to vector<1x16x128xf32>
    tpu.vector_store %arg7[%c0_11, %c0_12, %c0_13], %16 {strides = array<i32>} : memref<2x16x128xf32, #tpu.memory_space<vmem>>, vector<1x16x128xf32>,
    %17 = vector.extract_strided_slice %5 {offsets = [1, 0, 0], sizes = [1, 128, 128], strides = [1, 1, 1]} : vector<2x128x128xbf16> to vector<1x128x128xbf16>
    %18 = vector.shape_cast %17 : vector<1x128x128xbf16> to vector<128x128xbf16>
    %cst_14 = arith.constant dense<0.000000e+00> : vector<128x128xf32>
    %19 = tpu.matmul %18, %4, %cst_14 {dimension_numbers = #tpu.dot_dimension_numbers<[1], [0], [0], [1], [0, 0, 1, 1], [], []>} : vector<128x128xbf16>, vector<128x128xbf16>, vector<128x128xf32> -> vector<128x128xf32>
    %c1 = arith.constant 1 : index
    %c0_15 = arith.constant 0 : index
    %c0_16 = arith.constant 0 : index
    %20 = vector.load %arg7[%c1, %c0_15, %c0_16] : memref<2x16x128xf32, #tpu.memory_space<vmem>>, vector<1x16x128xf32>
    %21 = vector.shape_cast %20 : vector<1x16x128xf32> to vector<16x128xf32>
    %22 = arith.truncf %19 : vector<128x128xf32> to vector<128x128xbf16>
    %cst_17 = arith.constant dense<0.000000e+00> : vector<16x128xf32>
    %23 = tpu.matmul %3, %22, %cst_17 {dimension_numbers = #tpu.dot_dimension_numbers<[1], [0], [0], [1], [0, 0, 1, 1], [], []>} : vector<16x128xbf16>, vector<128x128xbf16>, vector<16x128xf32> -> vector<16x128xf32>
    %24 = arith.addf %21, %23 : vector<16x128xf32>
    %c1_18 = arith.constant 1 : index
    %c0_19 = arith.constant 0 : index
    %c0_20 = arith.constant 0 : index
    %25 = vector.load %arg7[%c1_18, %c0_19, %c0_20] : memref<2x16x128xf32, #tpu.memory_space<vmem>>, vector<1x16x128xf32>
    %26 = vector.shape_cast %25 : vector<1x16x128xf32> to vector<16x128xf32>
    %27 = vector.shape_cast %24 : vector<16x128xf32> to vector<1x16x128xf32>
    tpu.vector_store %arg7[%c1_18, %c0_19, %c0_20], %27 {strides = array<i32>} : memref<2x16x128xf32, #tpu.memory_space<vmem>>, vector<1x16x128xf32>,
    %c0_i32_21 = arith.constant 0 : i32
    %28 = arith.cmpi eq, %arg1, %c0_i32_21 : i32
    %29 = arith.extui %28 : i1 to i32
    %c0_i32_22 = arith.constant 0 : i32
    %30 = arith.cmpi ne, %29, %c0_i32_22 : i32
    scf.if %30 {
      %c0_23 = arith.constant 0 : index
      %c0_24 = arith.constant 0 : index
      %c0_25 = arith.constant 0 : index
      %31 = vector.load %arg7[%c0_23, %c0_24, %c0_25] : memref<2x16x128xf32, #tpu.memory_space<vmem>>, vector<2x16x128xf32>
      %c0_26 = arith.constant 0 : index
      %c0_27 = arith.constant 0 : index
      %32 = vector.load %arg5[%c0_26, %c0_27] : memref<1x128xf32, #tpu.memory_space<vmem>>, vector<1x128xf32>
      %33 = vector.shape_cast %32 : vector<1x128xf32> to vector<1x1x128xf32>
      %34 = vector.broadcast %33 : vector<1x1x128xf32> to vector<2x16x128xf32>
      %35 = arith.addf %31, %34 : vector<2x16x128xf32>
      %cst_28 = arith.constant 0.000000e+00 : f32
      %36 = vector.broadcast %cst_28 : f32 to vector<2x16x128xf32>
      %37 = arith.maximumf %35, %36 : vector<2x16x128xf32>
      %c0_29 = arith.constant 0 : index
      %c0_30 = arith.constant 0 : index
      %c0_31 = arith.constant 0 : index
      %38 = vector.load %arg6[%c0_29, %c0_30, %c0_31] : memref<2x16x128xf32, #tpu.memory_space<vmem>>, vector<2x16x128xf32>
      tpu.vector_store %arg6[%c0_29, %c0_30, %c0_31], %37 {strides = array<i32>} : memref<2x16x128xf32, #tpu.memory_space<vmem>>, vector<2x16x128xf32>,
    } else {
    }
    return
  }
  func.func @transform_0(%arg0: i32, %arg1: i32) -> (i32, i32) {
    %c0_i32 = arith.constant 0 : i32
    return %arg0, %arg1 : i32, i32
  }
  func.func @transform_1(%arg0: i32, %arg1: i32) -> (i32, i32, i32) {
    %c0_i32 = arith.constant 0 : i32
    %c0_i32_0 = arith.constant 0 : i32
    %c0_i32_1 = arith.constant 0 : i32
    return %c0_i32, %arg1, %c0_i32_0 : i32, i32, i32
  }
  func.func @transform_2(%arg0: i32, %arg1: i32) -> (i32, i32) {
    %c0_i32 = arith.constant 0 : i32
    %c0_i32_0 = arith.constant 0 : i32
    %c0_i32_1 = arith.constant 0 : i32
    return %c0_i32, %c0_i32_0 : i32, i32
  }
  func.func @transform_3(%arg0: i32, %arg1: i32) -> (i32, i32) {
    %c0_i32 = arith.constant 0 : i32
    %c0_i32_0 = arith.constant 0 : i32
    %c0_i32_1 = arith.constant 0 : i32
    return %c0_i32, %c0_i32_0 : i32, i32
  }
  func.func @transform_4(%arg0: i32, %arg1: i32) -> (i32, i32, i32) {
    %c0_i32 = arith.constant 0 : i32
    %c0_i32_0 = arith.constant 0 : i32
    %c0_i32_1 = arith.constant 0 : i32
    return %c0_i32, %arg0, %c0_i32_0 : i32, i32, i32
  }
}

module attributes {stable_mosaic.version = 11 : i64} {
  func.func @_gcn_layer_kernel(%arg0: i32, %arg1: i32, %arg2: memref<16x128xbf16, #tpu.memory_space<vmem>>, %arg3: memref<2x128x128xbf16, #tpu.memory_space<vmem>>, %arg4: memref<128x128xbf16, #tpu.memory_space<vmem>>, %arg5: memref<1x128xf32, #tpu.memory_space<vmem>>, %arg6: memref<2x16x128xf32, #tpu.memory_space<vmem>>, %arg7: memref<2x16x128xf32, #tpu.memory_space<vmem>>) attributes {dimension_semantics = [#tpu.dimension_semantics<parallel>, #tpu.dimension_semantics<arbitrary>], iteration_bounds = array<i64: 1, 1>, scalar_prefetch = 0 : i64, scratch_operands = 1 : i64, tpu.core_type = #tpu.core_type<tc>, window_params = [{transform_indices = @transform_0, window_bounds = array<i64: 16, 128>}, {transform_indices = @transform_1, window_bounds = array<i64: 2, 128, 128>}, {pipeline_mode = #tpu.pipeline_mode<synchronous>, transform_indices = @transform_2, window_bounds = array<i64: 128, 128>}, {pipeline_mode = #tpu.pipeline_mode<synchronous>, transform_indices = @transform_3, window_bounds = array<i64: 1, 128>}, {transform_indices = @transform_4, window_bounds = array<i64: 2, 16, 128>}]} {
    %c0_i32 = arith.constant 0 : i32
    %0 = arith.cmpi eq, %arg1, %c0_i32 : i32
    %1 = arith.extui %0 : i1 to i32
    %c0_i32_0 = arith.constant 0 : i32
    %2 = arith.cmpi ne, %1, %c0_i32_0 : i32
    scf.if %2 {
      %cst_23 = arith.constant 0.000000e+00 : f32
      %31 = vector.broadcast %cst_23 : f32 to vector<2x16x128xf32>
      %c0_24 = arith.constant 0 : index
      %c0_25 = arith.constant 0 : index
      %c0_26 = arith.constant 0 : index
      %32 = vector.load %arg7[%c0_24, %c0_25, %c0_26] : memref<2x16x128xf32, #tpu.memory_space<vmem>>, vector<2x16x128xf32>
      tpu.vector_store %arg7[%c0_24, %c0_25, %c0_26], %31 {strides = array<i32>} : memref<2x16x128xf32, #tpu.memory_space<vmem>>, vector<2x16x128xf32>,
    } else {
    }
    %c0 = arith.constant 0 : index
    %c0_1 = arith.constant 0 : index
    %3 = vector.load %arg2[%c0, %c0_1] : memref<16x128xbf16, #tpu.memory_space<vmem>>, vector<16x128xbf16>
    %c0_2 = arith.constant 0 : index
    %c0_3 = arith.constant 0 : index
    %4 = vector.load %arg4[%c0_2, %c0_3] : memref<128x128xbf16, #tpu.memory_space<vmem>>, vector<128x128xbf16>
    %c0_4 = arith.constant 0 : index
    %c0_5 = arith.constant 0 : index
    %c0_6 = arith.constant 0 : index
    %5 = vector.load %arg3[%c0_4, %c0_5, %c0_6] : memref<2x128x128xbf16, #tpu.memory_space<vmem>>, vector<2x128x128xbf16>
    %6 = vector.extract_strided_slice %5 {offsets = [0, 0, 0], sizes = [1, 128, 128], strides = [1, 1, 1]} : vector<2x128x128xbf16> to vector<1x128x128xbf16>
    %7 = vector.shape_cast %6 : vector<1x128x128xbf16> to vector<128x128xbf16>
    %cst = arith.constant dense<0.000000e+00> : vector<128x128xf32>
    %8 = tpu.matmul %7, %4, %cst {dimension_numbers = #tpu.dot_dimension_numbers<[1], [0], [0], [1], [0, 0, 1, 1], [], []>} : vector<128x128xbf16>, vector<128x128xbf16>, vector<128x128xf32> -> vector<128x128xf32>
    %c0_7 = arith.constant 0 : index
    %c0_8 = arith.constant 0 : index
    %c0_9 = arith.constant 0 : index
    %9 = vector.load %arg7[%c0_7, %c0_8, %c0_9] : memref<2x16x128xf32, #tpu.memory_space<vmem>>, vector<1x16x128xf32>
    %10 = vector.shape_cast %9 : vector<1x16x128xf32> to vector<16x128xf32>
    %11 = arith.truncf %8 : vector<128x128xf32> to vector<128x128xbf16>
    %cst_10 = arith.constant dense<0.000000e+00> : vector<16x128xf32>
    %12 = tpu.matmul %3, %11, %cst_10 {dimension_numbers = #tpu.dot_dimension_numbers<[1], [0], [0], [1], [0, 0, 1, 1], [], []>} : vector<16x128xbf16>, vector<128x128xbf16>, vector<16x128xf32> -> vector<16x128xf32>
    %13 = arith.addf %10, %12 : vector<16x128xf32>
    %c0_11 = arith.constant 0 : index
    %c0_12 = arith.constant 0 : index
    %c0_13 = arith.constant 0 : index
    %14 = vector.load %arg7[%c0_11, %c0_12, %c0_13] : memref<2x16x128xf32, #tpu.memory_space<vmem>>, vector<1x16x128xf32>
    %15 = vector.shape_cast %14 : vector<1x16x128xf32> to vector<16x128xf32>
    %16 = vector.shape_cast %13 : vector<16x128xf32> to vector<1x16x128xf32>
    tpu.vector_store %arg7[%c0_11, %c0_12, %c0_13], %16 {strides = array<i32>} : memref<2x16x128xf32, #tpu.memory_space<vmem>>, vector<1x16x128xf32>,
    %17 = vector.extract_strided_slice %5 {offsets = [1, 0, 0], sizes = [1, 128, 128], strides = [1, 1, 1]} : vector<2x128x128xbf16> to vector<1x128x128xbf16>
    %18 = vector.shape_cast %17 : vector<1x128x128xbf16> to vector<128x128xbf16>
    %cst_14 = arith.constant dense<0.000000e+00> : vector<128x128xf32>
    %19 = tpu.matmul %18, %4, %cst_14 {dimension_numbers = #tpu.dot_dimension_numbers<[1], [0], [0], [1], [0, 0, 1, 1], [], []>} : vector<128x128xbf16>, vector<128x128xbf16>, vector<128x128xf32> -> vector<128x128xf32>
    %c1 = arith.constant 1 : index
    %c0_15 = arith.constant 0 : index
    %c0_16 = arith.constant 0 : index
    %20 = vector.load %arg7[%c1, %c0_15, %c0_16] : memref<2x16x128xf32, #tpu.memory_space<vmem>>, vector<1x16x128xf32>
    %21 = vector.shape_cast %20 : vector<1x16x128xf32> to vector<16x128xf32>
    %22 = arith.truncf %19 : vector<128x128xf32> to vector<128x128xbf16>
    %cst_17 = arith.constant dense<0.000000e+00> : vector<16x128xf32>
    %23 = tpu.matmul %3, %22, %cst_17 {dimension_numbers = #tpu.dot_dimension_numbers<[1], [0], [0], [1], [0, 0, 1, 1], [], []>} : vector<16x128xbf16>, vector<128x128xbf16>, vector<16x128xf32> -> vector<16x128xf32>
    %24 = arith.addf %21, %23 : vector<16x128xf32>
    %c1_18 = arith.constant 1 : index
    %c0_19 = arith.constant 0 : index
    %c0_20 = arith.constant 0 : index
    %25 = vector.load %arg7[%c1_18, %c0_19, %c0_20] : memref<2x16x128xf32, #tpu.memory_space<vmem>>, vector<1x16x128xf32>
    %26 = vector.shape_cast %25 : vector<1x16x128xf32> to vector<16x128xf32>
    %27 = vector.shape_cast %24 : vector<16x128xf32> to vector<1x16x128xf32>
    tpu.vector_store %arg7[%c1_18, %c0_19, %c0_20], %27 {strides = array<i32>} : memref<2x16x128xf32, #tpu.memory_space<vmem>>, vector<1x16x128xf32>,
    %c0_i32_21 = arith.constant 0 : i32
    %28 = arith.cmpi eq, %arg1, %c0_i32_21 : i32
    %29 = arith.extui %28 : i1 to i32
    %c0_i32_22 = arith.constant 0 : i32
    %30 = arith.cmpi ne, %29, %c0_i32_22 : i32
    scf.if %30 {
      %c0_23 = arith.constant 0 : index
      %c0_24 = arith.constant 0 : index
      %c0_25 = arith.constant 0 : index
      %31 = vector.load %arg7[%c0_23, %c0_24, %c0_25] : memref<2x16x128xf32, #tpu.memory_space<vmem>>, vector<2x16x128xf32>
      %c0_26 = arith.constant 0 : index
      %c0_27 = arith.constant 0 : index
      %32 = vector.load %arg5[%c0_26, %c0_27] : memref<1x128xf32, #tpu.memory_space<vmem>>, vector<1x128xf32>
      %33 = vector.shape_cast %32 : vector<1x128xf32> to vector<1x1x128xf32>
      %34 = vector.broadcast %33 : vector<1x1x128xf32> to vector<2x16x128xf32>
      %35 = arith.addf %31, %34 : vector<2x16x128xf32>
      %c0_28 = arith.constant 0 : index
      %c0_29 = arith.constant 0 : index
      %c0_30 = arith.constant 0 : index
      %36 = vector.load %arg6[%c0_28, %c0_29, %c0_30] : memref<2x16x128xf32, #tpu.memory_space<vmem>>, vector<2x16x128xf32>
      tpu.vector_store %arg6[%c0_28, %c0_29, %c0_30], %35 {strides = array<i32>} : memref<2x16x128xf32, #tpu.memory_space<vmem>>, vector<2x16x128xf32>,
    } else {
    }
    return
  }
  func.func @transform_0(%arg0: i32, %arg1: i32) -> (i32, i32) {
    %c0_i32 = arith.constant 0 : i32
    return %arg0, %arg1 : i32, i32
  }
  func.func @transform_1(%arg0: i32, %arg1: i32) -> (i32, i32, i32) {
    %c0_i32 = arith.constant 0 : i32
    %c0_i32_0 = arith.constant 0 : i32
    %c0_i32_1 = arith.constant 0 : i32
    return %c0_i32, %arg1, %c0_i32_0 : i32, i32, i32
  }
  func.func @transform_2(%arg0: i32, %arg1: i32) -> (i32, i32) {
    %c0_i32 = arith.constant 0 : i32
    %c0_i32_0 = arith.constant 0 : i32
    %c0_i32_1 = arith.constant 0 : i32
    return %c0_i32, %c0_i32_0 : i32, i32
  }
  func.func @transform_3(%arg0: i32, %arg1: i32) -> (i32, i32) {
    %c0_i32 = arith.constant 0 : i32
    %c0_i32_0 = arith.constant 0 : i32
    %c0_i32_1 = arith.constant 0 : i32
    return %c0_i32, %c0_i32_0 : i32, i32
  }
  func.func @transform_4(%arg0: i32, %arg1: i32) -> (i32, i32, i32) {
    %c0_i32 = arith.constant 0 : i32
    %c0_i32_0 = arith.constant 0 : i32
    %c0_i32_1 = arith.constant 0 : i32
    return %c0_i32, %arg0, %c0_i32_0 : i32, i32, i32
  }
}

module attributes {stable_mosaic.version = 11 : i64} {
  func.func @_gcn_layer_kernel(%arg0: i32, %arg1: i32, %arg2: memref<16x128xbf16, #tpu.memory_space<vmem>>, %arg3: memref<1x128x128xbf16, #tpu.memory_space<vmem>>, %arg4: memref<128x128xbf16, #tpu.memory_space<vmem>>, %arg5: memref<1x128xf32, #tpu.memory_space<vmem>>, %arg6: memref<1x16x128xf32, #tpu.memory_space<vmem>>, %arg7: memref<1x16x128xf32, #tpu.memory_space<vmem>>) attributes {dimension_semantics = [#tpu.dimension_semantics<parallel>, #tpu.dimension_semantics<arbitrary>], iteration_bounds = array<i64: 1, 1>, scalar_prefetch = 0 : i64, scratch_operands = 1 : i64, tpu.core_type = #tpu.core_type<tc>, window_params = [{transform_indices = @transform_0, window_bounds = array<i64: 16, 128>}, {transform_indices = @transform_1, window_bounds = array<i64: 1, 128, 128>}, {pipeline_mode = #tpu.pipeline_mode<synchronous>, transform_indices = @transform_2, window_bounds = array<i64: 128, 128>}, {pipeline_mode = #tpu.pipeline_mode<synchronous>, transform_indices = @transform_3, window_bounds = array<i64: 1, 128>}, {transform_indices = @transform_4, window_bounds = array<i64: 1, 16, 128>}]} {
    %c0_i32 = arith.constant 0 : i32
    %0 = arith.cmpi eq, %arg1, %c0_i32 : i32
    %1 = arith.extui %0 : i1 to i32
    %c0_i32_0 = arith.constant 0 : i32
    %2 = arith.cmpi ne, %1, %c0_i32_0 : i32
    scf.if %2 {
      %cst_16 = arith.constant 0.000000e+00 : f32
      %19 = vector.broadcast %cst_16 : f32 to vector<1x16x128xf32>
      %c0_17 = arith.constant 0 : index
      %c0_18 = arith.constant 0 : index
      %c0_19 = arith.constant 0 : index
      %20 = vector.load %arg7[%c0_17, %c0_18, %c0_19] : memref<1x16x128xf32, #tpu.memory_space<vmem>>, vector<1x16x128xf32>
      tpu.vector_store %arg7[%c0_17, %c0_18, %c0_19], %19 {strides = array<i32>} : memref<1x16x128xf32, #tpu.memory_space<vmem>>, vector<1x16x128xf32>,
    } else {
    }
    %c0 = arith.constant 0 : index
    %c0_1 = arith.constant 0 : index
    %3 = vector.load %arg2[%c0, %c0_1] : memref<16x128xbf16, #tpu.memory_space<vmem>>, vector<16x128xbf16>
    %c0_2 = arith.constant 0 : index
    %c0_3 = arith.constant 0 : index
    %4 = vector.load %arg4[%c0_2, %c0_3] : memref<128x128xbf16, #tpu.memory_space<vmem>>, vector<128x128xbf16>
    %c0_4 = arith.constant 0 : index
    %c0_5 = arith.constant 0 : index
    %c0_6 = arith.constant 0 : index
    %5 = vector.load %arg3[%c0_4, %c0_5, %c0_6] : memref<1x128x128xbf16, #tpu.memory_space<vmem>>, vector<1x128x128xbf16>
    %6 = vector.shape_cast %5 : vector<1x128x128xbf16> to vector<128x128xbf16>
    %cst = arith.constant dense<0.000000e+00> : vector<128x128xf32>
    %7 = tpu.matmul %6, %4, %cst {dimension_numbers = #tpu.dot_dimension_numbers<[1], [0], [0], [1], [0, 0, 1, 1], [], []>} : vector<128x128xbf16>, vector<128x128xbf16>, vector<128x128xf32> -> vector<128x128xf32>
    %c0_7 = arith.constant 0 : index
    %c0_8 = arith.constant 0 : index
    %c0_9 = arith.constant 0 : index
    %8 = vector.load %arg7[%c0_7, %c0_8, %c0_9] : memref<1x16x128xf32, #tpu.memory_space<vmem>>, vector<1x16x128xf32>
    %9 = vector.shape_cast %8 : vector<1x16x128xf32> to vector<16x128xf32>
    %10 = arith.truncf %7 : vector<128x128xf32> to vector<128x128xbf16>
    %cst_10 = arith.constant dense<0.000000e+00> : vector<16x128xf32>
    %11 = tpu.matmul %3, %10, %cst_10 {dimension_numbers = #tpu.dot_dimension_numbers<[1], [0], [0], [1], [0, 0, 1, 1], [], []>} : vector<16x128xbf16>, vector<128x128xbf16>, vector<16x128xf32> -> vector<16x128xf32>
    %12 = arith.addf %9, %11 : vector<16x128xf32>
    %c0_11 = arith.constant 0 : index
    %c0_12 = arith.constant 0 : index
    %c0_13 = arith.constant 0 : index
    %13 = vector.load %arg7[%c0_11, %c0_12, %c0_13] : memref<1x16x128xf32, #tpu.memory_space<vmem>>, vector<1x16x128xf32>
    %14 = vector.shape_cast %13 : vector<1x16x128xf32> to vector<16x128xf32>
    %15 = vector.shape_cast %12 : vector<16x128xf32> to vector<1x16x128xf32>
    tpu.vector_store %arg7[%c0_11, %c0_12, %c0_13], %15 {strides = array<i32>} : memref<1x16x128xf32, #tpu.memory_space<vmem>>, vector<1x16x128xf32>,
    %c0_i32_14 = arith.constant 0 : i32
    %16 = arith.cmpi eq, %arg1, %c0_i32_14 : i32
    %17 = arith.extui %16 : i1 to i32
    %c0_i32_15 = arith.constant 0 : i32
    %18 = arith.cmpi ne, %17, %c0_i32_15 : i32
    scf.if %18 {
      %c0_16 = arith.constant 0 : index
      %c0_17 = arith.constant 0 : index
      %c0_18 = arith.constant 0 : index
      %19 = vector.load %arg7[%c0_16, %c0_17, %c0_18] : memref<1x16x128xf32, #tpu.memory_space<vmem>>, vector<1x16x128xf32>
      %c0_19 = arith.constant 0 : index
      %c0_20 = arith.constant 0 : index
      %20 = vector.load %arg5[%c0_19, %c0_20] : memref<1x128xf32, #tpu.memory_space<vmem>>, vector<1x128xf32>
      %21 = vector.shape_cast %20 : vector<1x128xf32> to vector<1x1x128xf32>
      %22 = vector.broadcast %21 : vector<1x1x128xf32> to vector<1x16x128xf32>
      %23 = arith.addf %19, %22 : vector<1x16x128xf32>
      %cst_21 = arith.constant 0.000000e+00 : f32
      %24 = vector.broadcast %cst_21 : f32 to vector<1x16x128xf32>
      %25 = arith.maximumf %23, %24 : vector<1x16x128xf32>
      %c0_22 = arith.constant 0 : index
      %c0_23 = arith.constant 0 : index
      %c0_24 = arith.constant 0 : index
      %26 = vector.load %arg6[%c0_22, %c0_23, %c0_24] : memref<1x16x128xf32, #tpu.memory_space<vmem>>, vector<1x16x128xf32>
      tpu.vector_store %arg6[%c0_22, %c0_23, %c0_24], %25 {strides = array<i32>} : memref<1x16x128xf32, #tpu.memory_space<vmem>>, vector<1x16x128xf32>,
    } else {
    }
    return
  }
  func.func @transform_0(%arg0: i32, %arg1: i32) -> (i32, i32) {
    %c0_i32 = arith.constant 0 : i32
    return %arg0, %arg1 : i32, i32
  }
  func.func @transform_1(%arg0: i32, %arg1: i32) -> (i32, i32, i32) {
    %c0_i32 = arith.constant 0 : i32
    %c0_i32_0 = arith.constant 0 : i32
    %c0_i32_1 = arith.constant 0 : i32
    return %c0_i32, %arg1, %c0_i32_0 : i32, i32, i32
  }
  func.func @transform_2(%arg0: i32, %arg1: i32) -> (i32, i32) {
    %c0_i32 = arith.constant 0 : i32
    %c0_i32_0 = arith.constant 0 : i32
    %c0_i32_1 = arith.constant 0 : i32
    return %c0_i32, %c0_i32_0 : i32, i32
  }
  func.func @transform_3(%arg0: i32, %arg1: i32) -> (i32, i32) {
    %c0_i32 = arith.constant 0 : i32
    %c0_i32_0 = arith.constant 0 : i32
    %c0_i32_1 = arith.constant 0 : i32
    return %c0_i32, %c0_i32_0 : i32, i32
  }
  func.func @transform_4(%arg0: i32, %arg1: i32) -> (i32, i32, i32) {
    %c0_i32 = arith.constant 0 : i32
    %c0_i32_0 = arith.constant 0 : i32
    %c0_i32_1 = arith.constant 0 : i32
    return %c0_i32, %arg0, %c0_i32_0 : i32, i32, i32
  }
}

module attributes {stable_mosaic.version = 11 : i64} {
  func.func @_gcn_layer_kernel(%arg0: i32, %arg1: i32, %arg2: memref<16x128xbf16, #tpu.memory_space<vmem>>, %arg3: memref<1x128x128xbf16, #tpu.memory_space<vmem>>, %arg4: memref<128x128xbf16, #tpu.memory_space<vmem>>, %arg5: memref<1x128xf32, #tpu.memory_space<vmem>>, %arg6: memref<1x16x128xf32, #tpu.memory_space<vmem>>, %arg7: memref<1x16x128xf32, #tpu.memory_space<vmem>>) attributes {dimension_semantics = [#tpu.dimension_semantics<parallel>, #tpu.dimension_semantics<arbitrary>], iteration_bounds = array<i64: 1, 1>, scalar_prefetch = 0 : i64, scratch_operands = 1 : i64, tpu.core_type = #tpu.core_type<tc>, window_params = [{transform_indices = @transform_0, window_bounds = array<i64: 16, 128>}, {transform_indices = @transform_1, window_bounds = array<i64: 1, 128, 128>}, {pipeline_mode = #tpu.pipeline_mode<synchronous>, transform_indices = @transform_2, window_bounds = array<i64: 128, 128>}, {pipeline_mode = #tpu.pipeline_mode<synchronous>, transform_indices = @transform_3, window_bounds = array<i64: 1, 128>}, {transform_indices = @transform_4, window_bounds = array<i64: 1, 16, 128>}]} {
    %c0_i32 = arith.constant 0 : i32
    %0 = arith.cmpi eq, %arg1, %c0_i32 : i32
    %1 = arith.extui %0 : i1 to i32
    %c0_i32_0 = arith.constant 0 : i32
    %2 = arith.cmpi ne, %1, %c0_i32_0 : i32
    scf.if %2 {
      %cst_16 = arith.constant 0.000000e+00 : f32
      %19 = vector.broadcast %cst_16 : f32 to vector<1x16x128xf32>
      %c0_17 = arith.constant 0 : index
      %c0_18 = arith.constant 0 : index
      %c0_19 = arith.constant 0 : index
      %20 = vector.load %arg7[%c0_17, %c0_18, %c0_19] : memref<1x16x128xf32, #tpu.memory_space<vmem>>, vector<1x16x128xf32>
      tpu.vector_store %arg7[%c0_17, %c0_18, %c0_19], %19 {strides = array<i32>} : memref<1x16x128xf32, #tpu.memory_space<vmem>>, vector<1x16x128xf32>,
    } else {
    }
    %c0 = arith.constant 0 : index
    %c0_1 = arith.constant 0 : index
    %3 = vector.load %arg2[%c0, %c0_1] : memref<16x128xbf16, #tpu.memory_space<vmem>>, vector<16x128xbf16>
    %c0_2 = arith.constant 0 : index
    %c0_3 = arith.constant 0 : index
    %4 = vector.load %arg4[%c0_2, %c0_3] : memref<128x128xbf16, #tpu.memory_space<vmem>>, vector<128x128xbf16>
    %c0_4 = arith.constant 0 : index
    %c0_5 = arith.constant 0 : index
    %c0_6 = arith.constant 0 : index
    %5 = vector.load %arg3[%c0_4, %c0_5, %c0_6] : memref<1x128x128xbf16, #tpu.memory_space<vmem>>, vector<1x128x128xbf16>
    %6 = vector.shape_cast %5 : vector<1x128x128xbf16> to vector<128x128xbf16>
    %cst = arith.constant dense<0.000000e+00> : vector<128x128xf32>
    %7 = tpu.matmul %6, %4, %cst {dimension_numbers = #tpu.dot_dimension_numbers<[1], [0], [0], [1], [0, 0, 1, 1], [], []>} : vector<128x128xbf16>, vector<128x128xbf16>, vector<128x128xf32> -> vector<128x128xf32>
    %c0_7 = arith.constant 0 : index
    %c0_8 = arith.constant 0 : index
    %c0_9 = arith.constant 0 : index
    %8 = vector.load %arg7[%c0_7, %c0_8, %c0_9] : memref<1x16x128xf32, #tpu.memory_space<vmem>>, vector<1x16x128xf32>
    %9 = vector.shape_cast %8 : vector<1x16x128xf32> to vector<16x128xf32>
    %10 = arith.truncf %7 : vector<128x128xf32> to vector<128x128xbf16>
    %cst_10 = arith.constant dense<0.000000e+00> : vector<16x128xf32>
    %11 = tpu.matmul %3, %10, %cst_10 {dimension_numbers = #tpu.dot_dimension_numbers<[1], [0], [0], [1], [0, 0, 1, 1], [], []>} : vector<16x128xbf16>, vector<128x128xbf16>, vector<16x128xf32> -> vector<16x128xf32>
    %12 = arith.addf %9, %11 : vector<16x128xf32>
    %c0_11 = arith.constant 0 : index
    %c0_12 = arith.constant 0 : index
    %c0_13 = arith.constant 0 : index
    %13 = vector.load %arg7[%c0_11, %c0_12, %c0_13] : memref<1x16x128xf32, #tpu.memory_space<vmem>>, vector<1x16x128xf32>
    %14 = vector.shape_cast %13 : vector<1x16x128xf32> to vector<16x128xf32>
    %15 = vector.shape_cast %12 : vector<16x128xf32> to vector<1x16x128xf32>
    tpu.vector_store %arg7[%c0_11, %c0_12, %c0_13], %15 {strides = array<i32>} : memref<1x16x128xf32, #tpu.memory_space<vmem>>, vector<1x16x128xf32>,
    %c0_i32_14 = arith.constant 0 : i32
    %16 = arith.cmpi eq, %arg1, %c0_i32_14 : i32
    %17 = arith.extui %16 : i1 to i32
    %c0_i32_15 = arith.constant 0 : i32
    %18 = arith.cmpi ne, %17, %c0_i32_15 : i32
    scf.if %18 {
      %c0_16 = arith.constant 0 : index
      %c0_17 = arith.constant 0 : index
      %c0_18 = arith.constant 0 : index
      %19 = vector.load %arg7[%c0_16, %c0_17, %c0_18] : memref<1x16x128xf32, #tpu.memory_space<vmem>>, vector<1x16x128xf32>
      %c0_19 = arith.constant 0 : index
      %c0_20 = arith.constant 0 : index
      %20 = vector.load %arg5[%c0_19, %c0_20] : memref<1x128xf32, #tpu.memory_space<vmem>>, vector<1x128xf32>
      %21 = vector.shape_cast %20 : vector<1x128xf32> to vector<1x1x128xf32>
      %22 = vector.broadcast %21 : vector<1x1x128xf32> to vector<1x16x128xf32>
      %23 = arith.addf %19, %22 : vector<1x16x128xf32>
      %c0_21 = arith.constant 0 : index
      %c0_22 = arith.constant 0 : index
      %c0_23 = arith.constant 0 : index
      %24 = vector.load %arg6[%c0_21, %c0_22, %c0_23] : memref<1x16x128xf32, #tpu.memory_space<vmem>>, vector<1x16x128xf32>
      tpu.vector_store %arg6[%c0_21, %c0_22, %c0_23], %23 {strides = array<i32>} : memref<1x16x128xf32, #tpu.memory_space<vmem>>, vector<1x16x128xf32>,
    } else {
    }
    return
  }
  func.func @transform_0(%arg0: i32, %arg1: i32) -> (i32, i32) {
    %c0_i32 = arith.constant 0 : i32
    return %arg0, %arg1 : i32, i32
  }
  func.func @transform_1(%arg0: i32, %arg1: i32) -> (i32, i32, i32) {
    %c0_i32 = arith.constant 0 : i32
    %c0_i32_0 = arith.constant 0 : i32
    %c0_i32_1 = arith.constant 0 : i32
    return %c0_i32, %arg1, %c0_i32_0 : i32, i32, i32
  }
  func.func @transform_2(%arg0: i32, %arg1: i32) -> (i32, i32) {
    %c0_i32 = arith.constant 0 : i32
    %c0_i32_0 = arith.constant 0 : i32
    %c0_i32_1 = arith.constant 0 : i32
    return %c0_i32, %c0_i32_0 : i32, i32
  }
  func.func @transform_3(%arg0: i32, %arg1: i32) -> (i32, i32) {
    %c0_i32 = arith.constant 0 : i32
    %c0_i32_0 = arith.constant 0 : i32
    %c0_i32_1 = arith.constant 0 : i32
    return %c0_i32, %c0_i32_0 : i32, i32
  }
  func.func @transform_4(%arg0: i32, %arg1: i32) -> (i32, i32, i32) {
    %c0_i32 = arith.constant 0 : i32
    %c0_i32_0 = arith.constant 0 : i32
    %c0_i32_1 = arith.constant 0 : i32
    return %c0_i32, %arg0, %c0_i32_0 : i32, i32, i32
  }
}

module attributes {stable_mosaic.version = 11 : i64} {
  func.func @_sigma_z_kernel(%arg0: i32, %arg1: memref<16x16xf32, #tpu.memory_space<vmem>>, %arg2: memref<16x16xf32, #tpu.memory_space<vmem>>, %arg3: memref<16x16xf32, #tpu.memory_space<vmem>>, %arg4: memref<16x16xf32, #tpu.memory_space<vmem>>, %arg5: memref<16x16xf32, #tpu.memory_space<vmem>>) attributes {dimension_semantics = [#tpu.dimension_semantics<parallel>], iteration_bounds = array<i64: 1>, scalar_prefetch = 0 : i64, scratch_operands = 0 : i64, tpu.core_type = #tpu.core_type<tc>, window_params = [{transform_indices = @transform_0, window_bounds = array<i64: 16, 16>}, {transform_indices = @transform_1, window_bounds = array<i64: 16, 16>}, {transform_indices = @transform_2, window_bounds = array<i64: 16, 16>}, {transform_indices = @transform_3, window_bounds = array<i64: 16, 16>}, {transform_indices = @transform_4, window_bounds = array<i64: 16, 16>}]} {
    %c0 = arith.constant 0 : index
    %c0_0 = arith.constant 0 : index
    %0 = vector.load %arg1[%c0, %c0_0] : memref<16x16xf32, #tpu.memory_space<vmem>>, vector<16x16xf32>
    %cst = arith.constant 5.000000e-01 : f32
    %1 = vector.broadcast %cst : f32 to vector<16x16xf32>
    %2 = arith.mulf %1, %0 : vector<16x16xf32>
    %3 = math.exp %2 : vector<16x16xf32>
    %c0_1 = arith.constant 0 : index
    %c0_2 = arith.constant 0 : index
    %4 = vector.load %arg4[%c0_1, %c0_2] : memref<16x16xf32, #tpu.memory_space<vmem>>, vector<16x16xf32>
    tpu.vector_store %arg4[%c0_1, %c0_2], %3 {strides = array<i32>} : memref<16x16xf32, #tpu.memory_space<vmem>>, vector<16x16xf32>,
    %c0_3 = arith.constant 0 : index
    %c0_4 = arith.constant 0 : index
    %5 = vector.load %arg2[%c0_3, %c0_4] : memref<16x16xf32, #tpu.memory_space<vmem>>, vector<16x16xf32>
    %c0_5 = arith.constant 0 : index
    %c0_6 = arith.constant 0 : index
    %6 = vector.load %arg3[%c0_5, %c0_6] : memref<16x16xf32, #tpu.memory_space<vmem>>, vector<16x16xf32>
    %7 = arith.mulf %3, %6 : vector<16x16xf32>
    %8 = arith.addf %5, %7 : vector<16x16xf32>
    %c0_7 = arith.constant 0 : index
    %c0_8 = arith.constant 0 : index
    %9 = vector.load %arg5[%c0_7, %c0_8] : memref<16x16xf32, #tpu.memory_space<vmem>>, vector<16x16xf32>
    tpu.vector_store %arg5[%c0_7, %c0_8], %8 {strides = array<i32>} : memref<16x16xf32, #tpu.memory_space<vmem>>, vector<16x16xf32>,
    return
  }
  func.func @transform_0(%arg0: i32) -> (i32, i32) {
    %c0_i32 = arith.constant 0 : i32
    %c0_i32_0 = arith.constant 0 : i32
    return %arg0, %c0_i32 : i32, i32
  }
  func.func @transform_1(%arg0: i32) -> (i32, i32) {
    %c0_i32 = arith.constant 0 : i32
    %c0_i32_0 = arith.constant 0 : i32
    return %arg0, %c0_i32 : i32, i32
  }
  func.func @transform_2(%arg0: i32) -> (i32, i32) {
    %c0_i32 = arith.constant 0 : i32
    %c0_i32_0 = arith.constant 0 : i32
    return %arg0, %c0_i32 : i32, i32
  }
  func.func @transform_3(%arg0: i32) -> (i32, i32) {
    %c0_i32 = arith.constant 0 : i32
    %c0_i32_0 = arith.constant 0 : i32
    return %arg0, %c0_i32 : i32, i32
  }
  func.func @transform_4(%arg0: i32) -> (i32, i32) {
    %c0_i32 = arith.constant 0 : i32
    %c0_i32_0 = arith.constant 0 : i32
    return %arg0, %c0_i32 : i32, i32
  }
}

module attributes {stable_mosaic.version = 11 : i64} {
  func.func @_matmul_kernel(%arg0: i32, %arg1: i32, %arg2: i32, %arg3: memref<24x128xbf16, #tpu.memory_space<vmem>>, %arg4: memref<128x128xbf16, #tpu.memory_space<vmem>>, %arg5: memref<1x128xf32, #tpu.memory_space<vmem>>, %arg6: memref<24x128xf32, #tpu.memory_space<vmem>>, %arg7: memref<24x128xf32, #tpu.memory_space<vmem>>) attributes {dimension_semantics = [#tpu.dimension_semantics<parallel>, #tpu.dimension_semantics<parallel>, #tpu.dimension_semantics<arbitrary>], iteration_bounds = array<i64: 1, 1, 1>, scalar_prefetch = 0 : i64, scratch_operands = 1 : i64, tpu.core_type = #tpu.core_type<tc>, window_params = [{transform_indices = @transform_0, window_bounds = array<i64: 24, 128>}, {transform_indices = @transform_1, window_bounds = array<i64: 128, 128>}, {transform_indices = @transform_2, window_bounds = array<i64: 1, 128>}, {transform_indices = @transform_3, window_bounds = array<i64: 24, 128>}]} {
    %c0_i32 = arith.constant 0 : i32
    %0 = arith.cmpi eq, %arg2, %c0_i32 : i32
    %1 = arith.extui %0 : i1 to i32
    %c0_i32_0 = arith.constant 0 : i32
    %2 = arith.cmpi ne, %1, %c0_i32_0 : i32
    scf.if %2 {
      %cst_10 = arith.constant 0.000000e+00 : f32
      %12 = vector.broadcast %cst_10 : f32 to vector<24x128xf32>
      %c0_11 = arith.constant 0 : index
      %c0_12 = arith.constant 0 : index
      %13 = vector.load %arg7[%c0_11, %c0_12] : memref<24x128xf32, #tpu.memory_space<vmem>>, vector<24x128xf32>
      tpu.vector_store %arg7[%c0_11, %c0_12], %12 {strides = array<i32>} : memref<24x128xf32, #tpu.memory_space<vmem>>, vector<24x128xf32>,
    } else {
    }
    %c0 = arith.constant 0 : index
    %c0_1 = arith.constant 0 : index
    %3 = vector.load %arg7[%c0, %c0_1] : memref<24x128xf32, #tpu.memory_space<vmem>>, vector<24x128xf32>
    %c0_2 = arith.constant 0 : index
    %c0_3 = arith.constant 0 : index
    %4 = vector.load %arg3[%c0_2, %c0_3] : memref<24x128xbf16, #tpu.memory_space<vmem>>, vector<24x128xbf16>
    %c0_4 = arith.constant 0 : index
    %c0_5 = arith.constant 0 : index
    %5 = vector.load %arg4[%c0_4, %c0_5] : memref<128x128xbf16, #tpu.memory_space<vmem>>, vector<128x128xbf16>
    %cst = arith.constant dense<0.000000e+00> : vector<24x128xf32>
    %6 = tpu.matmul %4, %5, %cst {dimension_numbers = #tpu.dot_dimension_numbers<[1], [0], [0], [1], [0, 0, 1, 1], [], []>} : vector<24x128xbf16>, vector<128x128xbf16>, vector<24x128xf32> -> vector<24x128xf32>
    %7 = arith.addf %3, %6 : vector<24x128xf32>
    %c0_6 = arith.constant 0 : index
    %c0_7 = arith.constant 0 : index
    %8 = vector.load %arg7[%c0_6, %c0_7] : memref<24x128xf32, #tpu.memory_space<vmem>>, vector<24x128xf32>
    tpu.vector_store %arg7[%c0_6, %c0_7], %7 {strides = array<i32>} : memref<24x128xf32, #tpu.memory_space<vmem>>, vector<24x128xf32>,
    %c0_i32_8 = arith.constant 0 : i32
    %9 = arith.cmpi eq, %arg2, %c0_i32_8 : i32
    %10 = arith.extui %9 : i1 to i32
    %c0_i32_9 = arith.constant 0 : i32
    %11 = arith.cmpi ne, %10, %c0_i32_9 : i32
    scf.if %11 {
      %c0_10 = arith.constant 0 : index
      %c0_11 = arith.constant 0 : index
      %12 = vector.load %arg7[%c0_10, %c0_11] : memref<24x128xf32, #tpu.memory_space<vmem>>, vector<24x128xf32>
      %c0_12 = arith.constant 0 : index
      %c0_13 = arith.constant 0 : index
      %13 = vector.load %arg5[%c0_12, %c0_13] : memref<1x128xf32, #tpu.memory_space<vmem>>, vector<1x128xf32>
      %14 = vector.broadcast %13 : vector<1x128xf32> to vector<24x128xf32>
      %15 = arith.addf %12, %14 : vector<24x128xf32>
      %cst_14 = arith.constant 0.000000e+00 : f32
      %16 = vector.broadcast %cst_14 : f32 to vector<24x128xf32>
      %17 = arith.maximumf %15, %16 : vector<24x128xf32>
      %c0_15 = arith.constant 0 : index
      %c0_16 = arith.constant 0 : index
      %18 = vector.load %arg6[%c0_15, %c0_16] : memref<24x128xf32, #tpu.memory_space<vmem>>, vector<24x128xf32>
      tpu.vector_store %arg6[%c0_15, %c0_16], %17 {strides = array<i32>} : memref<24x128xf32, #tpu.memory_space<vmem>>, vector<24x128xf32>,
    } else {
    }
    return
  }
  func.func @transform_0(%arg0: i32, %arg1: i32, %arg2: i32) -> (i32, i32) {
    %c0_i32 = arith.constant 0 : i32
    return %arg0, %arg2 : i32, i32
  }
  func.func @transform_1(%arg0: i32, %arg1: i32, %arg2: i32) -> (i32, i32) {
    %c0_i32 = arith.constant 0 : i32
    return %arg2, %arg1 : i32, i32
  }
  func.func @transform_2(%arg0: i32, %arg1: i32, %arg2: i32) -> (i32, i32) {
    %c0_i32 = arith.constant 0 : i32
    %c0_i32_0 = arith.constant 0 : i32
    return %c0_i32, %arg1 : i32, i32
  }
  func.func @transform_3(%arg0: i32, %arg1: i32, %arg2: i32) -> (i32, i32) {
    %c0_i32 = arith.constant 0 : i32
    return %arg0, %arg1 : i32, i32
  }
}

module attributes {stable_mosaic.version = 11 : i64} {
  func.func @_matmul_kernel(%arg0: i32, %arg1: i32, %arg2: i32, %arg3: memref<24x128xbf16, #tpu.memory_space<vmem>>, %arg4: memref<128x128xbf16, #tpu.memory_space<vmem>>, %arg5: memref<1x128xf32, #tpu.memory_space<vmem>>, %arg6: memref<24x128xf32, #tpu.memory_space<vmem>>, %arg7: memref<24x128xf32, #tpu.memory_space<vmem>>) attributes {dimension_semantics = [#tpu.dimension_semantics<parallel>, #tpu.dimension_semantics<parallel>, #tpu.dimension_semantics<arbitrary>], iteration_bounds = array<i64: 1, 1, 1>, scalar_prefetch = 0 : i64, scratch_operands = 1 : i64, tpu.core_type = #tpu.core_type<tc>, window_params = [{transform_indices = @transform_0, window_bounds = array<i64: 24, 128>}, {transform_indices = @transform_1, window_bounds = array<i64: 128, 128>}, {transform_indices = @transform_2, window_bounds = array<i64: 1, 128>}, {transform_indices = @transform_3, window_bounds = array<i64: 24, 128>}]} {
    %c0_i32 = arith.constant 0 : i32
    %0 = arith.cmpi eq, %arg2, %c0_i32 : i32
    %1 = arith.extui %0 : i1 to i32
    %c0_i32_0 = arith.constant 0 : i32
    %2 = arith.cmpi ne, %1, %c0_i32_0 : i32
    scf.if %2 {
      %cst_10 = arith.constant 0.000000e+00 : f32
      %12 = vector.broadcast %cst_10 : f32 to vector<24x128xf32>
      %c0_11 = arith.constant 0 : index
      %c0_12 = arith.constant 0 : index
      %13 = vector.load %arg7[%c0_11, %c0_12] : memref<24x128xf32, #tpu.memory_space<vmem>>, vector<24x128xf32>
      tpu.vector_store %arg7[%c0_11, %c0_12], %12 {strides = array<i32>} : memref<24x128xf32, #tpu.memory_space<vmem>>, vector<24x128xf32>,
    } else {
    }
    %c0 = arith.constant 0 : index
    %c0_1 = arith.constant 0 : index
    %3 = vector.load %arg7[%c0, %c0_1] : memref<24x128xf32, #tpu.memory_space<vmem>>, vector<24x128xf32>
    %c0_2 = arith.constant 0 : index
    %c0_3 = arith.constant 0 : index
    %4 = vector.load %arg3[%c0_2, %c0_3] : memref<24x128xbf16, #tpu.memory_space<vmem>>, vector<24x128xbf16>
    %c0_4 = arith.constant 0 : index
    %c0_5 = arith.constant 0 : index
    %5 = vector.load %arg4[%c0_4, %c0_5] : memref<128x128xbf16, #tpu.memory_space<vmem>>, vector<128x128xbf16>
    %cst = arith.constant dense<0.000000e+00> : vector<24x128xf32>
    %6 = tpu.matmul %4, %5, %cst {dimension_numbers = #tpu.dot_dimension_numbers<[1], [0], [0], [1], [0, 0, 1, 1], [], []>} : vector<24x128xbf16>, vector<128x128xbf16>, vector<24x128xf32> -> vector<24x128xf32>
    %7 = arith.addf %3, %6 : vector<24x128xf32>
    %c0_6 = arith.constant 0 : index
    %c0_7 = arith.constant 0 : index
    %8 = vector.load %arg7[%c0_6, %c0_7] : memref<24x128xf32, #tpu.memory_space<vmem>>, vector<24x128xf32>
    tpu.vector_store %arg7[%c0_6, %c0_7], %7 {strides = array<i32>} : memref<24x128xf32, #tpu.memory_space<vmem>>, vector<24x128xf32>,
    %c0_i32_8 = arith.constant 0 : i32
    %9 = arith.cmpi eq, %arg2, %c0_i32_8 : i32
    %10 = arith.extui %9 : i1 to i32
    %c0_i32_9 = arith.constant 0 : i32
    %11 = arith.cmpi ne, %10, %c0_i32_9 : i32
    scf.if %11 {
      %c0_10 = arith.constant 0 : index
      %c0_11 = arith.constant 0 : index
      %12 = vector.load %arg7[%c0_10, %c0_11] : memref<24x128xf32, #tpu.memory_space<vmem>>, vector<24x128xf32>
      %c0_12 = arith.constant 0 : index
      %c0_13 = arith.constant 0 : index
      %13 = vector.load %arg5[%c0_12, %c0_13] : memref<1x128xf32, #tpu.memory_space<vmem>>, vector<1x128xf32>
      %14 = vector.broadcast %13 : vector<1x128xf32> to vector<24x128xf32>
      %15 = arith.addf %12, %14 : vector<24x128xf32>
      %c0_14 = arith.constant 0 : index
      %c0_15 = arith.constant 0 : index
      %16 = vector.load %arg6[%c0_14, %c0_15] : memref<24x128xf32, #tpu.memory_space<vmem>>, vector<24x128xf32>
      tpu.vector_store %arg6[%c0_14, %c0_15], %15 {strides = array<i32>} : memref<24x128xf32, #tpu.memory_space<vmem>>, vector<24x128xf32>,
    } else {
    }
    return
  }
  func.func @transform_0(%arg0: i32, %arg1: i32, %arg2: i32) -> (i32, i32) {
    %c0_i32 = arith.constant 0 : i32
    return %arg0, %arg2 : i32, i32
  }
  func.func @transform_1(%arg0: i32, %arg1: i32, %arg2: i32) -> (i32, i32) {
    %c0_i32 = arith.constant 0 : i32
    return %arg2, %arg1 : i32, i32
  }
  func.func @transform_2(%arg0: i32, %arg1: i32, %arg2: i32) -> (i32, i32) {
    %c0_i32 = arith.constant 0 : i32
    %c0_i32_0 = arith.constant 0 : i32
    return %c0_i32, %arg1 : i32, i32
  }
  func.func @transform_3(%arg0: i32, %arg1: i32, %arg2: i32) -> (i32, i32) {
    %c0_i32 = arith.constant 0 : i32
    return %arg0, %arg1 : i32, i32
  }
}

module attributes {stable_mosaic.version = 11 : i64} {
  func.func @_matmul_kernel(%arg0: i32, %arg1: i32, %arg2: i32, %arg3: memref<16x128xbf16, #tpu.memory_space<vmem>>, %arg4: memref<128x128xbf16, #tpu.memory_space<vmem>>, %arg5: memref<1x128xf32, #tpu.memory_space<vmem>>, %arg6: memref<16x128xf32, #tpu.memory_space<vmem>>, %arg7: memref<16x128xf32, #tpu.memory_space<vmem>>) attributes {dimension_semantics = [#tpu.dimension_semantics<parallel>, #tpu.dimension_semantics<parallel>, #tpu.dimension_semantics<arbitrary>], iteration_bounds = array<i64: 1, 1, 1>, scalar_prefetch = 0 : i64, scratch_operands = 1 : i64, tpu.core_type = #tpu.core_type<tc>, window_params = [{transform_indices = @transform_0, window_bounds = array<i64: 16, 128>}, {transform_indices = @transform_1, window_bounds = array<i64: 128, 128>}, {transform_indices = @transform_2, window_bounds = array<i64: 1, 128>}, {transform_indices = @transform_3, window_bounds = array<i64: 16, 128>}]} {
    %c0_i32 = arith.constant 0 : i32
    %0 = arith.cmpi eq, %arg2, %c0_i32 : i32
    %1 = arith.extui %0 : i1 to i32
    %c0_i32_0 = arith.constant 0 : i32
    %2 = arith.cmpi ne, %1, %c0_i32_0 : i32
    scf.if %2 {
      %cst_10 = arith.constant 0.000000e+00 : f32
      %12 = vector.broadcast %cst_10 : f32 to vector<16x128xf32>
      %c0_11 = arith.constant 0 : index
      %c0_12 = arith.constant 0 : index
      %13 = vector.load %arg7[%c0_11, %c0_12] : memref<16x128xf32, #tpu.memory_space<vmem>>, vector<16x128xf32>
      tpu.vector_store %arg7[%c0_11, %c0_12], %12 {strides = array<i32>} : memref<16x128xf32, #tpu.memory_space<vmem>>, vector<16x128xf32>,
    } else {
    }
    %c0 = arith.constant 0 : index
    %c0_1 = arith.constant 0 : index
    %3 = vector.load %arg7[%c0, %c0_1] : memref<16x128xf32, #tpu.memory_space<vmem>>, vector<16x128xf32>
    %c0_2 = arith.constant 0 : index
    %c0_3 = arith.constant 0 : index
    %4 = vector.load %arg3[%c0_2, %c0_3] : memref<16x128xbf16, #tpu.memory_space<vmem>>, vector<16x128xbf16>
    %c0_4 = arith.constant 0 : index
    %c0_5 = arith.constant 0 : index
    %5 = vector.load %arg4[%c0_4, %c0_5] : memref<128x128xbf16, #tpu.memory_space<vmem>>, vector<128x128xbf16>
    %cst = arith.constant dense<0.000000e+00> : vector<16x128xf32>
    %6 = tpu.matmul %4, %5, %cst {dimension_numbers = #tpu.dot_dimension_numbers<[1], [0], [0], [1], [0, 0, 1, 1], [], []>} : vector<16x128xbf16>, vector<128x128xbf16>, vector<16x128xf32> -> vector<16x128xf32>
    %7 = arith.addf %3, %6 : vector<16x128xf32>
    %c0_6 = arith.constant 0 : index
    %c0_7 = arith.constant 0 : index
    %8 = vector.load %arg7[%c0_6, %c0_7] : memref<16x128xf32, #tpu.memory_space<vmem>>, vector<16x128xf32>
    tpu.vector_store %arg7[%c0_6, %c0_7], %7 {strides = array<i32>} : memref<16x128xf32, #tpu.memory_space<vmem>>, vector<16x128xf32>,
    %c0_i32_8 = arith.constant 0 : i32
    %9 = arith.cmpi eq, %arg2, %c0_i32_8 : i32
    %10 = arith.extui %9 : i1 to i32
    %c0_i32_9 = arith.constant 0 : i32
    %11 = arith.cmpi ne, %10, %c0_i32_9 : i32
    scf.if %11 {
      %c0_10 = arith.constant 0 : index
      %c0_11 = arith.constant 0 : index
      %12 = vector.load %arg7[%c0_10, %c0_11] : memref<16x128xf32, #tpu.memory_space<vmem>>, vector<16x128xf32>
      %c0_12 = arith.constant 0 : index
      %c0_13 = arith.constant 0 : index
      %13 = vector.load %arg5[%c0_12, %c0_13] : memref<1x128xf32, #tpu.memory_space<vmem>>, vector<1x128xf32>
      %14 = vector.broadcast %13 : vector<1x128xf32> to vector<16x128xf32>
      %15 = arith.addf %12, %14 : vector<16x128xf32>
      %cst_14 = arith.constant 0.000000e+00 : f32
      %16 = vector.broadcast %cst_14 : f32 to vector<16x128xf32>
      %17 = arith.maximumf %15, %16 : vector<16x128xf32>
      %c0_15 = arith.constant 0 : index
      %c0_16 = arith.constant 0 : index
      %18 = vector.load %arg6[%c0_15, %c0_16] : memref<16x128xf32, #tpu.memory_space<vmem>>, vector<16x128xf32>
      tpu.vector_store %arg6[%c0_15, %c0_16], %17 {strides = array<i32>} : memref<16x128xf32, #tpu.memory_space<vmem>>, vector<16x128xf32>,
    } else {
    }
    return
  }
  func.func @transform_0(%arg0: i32, %arg1: i32, %arg2: i32) -> (i32, i32) {
    %c0_i32 = arith.constant 0 : i32
    return %arg0, %arg2 : i32, i32
  }
  func.func @transform_1(%arg0: i32, %arg1: i32, %arg2: i32) -> (i32, i32) {
    %c0_i32 = arith.constant 0 : i32
    return %arg2, %arg1 : i32, i32
  }
  func.func @transform_2(%arg0: i32, %arg1: i32, %arg2: i32) -> (i32, i32) {
    %c0_i32 = arith.constant 0 : i32
    %c0_i32_0 = arith.constant 0 : i32
    return %c0_i32, %arg1 : i32, i32
  }
  func.func @transform_3(%arg0: i32, %arg1: i32, %arg2: i32) -> (i32, i32) {
    %c0_i32 = arith.constant 0 : i32
    return %arg0, %arg1 : i32, i32
  }
}

module attributes {stable_mosaic.version = 11 : i64} {
  func.func @_matmul_kernel(%arg0: i32, %arg1: i32, %arg2: i32, %arg3: memref<16x128xbf16, #tpu.memory_space<vmem>>, %arg4: memref<128x128xbf16, #tpu.memory_space<vmem>>, %arg5: memref<1x128xf32, #tpu.memory_space<vmem>>, %arg6: memref<16x128xf32, #tpu.memory_space<vmem>>, %arg7: memref<16x128xf32, #tpu.memory_space<vmem>>) attributes {dimension_semantics = [#tpu.dimension_semantics<parallel>, #tpu.dimension_semantics<parallel>, #tpu.dimension_semantics<arbitrary>], iteration_bounds = array<i64: 1, 1, 1>, scalar_prefetch = 0 : i64, scratch_operands = 1 : i64, tpu.core_type = #tpu.core_type<tc>, window_params = [{transform_indices = @transform_0, window_bounds = array<i64: 16, 128>}, {transform_indices = @transform_1, window_bounds = array<i64: 128, 128>}, {transform_indices = @transform_2, window_bounds = array<i64: 1, 128>}, {transform_indices = @transform_3, window_bounds = array<i64: 16, 128>}]} {
    %c0_i32 = arith.constant 0 : i32
    %0 = arith.cmpi eq, %arg2, %c0_i32 : i32
    %1 = arith.extui %0 : i1 to i32
    %c0_i32_0 = arith.constant 0 : i32
    %2 = arith.cmpi ne, %1, %c0_i32_0 : i32
    scf.if %2 {
      %cst_10 = arith.constant 0.000000e+00 : f32
      %12 = vector.broadcast %cst_10 : f32 to vector<16x128xf32>
      %c0_11 = arith.constant 0 : index
      %c0_12 = arith.constant 0 : index
      %13 = vector.load %arg7[%c0_11, %c0_12] : memref<16x128xf32, #tpu.memory_space<vmem>>, vector<16x128xf32>
      tpu.vector_store %arg7[%c0_11, %c0_12], %12 {strides = array<i32>} : memref<16x128xf32, #tpu.memory_space<vmem>>, vector<16x128xf32>,
    } else {
    }
    %c0 = arith.constant 0 : index
    %c0_1 = arith.constant 0 : index
    %3 = vector.load %arg7[%c0, %c0_1] : memref<16x128xf32, #tpu.memory_space<vmem>>, vector<16x128xf32>
    %c0_2 = arith.constant 0 : index
    %c0_3 = arith.constant 0 : index
    %4 = vector.load %arg3[%c0_2, %c0_3] : memref<16x128xbf16, #tpu.memory_space<vmem>>, vector<16x128xbf16>
    %c0_4 = arith.constant 0 : index
    %c0_5 = arith.constant 0 : index
    %5 = vector.load %arg4[%c0_4, %c0_5] : memref<128x128xbf16, #tpu.memory_space<vmem>>, vector<128x128xbf16>
    %cst = arith.constant dense<0.000000e+00> : vector<16x128xf32>
    %6 = tpu.matmul %4, %5, %cst {dimension_numbers = #tpu.dot_dimension_numbers<[1], [0], [0], [1], [0, 0, 1, 1], [], []>} : vector<16x128xbf16>, vector<128x128xbf16>, vector<16x128xf32> -> vector<16x128xf32>
    %7 = arith.addf %3, %6 : vector<16x128xf32>
    %c0_6 = arith.constant 0 : index
    %c0_7 = arith.constant 0 : index
    %8 = vector.load %arg7[%c0_6, %c0_7] : memref<16x128xf32, #tpu.memory_space<vmem>>, vector<16x128xf32>
    tpu.vector_store %arg7[%c0_6, %c0_7], %7 {strides = array<i32>} : memref<16x128xf32, #tpu.memory_space<vmem>>, vector<16x128xf32>,
    %c0_i32_8 = arith.constant 0 : i32
    %9 = arith.cmpi eq, %arg2, %c0_i32_8 : i32
    %10 = arith.extui %9 : i1 to i32
    %c0_i32_9 = arith.constant 0 : i32
    %11 = arith.cmpi ne, %10, %c0_i32_9 : i32
    scf.if %11 {
      %c0_10 = arith.constant 0 : index
      %c0_11 = arith.constant 0 : index
      %12 = vector.load %arg7[%c0_10, %c0_11] : memref<16x128xf32, #tpu.memory_space<vmem>>, vector<16x128xf32>
      %c0_12 = arith.constant 0 : index
      %c0_13 = arith.constant 0 : index
      %13 = vector.load %arg5[%c0_12, %c0_13] : memref<1x128xf32, #tpu.memory_space<vmem>>, vector<1x128xf32>
      %14 = vector.broadcast %13 : vector<1x128xf32> to vector<16x128xf32>
      %15 = arith.addf %12, %14 : vector<16x128xf32>
      %c0_14 = arith.constant 0 : index
      %c0_15 = arith.constant 0 : index
      %16 = vector.load %arg6[%c0_14, %c0_15] : memref<16x128xf32, #tpu.memory_space<vmem>>, vector<16x128xf32>
      tpu.vector_store %arg6[%c0_14, %c0_15], %15 {strides = array<i32>} : memref<16x128xf32, #tpu.memory_space<vmem>>, vector<16x128xf32>,
    } else {
    }
    return
  }
  func.func @transform_0(%arg0: i32, %arg1: i32, %arg2: i32) -> (i32, i32) {
    %c0_i32 = arith.constant 0 : i32
    return %arg0, %arg2 : i32, i32
  }
  func.func @transform_1(%arg0: i32, %arg1: i32, %arg2: i32) -> (i32, i32) {
    %c0_i32 = arith.constant 0 : i32
    return %arg2, %arg1 : i32, i32
  }
  func.func @transform_2(%arg0: i32, %arg1: i32, %arg2: i32) -> (i32, i32) {
    %c0_i32 = arith.constant 0 : i32
    %c0_i32_0 = arith.constant 0 : i32
    return %c0_i32, %arg1 : i32, i32
  }
  func.func @transform_3(%arg0: i32, %arg1: i32, %arg2: i32) -> (i32, i32) {
    %c0_i32 = arith.constant 0 : i32
    return %arg0, %arg1 : i32, i32
  }
}

module attributes {stable_mosaic.version = 11 : i64} {
  func.func @_norm_mm_kernel(%arg0: i32, %arg1: i32, %arg2: memref<16x128xf32, #tpu.memory_space<vmem>>, %arg3: memref<1x128x128xbf16, #tpu.memory_space<vmem>>, %arg4: memref<1x16x128xf32, #tpu.memory_space<vmem>>) attributes {dimension_semantics = [#tpu.dimension_semantics<parallel>, #tpu.dimension_semantics<parallel>], iteration_bounds = array<i64: 1, 1>, scalar_prefetch = 0 : i64, scratch_operands = 0 : i64, tpu.core_type = #tpu.core_type<tc>, window_params = [{transform_indices = @transform_0, window_bounds = array<i64: 16, 128>}, {transform_indices = @transform_1, window_bounds = array<i64: 1, 128, 128>}, {transform_indices = @transform_2, window_bounds = array<i64: 1, 16, 128>}]} {
    %c0 = arith.constant 0 : index
    %c0_0 = arith.constant 0 : index
    %0 = vector.load %arg2[%c0, %c0_0] : memref<16x128xf32, #tpu.memory_space<vmem>>, vector<16x128xf32>
    %1 = math.absf %0 : vector<16x128xf32>
    %cst = arith.constant dense<0.000000e+00> : vector<16xf32>
    %2 = vector.multi_reduction <add>, %1, %cst [1] : vector<16x128xf32> to vector<16xf32>
    %3 = vector.shape_cast %2 : vector<16xf32> to vector<16x1xf32>
    %cst_1 = arith.constant 9.99999996E-13 : f32
    %4 = vector.broadcast %cst_1 : f32 to vector<16x1xf32>
    %5 = arith.maximumf %3, %4 : vector<16x1xf32>
    %6 = vector.broadcast %5 : vector<16x1xf32> to vector<16x128xf32>
    %7 = arith.divf %0, %6 : vector<16x128xf32>
    %8 = arith.truncf %7 : vector<16x128xf32> to vector<16x128xbf16>
    %c0_2 = arith.constant 0 : index
    %c0_3 = arith.constant 0 : index
    %c0_4 = arith.constant 0 : index
    %9 = vector.load %arg3[%c0_2, %c0_3, %c0_4] : memref<1x128x128xbf16, #tpu.memory_space<vmem>>, vector<1x128x128xbf16>
    %10 = vector.shape_cast %9 : vector<1x128x128xbf16> to vector<128x128xbf16>
    %cst_5 = arith.constant dense<0.000000e+00> : vector<16x128xf32>
    %11 = tpu.matmul %8, %10, %cst_5 {dimension_numbers = #tpu.dot_dimension_numbers<[1], [0], [0], [1], [0, 0, 1, 1], [], []>} : vector<16x128xbf16>, vector<128x128xbf16>, vector<16x128xf32> -> vector<16x128xf32>
    %c0_6 = arith.constant 0 : index
    %c0_7 = arith.constant 0 : index
    %c0_8 = arith.constant 0 : index
    %12 = vector.load %arg4[%c0_6, %c0_7, %c0_8] : memref<1x16x128xf32, #tpu.memory_space<vmem>>, vector<1x16x128xf32>
    %13 = vector.shape_cast %12 : vector<1x16x128xf32> to vector<16x128xf32>
    %14 = vector.shape_cast %11 : vector<16x128xf32> to vector<1x16x128xf32>
    tpu.vector_store %arg4[%c0_6, %c0_7, %c0_8], %14 {strides = array<i32>} : memref<1x16x128xf32, #tpu.memory_space<vmem>>, vector<1x16x128xf32>,
    return
  }
  func.func @transform_0(%arg0: i32, %arg1: i32) -> (i32, i32) {
    %c0_i32 = arith.constant 0 : i32
    %c0_i32_0 = arith.constant 0 : i32
    return %arg1, %c0_i32 : i32, i32
  }
  func.func @transform_1(%arg0: i32, %arg1: i32) -> (i32, i32, i32) {
    %c0_i32 = arith.constant 0 : i32
    %c0_i32_0 = arith.constant 0 : i32
    %c0_i32_1 = arith.constant 0 : i32
    return %arg0, %c0_i32, %c0_i32_0 : i32, i32, i32
  }
  func.func @transform_2(%arg0: i32, %arg1: i32) -> (i32, i32, i32) {
    %c0_i32 = arith.constant 0 : i32
    %c0_i32_0 = arith.constant 0 : i32
    return %arg0, %arg1, %c0_i32 : i32, i32, i32
  }
}

module attributes {stable_mosaic.version = 11 : i64} {
  func.func @_gram_kernel(%arg0: i32, %arg1: i32, %arg2: i32, %arg3: memref<1x128x128xbf16, #tpu.memory_space<vmem>>, %arg4: memref<1x128x128xbf16, #tpu.memory_space<vmem>>, %arg5: memref<1x128x128xf32, #tpu.memory_space<vmem>>) attributes {dimension_semantics = [#tpu.dimension_semantics<parallel>, #tpu.dimension_semantics<parallel>, #tpu.dimension_semantics<parallel>], iteration_bounds = array<i64: 1, 1, 1>, scalar_prefetch = 0 : i64, scratch_operands = 0 : i64, tpu.core_type = #tpu.core_type<tc>, window_params = [{transform_indices = @transform_0, window_bounds = array<i64: 1, 128, 128>}, {transform_indices = @transform_1, window_bounds = array<i64: 1, 128, 128>}, {transform_indices = @transform_2, window_bounds = array<i64: 1, 128, 128>}]} {
    %c0 = arith.constant 0 : index
    %c0_0 = arith.constant 0 : index
    %c0_1 = arith.constant 0 : index
    %0 = vector.load %arg3[%c0, %c0_0, %c0_1] : memref<1x128x128xbf16, #tpu.memory_space<vmem>>, vector<1x128x128xbf16>
    %1 = vector.shape_cast %0 : vector<1x128x128xbf16> to vector<128x128xbf16>
    %c0_2 = arith.constant 0 : index
    %c0_3 = arith.constant 0 : index
    %c0_4 = arith.constant 0 : index
    %2 = vector.load %arg4[%c0_2, %c0_3, %c0_4] : memref<1x128x128xbf16, #tpu.memory_space<vmem>>, vector<1x128x128xbf16>
    %3 = vector.shape_cast %2 : vector<1x128x128xbf16> to vector<128x128xbf16>
    %cst = arith.constant dense<0.000000e+00> : vector<128x128xf32>
    %4 = tpu.matmul %1, %3, %cst {dimension_numbers = #tpu.dot_dimension_numbers<[1], [1], [0], [0], [0, 0, 1, 0], [], []>} : vector<128x128xbf16>, vector<128x128xbf16>, vector<128x128xf32> -> vector<128x128xf32>
    %c0_5 = arith.constant 0 : index
    %c0_6 = arith.constant 0 : index
    %c0_7 = arith.constant 0 : index
    %5 = vector.load %arg5[%c0_5, %c0_6, %c0_7] : memref<1x128x128xf32, #tpu.memory_space<vmem>>, vector<1x128x128xf32>
    %6 = vector.shape_cast %5 : vector<1x128x128xf32> to vector<128x128xf32>
    %7 = vector.shape_cast %4 : vector<128x128xf32> to vector<1x128x128xf32>
    tpu.vector_store %arg5[%c0_5, %c0_6, %c0_7], %7 {strides = array<i32>} : memref<1x128x128xf32, #tpu.memory_space<vmem>>, vector<1x128x128xf32>,
    return
  }
  func.func @transform_0(%arg0: i32, %arg1: i32, %arg2: i32) -> (i32, i32, i32) {
    %c0_i32 = arith.constant 0 : i32
    %c0_i32_0 = arith.constant 0 : i32
    return %arg0, %arg1, %c0_i32 : i32, i32, i32
  }
  func.func @transform_1(%arg0: i32, %arg1: i32, %arg2: i32) -> (i32, i32, i32) {
    %c0_i32 = arith.constant 0 : i32
    %c0_i32_0 = arith.constant 0 : i32
    return %arg0, %arg2, %c0_i32 : i32, i32, i32
  }
  func.func @transform_2(%arg0: i32, %arg1: i32, %arg2: i32) -> (i32, i32, i32) {
    %c0_i32 = arith.constant 0 : i32
    return %arg0, %arg1, %arg2 : i32, i32, i32
  }
}

</mosaic_0001>

<llo_original>
// kernel: seegera_forward.16
$region0: #{seegera_forward.16}
  #allocation0 [shape = 'u32[]', space=smem, size = 0x4, offset = 0x4, fixed_abs, tag = 'smem constant byte address 0x4 - core index']
  #allocation1 [shape = 'u32[72,128]{1,0:T(1,128)}', space=vmem, size = 0x9000, scoped, tag = 'internal scratch']
  #allocation2 [shape = 'f32[2,16,128]{2,1,0:T(8,128)}', space=vmem, size = 0x4000, scoped, tag = 'scratch operand']
  %s0 = inlined_call_operand.vmem [shape: bf16[16,128], index: 0, kind: input, shape index: {}]
  %s1 = inlined_call_operand.vmem [shape: bf16[2,128,128], index: 1, kind: input, shape index: {}]
  %s2 = inlined_call_operand.vmem [shape: bf16[128,128], index: 2, kind: input, shape index: {}]
  %s3 = inlined_call_operand.vmem [shape: f32[1,128], index: 3, kind: input, shape index: {}]
  %s4 = inlined_call_operand.vmem [shape: f32[2,16,128], index: 4, kind: output, shape index: {}]
  %s5 = sld [smem:[#allocation0]]
  $region34: #{seegera_forward.16} parent=0
    _
  %s7 = ssub.s32 1, %s5
  %s8 = scalar_select 0, %s7, %s5
  // Predicated region
  $region2: #{seegera_forward.16} parent=0 // pred_check
    _
  $region3: #{seegera_forward.16} parent=0 // pred_check_branch
    %10 = sbr.rel (0) target = $region5
  $region4: #{seegera_forward.16} parent=0 // pred_region
    _
  $region5: #{seegera_forward.16} parent=0 // pred_fallthru
    _
  // Predicated region
  $region6: #{seegera_forward.16} parent=0 // pred_check
    _
  $region7: #{seegera_forward.16} parent=0 // pred_check_branch
    %12 = sbr.rel (0) target = $region9
  $region8: #{seegera_forward.16} parent=0 // pred_region
    _
  $region9: #{seegera_forward.16} parent=0 // pred_fallthru
    _
  // Predicated region
  $region10: #{seegera_forward.16} parent=0 // pred_check
    _
  $region11: #{seegera_forward.16} parent=0 // pred_check_branch
    %14 = sbr.rel (0) target = $region13
  $region12: #{seegera_forward.16} parent=0 // pred_region
    _
  $region13: #{seegera_forward.16} parent=0 // pred_fallthru
    _
  // Predicated region
  $region14: #{seegera_forward.16} parent=0 // pred_check
    _
  $region15: #{seegera_forward.16} parent=0 // pred_check_branch
    %16 = sbr.rel (0) target = $region17
  $region16: #{seegera_forward.16} parent=0 // pred_region
    _
  $region17: #{seegera_forward.16} parent=0 // pred_fallthru
    _
  %p17 = scmp.eq.s32.totalorder 0, 0
  // Predicated region
  $region18: #{seegera_forward.16} parent=0 // pred_check
    %p18 = pneg %p17
  $region19: #{seegera_forward.16} parent=0 // pred_check_branch
    %20 = sbr.rel (%p18) target = $region21
  $region20: #{seegera_forward.16} parent=0 // pred_region
    %21 = vst [vmem:[#allocation2] sm:$0xff] 0.0
    %22 = vst [vmem:[#allocation2 + $0x8] sm:$0xff] 0.0
    %23 = vst [vmem:[#allocation2 + $0x10] sm:$0xff] 0.0
    %24 = vst [vmem:[#allocation2 + $0x18] sm:$0xff] 0.0
  $region21: #{seegera_forward.16} parent=0 // pred_fallthru
    _
  %v25 = vld [vmem:[%s0] sm:$0xf]
  %v26 = vld [vmem:[%s0 + $0x4] sm:$0xf]
  %v27 = vld [vmem:[%s2] sm:$0xf]
  %v28 = vld [vmem:[%s2 + $0x4] sm:$0xf]
  %v29 = vld [vmem:[%s2 + $0x8] sm:$0xf]
  %v30 = vld [vmem:[%s2 + $0xc] sm:$0xf]
  %v31 = vld [vmem:[%s2 + $0x10] sm:$0xf]
  %v32 = vld [vmem:[%s2 + $0x14] sm:$0xf]
  %v33 = vld [vmem:[%s2 + $0x18] sm:$0xf]
  %v34 = vld [vmem:[%s2 + $0x1c] sm:$0xf]
  %v35 = vld [vmem:[%s2 + $0x20] sm:$0xf]
  %v36 = vld [vmem:[%s2 + $0x24] sm:$0xf]
  %v37 = vld [vmem:[%s2 + $0x28] sm:$0xf]
  %v38 = vld [vmem:[%s2 + $0x2c] sm:$0xf]
  %v39 = vld [vmem:[%s2 + $0x30] sm:$0xf]
  %v40 = vld [vmem:[%s2 + $0x34] sm:$0xf]
  %v41 = vld [vmem:[%s2 + $0x38] sm:$0xf]
  %v42 = vld [vmem:[%s2 + $0x3c] sm:$0xf]
  %v43 = vld [vmem:[%s1] sm:$0xf]
  %v44 = vld [vmem:[%s1 + $0x4] sm:$0xf]
  %v45 = vld [vmem:[%s1 + $0x8] sm:$0xf]
  %v46 = vld [vmem:[%s1 + $0xc] sm:$0xf]
  %v47 = vld [vmem:[%s1 + $0x10] sm:$0xf]
  %v48 = vld [vmem:[%s1 + $0x14] sm:$0xf]
  %v49 = vld [vmem:[%s1 + $0x18] sm:$0xf]
  %v50 = vld [vmem:[%s1 + $0x1c] sm:$0xf]
  %v51 = vld [vmem:[%s1 + $0x20] sm:$0xf]
  %v52 = vld [vmem:[%s1 + $0x24] sm:$0xf]
  %v53 = vld [vmem:[%s1 + $0x28] sm:$0xf]
  %v54 = vld [vmem:[%s1 + $0x2c] sm:$0xf]
  %v55 = vld [vmem:[%s1 + $0x30] sm:$0xf]
  %v56 = vld [vmem:[%s1 + $0x34] sm:$0xf]
  %v57 = vld [vmem:[%s1 + $0x38] sm:$0xf]
  %v58 = vld [vmem:[%s1 + $0x3c] sm:$0xf]
  %v59 = vld [vmem:[%s1 + $0x40] sm:$0xf]
  %v60 = vld [vmem:[%s1 + $0x44] sm:$0xf]
  %v61 = vld [vmem:[%s1 + $0x48] sm:$0xf]
  %v62 = vld [vmem:[%s1 + $0x4c] sm:$0xf]
  %v63 = vld [vmem:[%s1 + $0x50] sm:$0xf]
  %v64 = vld [vmem:[%s1 + $0x54] sm:$0xf]
  %v65 = vld [vmem:[%s1 + $0x58] sm:$0xf]
  %v66 = vld [vmem:[%s1 + $0x5c] sm:$0xf]
  %v67 = vld [vmem:[%s1 + $0x60] sm:$0xf]
  %v68 = vld [vmem:[%s1 + $0x64] sm:$0xf]
  %v69 = vld [vmem:[%s1 + $0x68] sm:$0xf]
  %v70 = vld [vmem:[%s1 + $0x6c] sm:$0xf]
  %v71 = vld [vmem:[%s1 + $0x70] sm:$0xf]
  %v72 = vld [vmem:[%s1 + $0x74] sm:$0xf]
  %v73 = vld [vmem:[%s1 + $0x78] sm:$0xf]
  %v74 = vld [vmem:[%s1 + $0x7c] sm:$0xf]
  %v91 = vunpack.c.l.b16 %v43
  %v92 = vunpack.c.l.b16 %v44
  %v93 = vunpack.c.l.b16 %v45
  %v94 = vunpack.c.l.b16 %v46
  %v95 = vunpack.c.l.b16 %v47
  %v96 = vunpack.c.l.b16 %v48
  %v97 = vunpack.c.l.b16 %v49
  %v98 = vunpack.c.l.b16 %v50
  %v99 = vunpack.c.l.b16 %v51
  %v100 = vunpack.c.l.b16 %v52
  %v101 = vunpack.c.l.b16 %v53
  %v102 = vunpack.c.l.b16 %v54
  %v103 = vunpack.c.l.b16 %v55
  %v104 = vunpack.c.l.b16 %v56
  %v105 = vunpack.c.l.b16 %v57
  %v106 = vunpack.c.l.b16 %v58
  %v107 = vpack.c.b16 %v92, %v91
  %v108 = vpack.c.b16 %v94, %v93
  %v109 = vpack.c.b16 %v96, %v95
  %v110 = vpack.c.b16 %v98, %v97
  %v111 = vpack.c.b16 %v100, %v99
  %v112 = vpack.c.b16 %v102, %v101
  %v113 = vpack.c.b16 %v104, %v103
  %v114 = vpack.c.b16 %v106, %v105
  %v139 = vunpack.c.l.b16 %v27
  %v140 = vunpack.c.l.b16 %v28
  %v141 = vunpack.c.l.b16 %v29
  %v142 = vunpack.c.l.b16 %v30
  %v143 = vunpack.c.l.b16 %v31
  %v144 = vunpack.c.l.b16 %v32
  %v145 = vunpack.c.l.b16 %v33
  %v146 = vunpack.c.l.b16 %v34
  %v147 = vunpack.c.l.b16 %v35
  %v148 = vunpack.c.l.b16 %v36
  %v149 = vunpack.c.l.b16 %v37
  %v150 = vunpack.c.l.b16 %v38
  %v151 = vunpack.c.l.b16 %v39
  %v152 = vunpack.c.l.b16 %v40
  %v153 = vunpack.c.l.b16 %v41
  %v154 = vunpack.c.l.b16 %v42
  %v155 = vpack.c.b16 %v140, %v139
  %v156 = vpack.c.b16 %v142, %v141
  %v157 = vpack.c.b16 %v144, %v143
  %v158 = vpack.c.b16 %v146, %v145
  %v159 = vpack.c.b16 %v148, %v147
  %v160 = vpack.c.b16 %v150, %v149
  %v161 = vpack.c.b16 %v152, %v151
  %v162 = vpack.c.b16 %v154, %v153
  %171 = vmatpush.bf16.msra.mxu0 %v162
  %172 = vmatpush.bf16.msra.mxu0 %v161
  %173 = vmatpush.bf16.msra.mxu0 %v160
  %174 = vmatpush.bf16.msra.mxu0 %v159
  %175 = vmatpush.bf16.msra.mxu0 %v158
  %176 = vmatpush.bf16.msra.mxu0 %v157
  %177 = vmatpush.bf16.msra.mxu0 %v156
  %178 = vmatpush.bf16.msra.mxu0 %v155
  %179 = vmatmul.bf16.gmra.mxu0 %v107
  %v180 = vpop.f32.mrf.mxu0
  %v181 = vadd.f32 0.0, %v180
  %v182 = vpop.f32.mrf.mxu0
  %v183 = vadd.f32 0.0, %v182
  %184 = vmatmul.bf16.gmra.mxu0 %v108
  %v185 = vpop.f32.mrf.mxu0
  %v186 = vadd.f32 0.0, %v185
  %v187 = vpop.f32.mrf.mxu0
  %v188 = vadd.f32 0.0, %v187
  %189 = vmatmul.bf16.gmra.mxu0 %v109
  %v190 = vpop.f32.mrf.mxu0
  %v191 = vadd.f32 0.0, %v190
  %v192 = vpop.f32.mrf.mxu0
  %v193 = vadd.f32 0.0, %v192
  %194 = vmatmul.bf16.gmra.mxu0 %v110
  %v195 = vpop.f32.mrf.mxu0
  %v196 = vadd.f32 0.0, %v195
  %v197 = vpop.f32.mrf.mxu0
  %v198 = vadd.f32 0.0, %v197
  %199 = vmatmul.bf16.gmra.mxu0 %v111
  %v200 = vpop.f32.mrf.mxu0
  %v201 = vadd.f32 0.0, %v200
  %v202 = vpop.f32.mrf.mxu0
  %v203 = vadd.f32 0.0, %v202
  %204 = vmatmul.bf16.gmra.mxu0 %v112
  %v205 = vpop.f32.mrf.mxu0
  %v206 = vadd.f32 0.0, %v205
  %v207 = vpop.f32.mrf.mxu0
  %v208 = vadd.f32 0.0, %v207
  %209 = vmatmul.bf16.gmra.mxu0 %v113
  %v210 = vpop.f32.mrf.mxu0
  %v211 = vadd.f32 0.0, %v210
  %v212 = vpop.f32.mrf.mxu0
  %v213 = vadd.f32 0.0, %v212
  %214 = vmatmul.bf16.gmra.mxu0 %v114
  %v215 = vpop.f32.mrf.mxu0
  %v216 = vadd.f32 0.0, %v215
  %v217 = vpop.f32.mrf.mxu0
  %v218 = vadd.f32 0.0, %v217
  %219 = vdwg.mxu0
  %v220 = vld [vmem:[#allocation2] sm:$0xff]
  %v221 = vld [vmem:[#allocation2 + $0x8] sm:$0xff]
  %v222 = vpack.c.bf16 %v183, %v181
  %v223 = vpack.c.bf16 %v188, %v186
  %v224 = vpack.c.bf16 %v193, %v191
  %v225 = vpack.c.bf16 %v198, %v196
  %v226 = vpack.c.bf16 %v203, %v201
  %v227 = vpack.c.bf16 %v208, %v206
  %v228 = vpack.c.bf16 %v213, %v211
  %v229 = vpack.c.bf16 %v218, %v216
  %v232 = vunpack.c.l.b16 %v25
  %v233 = vunpack.c.l.b16 %v26
  %v234 = vpack.c.b16 %v233, %v232
  %236 = vmatpush.bf16.msra.mxu0 %v229
  %237 = vmatpush.bf16.msra.mxu0 %v228
  %238 = vmatpush.bf16.msra.mxu0 %v227
  %239 = vmatpush.bf16.msra.mxu0 %v226
  %240 = vmatpush.bf16.msra.mxu0 %v225
  %241 = vmatpush.bf16.msra.mxu0 %v224
  %242 = vmatpush.bf16.msra.mxu0 %v223
  %243 = vmatpush.bf16.msra.mxu0 %v222
  %244 = vmatmul.bf16.gmra.mxu0 %v234
  %v245 = vpop.f32.mrf.mxu0
  %v246 = vadd.f32 0.0, %v245
  %v247 = vpop.f32.mrf.mxu0
  %v248 = vadd.f32 0.0, %v247
  %249 = vdwg.mxu0
  %v250 = vadd.f32 %v220, %v246
  %v251 = vadd.f32 %v221, %v248
  %252 = vst [vmem:[#allocation2] sm:$0xff] %v250
  %253 = vst [vmem:[#allocation2 + $0x8] sm:$0xff] %v251
  %v270 = vunpack.c.l.b16 %v59
  %v271 = vunpack.c.l.b16 %v60
  %v272 = vunpack.c.l.b16 %v61
  %v273 = vunpack.c.l.b16 %v62
  %v274 = vunpack.c.l.b16 %v63
  %v275 = vunpack.c.l.b16 %v64
  %v276 = vunpack.c.l.b16 %v65
  %v277 = vunpack.c.l.b16 %v66
  %v278 = vunpack.c.l.b16 %v67
  %v279 = vunpack.c.l.b16 %v68
  %v280 = vunpack.c.l.b16 %v69
  %v281 = vunpack.c.l.b16 %v70
  %v282 = vunpack.c.l.b16 %v71
  %v283 = vunpack.c.l.b16 %v72
  %v284 = vunpack.c.l.b16 %v73
  %v285 = vunpack.c.l.b16 %v74
  %v286 = vpack.c.b16 %v271, %v270
  %v287 = vpack.c.b16 %v273, %v272
  %v288 = vpack.c.b16 %v275, %v274
  %v289 = vpack.c.b16 %v277, %v276
  %v290 = vpack.c.b16 %v279, %v278
  %v291 = vpack.c.b16 %v281, %v280
  %v292 = vpack.c.b16 %v283, %v282
  %v293 = vpack.c.b16 %v285, %v284
  %302 = vmatpush.bf16.msra.mxu0 %v162
  %303 = vmatpush.bf16.msra.mxu0 %v161
  %304 = vmatpush.bf16.msra.mxu0 %v160
  %305 = vmatpush.bf16.msra.mxu0 %v159
  %306 = vmatpush.bf16.msra.mxu0 %v158
  %307 = vmatpush.bf16.msra.mxu0 %v157
  %308 = vmatpush.bf16.msra.mxu0 %v156
  %309 = vmatpush.bf16.msra.mxu0 %v155
  %310 = vmatmul.bf16.gmra.mxu0 %v286
  %v311 = vpop.f32.mrf.mxu0
  %v312 = vadd.f32 0.0, %v311
  %v313 = vpop.f32.mrf.mxu0
  %v314 = vadd.f32 0.0, %v313
  %315 = vmatmul.bf16.gmra.mxu0 %v287
  %v316 = vpop.f32.mrf.mxu0
  %v317 = vadd.f32 0.0, %v316
  %v318 = vpop.f32.mrf.mxu0
  %v319 = vadd.f32 0.0, %v318
  %320 = vmatmul.bf16.gmra.mxu0 %v288
  %v321 = vpop.f32.mrf.mxu0
  %v322 = vadd.f32 0.0, %v321
  %v323 = vpop.f32.mrf.mxu0
  %v324 = vadd.f32 0.0, %v323
  %325 = vmatmul.bf16.gmra.mxu0 %v289
  %v326 = vpop.f32.mrf.mxu0
  %v327 = vadd.f32 0.0, %v326
  %v328 = vpop.f32.mrf.mxu0
  %v329 = vadd.f32 0.0, %v328
  %330 = vmatmul.bf16.gmra.mxu0 %v290
  %v331 = vpop.f32.mrf.mxu0
  %v332 = vadd.f32 0.0, %v331
  %v333 = vpop.f32.mrf.mxu0
  %v334 = vadd.f32 0.0, %v333
  %335 = vmatmul.bf16.gmra.mxu0 %v291
  %v336 = vpop.f32.mrf.mxu0
  %v337 = vadd.f32 0.0, %v336
  %v338 = vpop.f32.mrf.mxu0
  %v339 = vadd.f32 0.0, %v338
  %340 = vmatmul.bf16.gmra.mxu0 %v292
  %v341 = vpop.f32.mrf.mxu0
  %v342 = vadd.f32 0.0, %v341
  %v343 = vpop.f32.mrf.mxu0
  %v344 = vadd.f32 0.0, %v343
  %345 = vmatmul.bf16.gmra.mxu0 %v293
  %v346 = vpop.f32.mrf.mxu0
  %v347 = vadd.f32 0.0, %v346
  %v348 = vpop.f32.mrf.mxu0
  %v349 = vadd.f32 0.0, %v348
  %350 = vdwg.mxu0
  %s351 = scalar_lea.vmem [#allocation2], 16
  %v352 = vld [vmem:[%s351] sm:$0xff]
  %v353 = vld [vmem:[%s351 + $0x8] sm:$0xff]
  %v354 = vpack.c.bf16 %v314, %v312
  %v355 = vpack.c.bf16 %v319, %v317
  %v356 = vpack.c.bf16 %v324, %v322
  %v357 = vpack.c.bf16 %v329, %v327
  %v358 = vpack.c.bf16 %v334, %v332
  %v359 = vpack.c.bf16 %v339, %v337
  %v360 = vpack.c.bf16 %v344, %v342
  %v361 = vpack.c.bf16 %v349, %v347
  %362 = vmatpush.bf16.msra.mxu0 %v361
  %363 = vmatpush.bf16.msra.mxu0 %v360
  %364 = vmatpush.bf16.msra.mxu0 %v359
  %365 = vmatpush.bf16.msra.mxu0 %v358
  %366 = vmatpush.bf16.msra.mxu0 %v357
  %367 = vmatpush.bf16.msra.mxu0 %v356
  %368 = vmatpush.bf16.msra.mxu0 %v355
  %369 = vmatpush.bf16.msra.mxu0 %v354
  %370 = vmatmul.bf16.gmra.mxu0 %v234
  %v371 = vpop.f32.mrf.mxu0
  %v372 = vadd.f32 0.0, %v371
  %v373 = vpop.f32.mrf.mxu0
  %v374 = vadd.f32 0.0, %v373
  %375 = vdwg.mxu0
  %v376 = vadd.f32 %v352, %v372
  %v377 = vadd.f32 %v353, %v374
  %378 = vst [vmem:[%s351] sm:$0xff] %v376
  %379 = vst [vmem:[%s351 + $0x8] sm:$0xff] %v377
  // Predicated region
  $region22: #{seegera_forward.16} parent=0 // pred_check
    %p380 = pneg %p17
  $region23: #{seegera_forward.16} parent=0 // pred_check_branch
    %382 = sbr.rel (%p380) target = $region25
  $region24: #{seegera_forward.16} parent=0 // pred_region
    %v383 = vld [vmem:[#allocation2] sm:$0xff]
    %v384 = vld [vmem:[#allocation2 + $0x8] sm:$0xff]
    %v385 = vld [vmem:[#allocation2 + $0x10] sm:$0xff]
    %v386 = vld [vmem:[#allocation2 + $0x18] sm:$0xff]
    %v387 = vld [vmem:[%s3] sm:$0x1]
    %v389 = vperm.slane %v387, 0
    %v391 = vadd.f32 %v383, %v389
    %v392 = vadd.f32 %v384, %v389
    %v393 = vadd.f32 %v385, %v389
    %v394 = vadd.f32 %v386, %v389
    %v395 = vmax.f32 %v391, 0.0
    %v396 = vmax.f32 %v392, 0.0
    %v397 = vmax.f32 %v393, 0.0
    %v398 = vmax.f32 %v394, 0.0
    %399 = vst [vmem:[%s4] sm:$0xff] %v395
    %400 = vst [vmem:[%s4 + $0x8] sm:$0xff] %v396
    %401 = vst [vmem:[%s4 + $0x10] sm:$0xff] %v397
    %402 = vst [vmem:[%s4 + $0x18] sm:$0xff] %v398
  $region25: #{seegera_forward.16} parent=0 // pred_fallthru
    _
  // Predicated region
  $region26: #{seegera_forward.16} parent=0 // pred_check
    _
  $region27: #{seegera_forward.16} parent=0 // pred_check_branch
    %404 = sbr.rel (0) target = $region29
  $region28: #{seegera_forward.16} parent=0 // pred_region
    _
  $region29: #{seegera_forward.16} parent=0 // pred_fallthru
    _
  // Predicated region
  $region30: #{seegera_forward.16} parent=0 // pred_check
    _
  $region31: #{seegera_forward.16} parent=0 // pred_check_branch
    %406 = sbr.rel (0) target = $region33
  $region32: #{seegera_forward.16} parent=0 // pred_region
    _
  $region33: #{seegera_forward.16} parent=0 // pred_fallthru
    _

// kernel: seegera_forward.17
$region0: #{seegera_forward.17}
  #allocation0 [shape = 'u32[]', space=smem, size = 0x4, offset = 0x4, fixed_abs, tag = 'smem constant byte address 0x4 - core index']
  #allocation1 [shape = 'u32[72,128]{1,0:T(1,128)}', space=vmem, size = 0x9000, scoped, tag = 'internal scratch']
  #allocation2 [shape = 'f32[2,16,128]{2,1,0:T(8,128)}', space=vmem, size = 0x4000, scoped, tag = 'scratch operand']
  %s0 = inlined_call_operand.vmem [shape: bf16[16,128], index: 0, kind: input, shape index: {}]
  %s1 = inlined_call_operand.vmem [shape: bf16[2,128,128], index: 1, kind: input, shape index: {}]
  %s2 = inlined_call_operand.vmem [shape: bf16[128,128], index: 2, kind: input, shape index: {}]
  %s3 = inlined_call_operand.vmem [shape: f32[1,128], index: 3, kind: input, shape index: {}]
  %s4 = inlined_call_operand.vmem [shape: f32[2,16,128], index: 4, kind: output, shape index: {}]
  %s5 = sld [smem:[#allocation0]]
  $region34: #{seegera_forward.17} parent=0
    _
  %s7 = ssub.s32 1, %s5
  %s8 = scalar_select 0, %s7, %s5
  // Predicated region
  $region2: #{seegera_forward.17} parent=0 // pred_check
    _
  $region3: #{seegera_forward.17} parent=0 // pred_check_branch
    %10 = sbr.rel (0) target = $region5
  $region4: #{seegera_forward.17} parent=0 // pred_region
    _
  $region5: #{seegera_forward.17} parent=0 // pred_fallthru
    _
  // Predicated region
  $region6: #{seegera_forward.17} parent=0 // pred_check
    _
  $region7: #{seegera_forward.17} parent=0 // pred_check_branch
    %12 = sbr.rel (0) target = $region9
  $region8: #{seegera_forward.17} parent=0 // pred_region
    _
  $region9: #{seegera_forward.17} parent=0 // pred_fallthru
    _
  // Predicated region
  $region10: #{seegera_forward.17} parent=0 // pred_check
    _
  $region11: #{seegera_forward.17} parent=0 // pred_check_branch
    %14 = sbr.rel (0) target = $region13
  $region12: #{seegera_forward.17} parent=0 // pred_region
    _
  $region13: #{seegera_forward.17} parent=0 // pred_fallthru
    _
  // Predicated region
  $region14: #{seegera_forward.17} parent=0 // pred_check
    _
  $region15: #{seegera_forward.17} parent=0 // pred_check_branch
    %16 = sbr.rel (0) target = $region17
  $region16: #{seegera_forward.17} parent=0 // pred_region
    _
  $region17: #{seegera_forward.17} parent=0 // pred_fallthru
    _
  %p17 = scmp.eq.s32.totalorder 0, 0
  // Predicated region
  $region18: #{seegera_forward.17} parent=0 // pred_check
    %p18 = pneg %p17
  $region19: #{seegera_forward.17} parent=0 // pred_check_branch
    %20 = sbr.rel (%p18) target = $region21
  $region20: #{seegera_forward.17} parent=0 // pred_region
    %21 = vst [vmem:[#allocation2] sm:$0xff] 0.0
    %22 = vst [vmem:[#allocation2 + $0x8] sm:$0xff] 0.0
    %23 = vst [vmem:[#allocation2 + $0x10] sm:$0xff] 0.0
    %24 = vst [vmem:[#allocation2 + $0x18] sm:$0xff] 0.0
  $region21: #{seegera_forward.17} parent=0 // pred_fallthru
    _
  %v25 = vld [vmem:[%s0] sm:$0xf]
  %v26 = vld [vmem:[%s0 + $0x4] sm:$0xf]
  %v27 = vld [vmem:[%s2] sm:$0xf]
  %v28 = vld [vmem:[%s2 + $0x4] sm:$0xf]
  %v29 = vld [vmem:[%s2 + $0x8] sm:$0xf]
  %v30 = vld [vmem:[%s2 + $0xc] sm:$0xf]
  %v31 = vld [vmem:[%s2 + $0x10] sm:$0xf]
  %v32 = vld [vmem:[%s2 + $0x14] sm:$0xf]
  %v33 = vld [vmem:[%s2 + $0x18] sm:$0xf]
  %v34 = vld [vmem:[%s2 + $0x1c] sm:$0xf]
  %v35 = vld [vmem:[%s2 + $0x20] sm:$0xf]
  %v36 = vld [vmem:[%s2 + $0x24] sm:$0xf]
  %v37 = vld [vmem:[%s2 + $0x28] sm:$0xf]
  %v38 = vld [vmem:[%s2 + $0x2c] sm:$0xf]
  %v39 = vld [vmem:[%s2 + $0x30] sm:$0xf]
  %v40 = vld [vmem:[%s2 + $0x34] sm:$0xf]
  %v41 = vld [vmem:[%s2 + $0x38] sm:$0xf]
  %v42 = vld [vmem:[%s2 + $0x3c] sm:$0xf]
  %v43 = vld [vmem:[%s1] sm:$0xf]
  %v44 = vld [vmem:[%s1 + $0x4] sm:$0xf]
  %v45 = vld [vmem:[%s1 + $0x8] sm:$0xf]
  %v46 = vld [vmem:[%s1 + $0xc] sm:$0xf]
  %v47 = vld [vmem:[%s1 + $0x10] sm:$0xf]
  %v48 = vld [vmem:[%s1 + $0x14] sm:$0xf]
  %v49 = vld [vmem:[%s1 + $0x18] sm:$0xf]
  %v50 = vld [vmem:[%s1 + $0x1c] sm:$0xf]
  %v51 = vld [vmem:[%s1 + $0x20] sm:$0xf]
  %v52 = vld [vmem:[%s1 + $0x24] sm:$0xf]
  %v53 = vld [vmem:[%s1 + $0x28] sm:$0xf]
  %v54 = vld [vmem:[%s1 + $0x2c] sm:$0xf]
  %v55 = vld [vmem:[%s1 + $0x30] sm:$0xf]
  %v56 = vld [vmem:[%s1 + $0x34] sm:$0xf]
  %v57 = vld [vmem:[%s1 + $0x38] sm:$0xf]
  %v58 = vld [vmem:[%s1 + $0x3c] sm:$0xf]
  %v59 = vld [vmem:[%s1 + $0x40] sm:$0xf]
  %v60 = vld [vmem:[%s1 + $0x44] sm:$0xf]
  %v61 = vld [vmem:[%s1 + $0x48] sm:$0xf]
  %v62 = vld [vmem:[%s1 + $0x4c] sm:$0xf]
  %v63 = vld [vmem:[%s1 + $0x50] sm:$0xf]
  %v64 = vld [vmem:[%s1 + $0x54] sm:$0xf]
  %v65 = vld [vmem:[%s1 + $0x58] sm:$0xf]
  %v66 = vld [vmem:[%s1 + $0x5c] sm:$0xf]
  %v67 = vld [vmem:[%s1 + $0x60] sm:$0xf]
  %v68 = vld [vmem:[%s1 + $0x64] sm:$0xf]
  %v69 = vld [vmem:[%s1 + $0x68] sm:$0xf]
  %v70 = vld [vmem:[%s1 + $0x6c] sm:$0xf]
  %v71 = vld [vmem:[%s1 + $0x70] sm:$0xf]
  %v72 = vld [vmem:[%s1 + $0x74] sm:$0xf]
  %v73 = vld [vmem:[%s1 + $0x78] sm:$0xf]
  %v74 = vld [vmem:[%s1 + $0x7c] sm:$0xf]
  %v91 = vunpack.c.l.b16 %v43
  %v92 = vunpack.c.l.b16 %v44
  %v93 = vunpack.c.l.b16 %v45
  %v94 = vunpack.c.l.b16 %v46
  %v95 = vunpack.c.l.b16 %v47
  %v96 = vunpack.c.l.b16 %v48
  %v97 = vunpack.c.l.b16 %v49
  %v98 = vunpack.c.l.b16 %v50
  %v99 = vunpack.c.l.b16 %v51
  %v100 = vunpack.c.l.b16 %v52
  %v101 = vunpack.c.l.b16 %v53
  %v102 = vunpack.c.l.b16 %v54
  %v103 = vunpack.c.l.b16 %v55
  %v104 = vunpack.c.l.b16 %v56
  %v105 = vunpack.c.l.b16 %v57
  %v106 = vunpack.c.l.b16 %v58
  %v107 = vpack.c.b16 %v92, %v91
  %v108 = vpack.c.b16 %v94, %v93
  %v109 = vpack.c.b16 %v96, %v95
  %v110 = vpack.c.b16 %v98, %v97
  %v111 = vpack.c.b16 %v100, %v99
  %v112 = vpack.c.b16 %v102, %v101
  %v113 = vpack.c.b16 %v104, %v103
  %v114 = vpack.c.b16 %v106, %v105
  %v139 = vunpack.c.l.b16 %v27
  %v140 = vunpack.c.l.b16 %v28
  %v141 = vunpack.c.l.b16 %v29
  %v142 = vunpack.c.l.b16 %v30
  %v143 = vunpack.c.l.b16 %v31
  %v144 = vunpack.c.l.b16 %v32
  %v145 = vunpack.c.l.b16 %v33
  %v146 = vunpack.c.l.b16 %v34
  %v147 = vunpack.c.l.b16 %v35
  %v148 = vunpack.c.l.b16 %v36
  %v149 = vunpack.c.l.b16 %v37
  %v150 = vunpack.c.l.b16 %v38
  %v151 = vunpack.c.l.b16 %v39
  %v152 = vunpack.c.l.b16 %v40
  %v153 = vunpack.c.l.b16 %v41
  %v154 = vunpack.c.l.b16 %v42
  %v155 = vpack.c.b16 %v140, %v139
  %v156 = vpack.c.b16 %v142, %v141
  %v157 = vpack.c.b16 %v144, %v143
  %v158 = vpack.c.b16 %v146, %v145
  %v159 = vpack.c.b16 %v148, %v147
  %v160 = vpack.c.b16 %v150, %v149
  %v161 = vpack.c.b16 %v152, %v151
  %v162 = vpack.c.b16 %v154, %v153
  %171 = vmatpush.bf16.msra.mxu0 %v162
  %172 = vmatpush.bf16.msra.mxu0 %v161
  %173 = vmatpush.bf16.msra.mxu0 %v160
  %174 = vmatpush.bf16.msra.mxu0 %v159
  %175 = vmatpush.bf16.msra.mxu0 %v158
  %176 = vmatpush.bf16.msra.mxu0 %v157
  %177 = vmatpush.bf16.msra.mxu0 %v156
  %178 = vmatpush.bf16.msra.mxu0 %v155
  %179 = vmatmul.bf16.gmra.mxu0 %v107
  %v180 = vpop.f32.mrf.mxu0
  %v181 = vadd.f32 0.0, %v180
  %v182 = vpop.f32.mrf.mxu0
  %v183 = vadd.f32 0.0, %v182
  %184 = vmatmul.bf16.gmra.mxu0 %v108
  %v185 = vpop.f32.mrf.mxu0
  %v186 = vadd.f32 0.0, %v185
  %v187 = vpop.f32.mrf.mxu0
  %v188 = vadd.f32 0.0, %v187
  %189 = vmatmul.bf16.gmra.mxu0 %v109
  %v190 = vpop.f32.mrf.mxu0
  %v191 = vadd.f32 0.0, %v190
  %v192 = vpop.f32.mrf.mxu0
  %v193 = vadd.f32 0.0, %v192
  %194 = vmatmul.bf16.gmra.mxu0 %v110
  %v195 = vpop.f32.mrf.mxu0
  %v196 = vadd.f32 0.0, %v195
  %v197 = vpop.f32.mrf.mxu0
  %v198 = vadd.f32 0.0, %v197
  %199 = vmatmul.bf16.gmra.mxu0 %v111
  %v200 = vpop.f32.mrf.mxu0
  %v201 = vadd.f32 0.0, %v200
  %v202 = vpop.f32.mrf.mxu0
  %v203 = vadd.f32 0.0, %v202
  %204 = vmatmul.bf16.gmra.mxu0 %v112
  %v205 = vpop.f32.mrf.mxu0
  %v206 = vadd.f32 0.0, %v205
  %v207 = vpop.f32.mrf.mxu0
  %v208 = vadd.f32 0.0, %v207
  %209 = vmatmul.bf16.gmra.mxu0 %v113
  %v210 = vpop.f32.mrf.mxu0
  %v211 = vadd.f32 0.0, %v210
  %v212 = vpop.f32.mrf.mxu0
  %v213 = vadd.f32 0.0, %v212
  %214 = vmatmul.bf16.gmra.mxu0 %v114
  %v215 = vpop.f32.mrf.mxu0
  %v216 = vadd.f32 0.0, %v215
  %v217 = vpop.f32.mrf.mxu0
  %v218 = vadd.f32 0.0, %v217
  %219 = vdwg.mxu0
  %v220 = vld [vmem:[#allocation2] sm:$0xff]
  %v221 = vld [vmem:[#allocation2 + $0x8] sm:$0xff]
  %v222 = vpack.c.bf16 %v183, %v181
  %v223 = vpack.c.bf16 %v188, %v186
  %v224 = vpack.c.bf16 %v193, %v191
  %v225 = vpack.c.bf16 %v198, %v196
  %v226 = vpack.c.bf16 %v203, %v201
  %v227 = vpack.c.bf16 %v208, %v206
  %v228 = vpack.c.bf16 %v213, %v211
  %v229 = vpack.c.bf16 %v218, %v216
  %v232 = vunpack.c.l.b16 %v25
  %v233 = vunpack.c.l.b16 %v26
  %v234 = vpack.c.b16 %v233, %v232
  %236 = vmatpush.bf16.msra.mxu0 %v229
  %237 = vmatpush.bf16.msra.mxu0 %v228
  %238 = vmatpush.bf16.msra.mxu0 %v227
  %239 = vmatpush.bf16.msra.mxu0 %v226
  %240 = vmatpush.bf16.msra.mxu0 %v225
  %241 = vmatpush.bf16.msra.mxu0 %v224
  %242 = vmatpush.bf16.msra.mxu0 %v223
  %243 = vmatpush.bf16.msra.mxu0 %v222
  %244 = vmatmul.bf16.gmra.mxu0 %v234
  %v245 = vpop.f32.mrf.mxu0
  %v246 = vadd.f32 0.0, %v245
  %v247 = vpop.f32.mrf.mxu0
  %v248 = vadd.f32 0.0, %v247
  %249 = vdwg.mxu0
  %v250 = vadd.f32 %v220, %v246
  %v251 = vadd.f32 %v221, %v248
  %252 = vst [vmem:[#allocation2] sm:$0xff] %v250
  %253 = vst [vmem:[#allocation2 + $0x8] sm:$0xff] %v251
  %v270 = vunpack.c.l.b16 %v59
  %v271 = vunpack.c.l.b16 %v60
  %v272 = vunpack.c.l.b16 %v61
  %v273 = vunpack.c.l.b16 %v62
  %v274 = vunpack.c.l.b16 %v63
  %v275 = vunpack.c.l.b16 %v64
  %v276 = vunpack.c.l.b16 %v65
  %v277 = vunpack.c.l.b16 %v66
  %v278 = vunpack.c.l.b16 %v67
  %v279 = vunpack.c.l.b16 %v68
  %v280 = vunpack.c.l.b16 %v69
  %v281 = vunpack.c.l.b16 %v70
  %v282 = vunpack.c.l.b16 %v71
  %v283 = vunpack.c.l.b16 %v72
  %v284 = vunpack.c.l.b16 %v73
  %v285 = vunpack.c.l.b16 %v74
  %v286 = vpack.c.b16 %v271, %v270
  %v287 = vpack.c.b16 %v273, %v272
  %v288 = vpack.c.b16 %v275, %v274
  %v289 = vpack.c.b16 %v277, %v276
  %v290 = vpack.c.b16 %v279, %v278
  %v291 = vpack.c.b16 %v281, %v280
  %v292 = vpack.c.b16 %v283, %v282
  %v293 = vpack.c.b16 %v285, %v284
  %302 = vmatpush.bf16.msra.mxu0 %v162
  %303 = vmatpush.bf16.msra.mxu0 %v161
  %304 = vmatpush.bf16.msra.mxu0 %v160
  %305 = vmatpush.bf16.msra.mxu0 %v159
  %306 = vmatpush.bf16.msra.mxu0 %v158
  %307 = vmatpush.bf16.msra.mxu0 %v157
  %308 = vmatpush.bf16.msra.mxu0 %v156
  %309 = vmatpush.bf16.msra.mxu0 %v155
  %310 = vmatmul.bf16.gmra.mxu0 %v286
  %v311 = vpop.f32.mrf.mxu0
  %v312 = vadd.f32 0.0, %v311
  %v313 = vpop.f32.mrf.mxu0
  %v314 = vadd.f32 0.0, %v313
  %315 = vmatmul.bf16.gmra.mxu0 %v287
  %v316 = vpop.f32.mrf.mxu0
  %v317 = vadd.f32 0.0, %v316
  %v318 = vpop.f32.mrf.mxu0
  %v319 = vadd.f32 0.0, %v318
  %320 = vmatmul.bf16.gmra.mxu0 %v288
  %v321 = vpop.f32.mrf.mxu0
  %v322 = vadd.f32 0.0, %v321
  %v323 = vpop.f32.mrf.mxu0
  %v324 = vadd.f32 0.0, %v323
  %325 = vmatmul.bf16.gmra.mxu0 %v289
  %v326 = vpop.f32.mrf.mxu0
  %v327 = vadd.f32 0.0, %v326
  %v328 = vpop.f32.mrf.mxu0
  %v329 = vadd.f32 0.0, %v328
  %330 = vmatmul.bf16.gmra.mxu0 %v290
  %v331 = vpop.f32.mrf.mxu0
  %v332 = vadd.f32 0.0, %v331
  %v333 = vpop.f32.mrf.mxu0
  %v334 = vadd.f32 0.0, %v333
  %335 = vmatmul.bf16.gmra.mxu0 %v291
  %v336 = vpop.f32.mrf.mxu0
  %v337 = vadd.f32 0.0, %v336
  %v338 = vpop.f32.mrf.mxu0
  %v339 = vadd.f32 0.0, %v338
  %340 = vmatmul.bf16.gmra.mxu0 %v292
  %v341 = vpop.f32.mrf.mxu0
  %v342 = vadd.f32 0.0, %v341
  %v343 = vpop.f32.mrf.mxu0
  %v344 = vadd.f32 0.0, %v343
  %345 = vmatmul.bf16.gmra.mxu0 %v293
  %v346 = vpop.f32.mrf.mxu0
  %v347 = vadd.f32 0.0, %v346
  %v348 = vpop.f32.mrf.mxu0
  %v349 = vadd.f32 0.0, %v348
  %350 = vdwg.mxu0
  %s351 = scalar_lea.vmem [#allocation2], 16
  %v352 = vld [vmem:[%s351] sm:$0xff]
  %v353 = vld [vmem:[%s351 + $0x8] sm:$0xff]
  %v354 = vpack.c.bf16 %v314, %v312
  %v355 = vpack.c.bf16 %v319, %v317
  %v356 = vpack.c.bf16 %v324, %v322
  %v357 = vpack.c.bf16 %v329, %v327
  %v358 = vpack.c.bf16 %v334, %v332
  %v359 = vpack.c.bf16 %v339, %v337
  %v360 = vpack.c.bf16 %v344, %v342
  %v361 = vpack.c.bf16 %v349, %v347
  %362 = vmatpush.bf16.msra.mxu0 %v361
  %363 = vmatpush.bf16.msra.mxu0 %v360
  %364 = vmatpush.bf16.msra.mxu0 %v359
  %365 = vmatpush.bf16.msra.mxu0 %v358
  %366 = vmatpush.bf16.msra.mxu0 %v357
  %367 = vmatpush.bf16.msra.mxu0 %v356
  %368 = vmatpush.bf16.msra.mxu0 %v355
  %369 = vmatpush.bf16.msra.mxu0 %v354
  %370 = vmatmul.bf16.gmra.mxu0 %v234
  %v371 = vpop.f32.mrf.mxu0
  %v372 = vadd.f32 0.0, %v371
  %v373 = vpop.f32.mrf.mxu0
  %v374 = vadd.f32 0.0, %v373
  %375 = vdwg.mxu0
  %v376 = vadd.f32 %v352, %v372
  %v377 = vadd.f32 %v353, %v374
  %378 = vst [vmem:[%s351] sm:$0xff] %v376
  %379 = vst [vmem:[%s351 + $0x8] sm:$0xff] %v377
  // Predicated region
  $region22: #{seegera_forward.17} parent=0 // pred_check
    %p380 = pneg %p17
  $region23: #{seegera_forward.17} parent=0 // pred_check_branch
    %382 = sbr.rel (%p380) target = $region25
  $region24: #{seegera_forward.17} parent=0 // pred_region
    %v383 = vld [vmem:[#allocation2] sm:$0xff]
    %v384 = vld [vmem:[#allocation2 + $0x8] sm:$0xff]
    %v385 = vld [vmem:[#allocation2 + $0x10] sm:$0xff]
    %v386 = vld [vmem:[#allocation2 + $0x18] sm:$0xff]
    %v387 = vld [vmem:[%s3] sm:$0x1]
    %v389 = vperm.slane %v387, 0
    %v391 = vadd.f32 %v383, %v389
    %v392 = vadd.f32 %v384, %v389
    %v393 = vadd.f32 %v385, %v389
    %v394 = vadd.f32 %v386, %v389
    %395 = vst [vmem:[%s4] sm:$0xff] %v391
    %396 = vst [vmem:[%s4 + $0x8] sm:$0xff] %v392
    %397 = vst [vmem:[%s4 + $0x10] sm:$0xff] %v393
    %398 = vst [vmem:[%s4 + $0x18] sm:$0xff] %v394
  $region25: #{seegera_forward.17} parent=0 // pred_fallthru
    _
  // Predicated region
  $region26: #{seegera_forward.17} parent=0 // pred_check
    _
  $region27: #{seegera_forward.17} parent=0 // pred_check_branch
    %400 = sbr.rel (0) target = $region29
  $region28: #{seegera_forward.17} parent=0 // pred_region
    _
  $region29: #{seegera_forward.17} parent=0 // pred_fallthru
    _
  // Predicated region
  $region30: #{seegera_forward.17} parent=0 // pred_check
    _
  $region31: #{seegera_forward.17} parent=0 // pred_check_branch
    %402 = sbr.rel (0) target = $region33
  $region32: #{seegera_forward.17} parent=0 // pred_region
    _
  $region33: #{seegera_forward.17} parent=0 // pred_fallthru
    _

// kernel: seegera_forward.18
$region0: #{seegera_forward.18}
  #allocation0 [shape = 'u32[]', space=smem, size = 0x4, offset = 0x4, fixed_abs, tag = 'smem constant byte address 0x4 - core index']
  #allocation1 [shape = 'u32[72,128]{1,0:T(1,128)}', space=vmem, size = 0x9000, scoped, tag = 'internal scratch']
  #allocation2 [shape = 'f32[1,16,128]{2,1,0:T(8,128)}', space=vmem, size = 0x2000, scoped, tag = 'scratch operand']
  %s0 = inlined_call_operand.vmem [shape: bf16[16,128], index: 0, kind: input, shape index: {}]
  %s1 = inlined_call_operand.vmem [shape: bf16[1,128,128], index: 1, kind: input, shape index: {}]
  %s2 = inlined_call_operand.vmem [shape: bf16[128,128], index: 2, kind: input, shape index: {}]
  %s3 = inlined_call_operand.vmem [shape: f32[1,128], index: 3, kind: input, shape index: {}]
  %s4 = inlined_call_operand.vmem [shape: f32[1,16,128], index: 4, kind: output, shape index: {}]
  %s5 = sld [smem:[#allocation0]]
  $region34: #{seegera_forward.18} parent=0
    _
  %s7 = ssub.s32 1, %s5
  %s8 = scalar_select 0, %s7, %s5
  // Predicated region
  $region2: #{seegera_forward.18} parent=0 // pred_check
    _
  $region3: #{seegera_forward.18} parent=0 // pred_check_branch
    %10 = sbr.rel (0) target = $region5
  $region4: #{seegera_forward.18} parent=0 // pred_region
    _
  $region5: #{seegera_forward.18} parent=0 // pred_fallthru
    _
  // Predicated region
  $region6: #{seegera_forward.18} parent=0 // pred_check
    _
  $region7: #{seegera_forward.18} parent=0 // pred_check_branch
    %12 = sbr.rel (0) target = $region9
  $region8: #{seegera_forward.18} parent=0 // pred_region
    _
  $region9: #{seegera_forward.18} parent=0 // pred_fallthru
    _
  // Predicated region
  $region10: #{seegera_forward.18} parent=0 // pred_check
    _
  $region11: #{seegera_forward.18} parent=0 // pred_check_branch
    %14 = sbr.rel (0) target = $region13
  $region12: #{seegera_forward.18} parent=0 // pred_region
    _
  $region13: #{seegera_forward.18} parent=0 // pred_fallthru
    _
  // Predicated region
  $region14: #{seegera_forward.18} parent=0 // pred_check
    _
  $region15: #{seegera_forward.18} parent=0 // pred_check_branch
    %16 = sbr.rel (0) target = $region17
  $region16: #{seegera_forward.18} parent=0 // pred_region
    _
  $region17: #{seegera_forward.18} parent=0 // pred_fallthru
    _
  %p17 = scmp.eq.s32.totalorder 0, 0
  // Predicated region
  $region18: #{seegera_forward.18} parent=0 // pred_check
    %p18 = pneg %p17
  $region19: #{seegera_forward.18} parent=0 // pred_check_branch
    %20 = sbr.rel (%p18) target = $region21
  $region20: #{seegera_forward.18} parent=0 // pred_region
    %21 = vst [vmem:[#allocation2] sm:$0xff] 0.0
    %22 = vst [vmem:[#allocation2 + $0x8] sm:$0xff] 0.0
  $region21: #{seegera_forward.18} parent=0 // pred_fallthru
    _
  %v23 = vld [vmem:[%s0] sm:$0xf]
  %v24 = vld [vmem:[%s0 + $0x4] sm:$0xf]
  %v25 = vld [vmem:[%s2] sm:$0xf]
  %v26 = vld [vmem:[%s2 + $0x4] sm:$0xf]
  %v27 = vld [vmem:[%s2 + $0x8] sm:$0xf]
  %v28 = vld [vmem:[%s2 + $0xc] sm:$0xf]
  %v29 = vld [vmem:[%s2 + $0x10] sm:$0xf]
  %v30 = vld [vmem:[%s2 + $0x14] sm:$0xf]
  %v31 = vld [vmem:[%s2 + $0x18] sm:$0xf]
  %v32 = vld [vmem:[%s2 + $0x1c] sm:$0xf]
  %v33 = vld [vmem:[%s2 + $0x20] sm:$0xf]
  %v34 = vld [vmem:[%s2 + $0x24] sm:$0xf]
  %v35 = vld [vmem:[%s2 + $0x28] sm:$0xf]
  %v36 = vld [vmem:[%s2 + $0x2c] sm:$0xf]
  %v37 = vld [vmem:[%s2 + $0x30] sm:$0xf]
  %v38 = vld [vmem:[%s2 + $0x34] sm:$0xf]
  %v39 = vld [vmem:[%s2 + $0x38] sm:$0xf]
  %v40 = vld [vmem:[%s2 + $0x3c] sm:$0xf]
  %v41 = vld [vmem:[%s1] sm:$0xf]
  %v42 = vld [vmem:[%s1 + $0x4] sm:$0xf]
  %v43 = vld [vmem:[%s1 + $0x8] sm:$0xf]
  %v44 = vld [vmem:[%s1 + $0xc] sm:$0xf]
  %v45 = vld [vmem:[%s1 + $0x10] sm:$0xf]
  %v46 = vld [vmem:[%s1 + $0x14] sm:$0xf]
  %v47 = vld [vmem:[%s1 + $0x18] sm:$0xf]
  %v48 = vld [vmem:[%s1 + $0x1c] sm:$0xf]
  %v49 = vld [vmem:[%s1 + $0x20] sm:$0xf]
  %v50 = vld [vmem:[%s1 + $0x24] sm:$0xf]
  %v51 = vld [vmem:[%s1 + $0x28] sm:$0xf]
  %v52 = vld [vmem:[%s1 + $0x2c] sm:$0xf]
  %v53 = vld [vmem:[%s1 + $0x30] sm:$0xf]
  %v54 = vld [vmem:[%s1 + $0x34] sm:$0xf]
  %v55 = vld [vmem:[%s1 + $0x38] sm:$0xf]
  %v56 = vld [vmem:[%s1 + $0x3c] sm:$0xf]
  %v73 = vunpack.c.l.b16 %v41
  %v74 = vunpack.c.l.b16 %v42
  %v75 = vunpack.c.l.b16 %v43
  %v76 = vunpack.c.l.b16 %v44
  %v77 = vunpack.c.l.b16 %v45
  %v78 = vunpack.c.l.b16 %v46
  %v79 = vunpack.c.l.b16 %v47
  %v80 = vunpack.c.l.b16 %v48
  %v81 = vunpack.c.l.b16 %v49
  %v82 = vunpack.c.l.b16 %v50
  %v83 = vunpack.c.l.b16 %v51
  %v84 = vunpack.c.l.b16 %v52
  %v85 = vunpack.c.l.b16 %v53
  %v86 = vunpack.c.l.b16 %v54
  %v87 = vunpack.c.l.b16 %v55
  %v88 = vunpack.c.l.b16 %v56
  %v89 = vpack.c.b16 %v74, %v73
  %v90 = vpack.c.b16 %v76, %v75
  %v91 = vpack.c.b16 %v78, %v77
  %v92 = vpack.c.b16 %v80, %v79
  %v93 = vpack.c.b16 %v82, %v81
  %v94 = vpack.c.b16 %v84, %v83
  %v95 = vpack.c.b16 %v86, %v85
  %v96 = vpack.c.b16 %v88, %v87
  %v121 = vunpack.c.l.b16 %v25
  %v122 = vunpack.c.l.b16 %v26
  %v123 = vunpack.c.l.b16 %v27
  %v124 = vunpack.c.l.b16 %v28
  %v125 = vunpack.c.l.b16 %v29
  %v126 = vunpack.c.l.b16 %v30
  %v127 = vunpack.c.l.b16 %v31
  %v128 = vunpack.c.l.b16 %v32
  %v129 = vunpack.c.l.b16 %v33
  %v130 = vunpack.c.l.b16 %v34
  %v131 = vunpack.c.l.b16 %v35
  %v132 = vunpack.c.l.b16 %v36
  %v133 = vunpack.c.l.b16 %v37
  %v134 = vunpack.c.l.b16 %v38
  %v135 = vunpack.c.l.b16 %v39
  %v136 = vunpack.c.l.b16 %v40
  %v137 = vpack.c.b16 %v122, %v121
  %v138 = vpack.c.b16 %v124, %v123
  %v139 = vpack.c.b16 %v126, %v125
  %v140 = vpack.c.b16 %v128, %v127
  %v141 = vpack.c.b16 %v130, %v129
  %v142 = vpack.c.b16 %v132, %v131
  %v143 = vpack.c.b16 %v134, %v133
  %v144 = vpack.c.b16 %v136, %v135
  %153 = vmatpush.bf16.msra.mxu0 %v144
  %154 = vmatpush.bf16.msra.mxu0 %v143
  %155 = vmatpush.bf16.msra.mxu0 %v142
  %156 = vmatpush.bf16.msra.mxu0 %v141
  %157 = vmatpush.bf16.msra.mxu0 %v140
  %158 = vmatpush.bf16.msra.mxu0 %v139
  %159 = vmatpush.bf16.msra.mxu0 %v138
  %160 = vmatpush.bf16.msra.mxu0 %v137
  %161 = vmatmul.bf16.gmra.mxu0 %v89
  %v162 = vpop.f32.mrf.mxu0
  %v163 = vadd.f32 0.0, %v162
  %v164 = vpop.f32.mrf.mxu0
  %v165 = vadd.f32 0.0, %v164
  %166 = vmatmul.bf16.gmra.mxu0 %v90
  %v167 = vpop.f32.mrf.mxu0
  %v168 = vadd.f32 0.0, %v167
  %v169 = vpop.f32.mrf.mxu0
  %v170 = vadd.f32 0.0, %v169
  %171 = vmatmul.bf16.gmra.mxu0 %v91
  %v172 = vpop.f32.mrf.mxu0
  %v173 = vadd.f32 0.0, %v172
  %v174 = vpop.f32.mrf.mxu0
  %v175 = vadd.f32 0.0, %v174
  %176 = vmatmul.bf16.gmra.mxu0 %v92
  %v177 = vpop.f32.mrf.mxu0
  %v178 = vadd.f32 0.0, %v177
  %v179 = vpop.f32.mrf.mxu0
  %v180 = vadd.f32 0.0, %v179
  %181 = vmatmul.bf16.gmra.mxu0 %v93
  %v182 = vpop.f32.mrf.mxu0
  %v183 = vadd.f32 0.0, %v182
  %v184 = vpop.f32.mrf.mxu0
  %v185 = vadd.f32 0.0, %v184
  %186 = vmatmul.bf16.gmra.mxu0 %v94
  %v187 = vpop.f32.mrf.mxu0
  %v188 = vadd.f32 0.0, %v187
  %v189 = vpop.f32.mrf.mxu0
  %v190 = vadd.f32 0.0, %v189
  %191 = vmatmul.bf16.gmra.mxu0 %v95
  %v192 = vpop.f32.mrf.mxu0
  %v193 = vadd.f32 0.0, %v192
  %v194 = vpop.f32.mrf.mxu0
  %v195 = vadd.f32 0.0, %v194
  %196 = vmatmul.bf16.gmra.mxu0 %v96
  %v197 = vpop.f32.mrf.mxu0
  %v198 = vadd.f32 0.0, %v197
  %v199 = vpop.f32.mrf.mxu0
  %v200 = vadd.f32 0.0, %v199
  %201 = vdwg.mxu0
  %v202 = vld [vmem:[#allocation2] sm:$0xff]
  %v203 = vld [vmem:[#allocation2 + $0x8] sm:$0xff]
  %v204 = vpack.c.bf16 %v165, %v163
  %v205 = vpack.c.bf16 %v170, %v168
  %v206 = vpack.c.bf16 %v175, %v173
  %v207 = vpack.c.bf16 %v180, %v178
  %v208 = vpack.c.bf16 %v185, %v183
  %v209 = vpack.c.bf16 %v190, %v188
  %v210 = vpack.c.bf16 %v195, %v193
  %v211 = vpack.c.bf16 %v200, %v198
  %v214 = vunpack.c.l.b16 %v23
  %v215 = vunpack.c.l.b16 %v24
  %v216 = vpack.c.b16 %v215, %v214
  %218 = vmatpush.bf16.msra.mxu0 %v211
  %219 = vmatpush.bf16.msra.mxu0 %v210
  %220 = vmatpush.bf16.msra.mxu0 %v209
  %221 = vmatpush.bf16.msra.mxu0 %v208
  %222 = vmatpush.bf16.msra.mxu0 %v207
  %223 = vmatpush.bf16.msra.mxu0 %v206
  %224 = vmatpush.bf16.msra.mxu0 %v205
  %225 = vmatpush.bf16.msra.mxu0 %v204
  %226 = vmatmul.bf16.gmra.mxu0 %v216
  %v227 = vpop.f32.mrf.mxu0
  %v228 = vadd.f32 0.0, %v227
  %v229 = vpop.f32.mrf.mxu0
  %v230 = vadd.f32 0.0, %v229
  %231 = vdwg.mxu0
  %v232 = vadd.f32 %v202, %v228
  %v233 = vadd.f32 %v203, %v230
  %234 = vst [vmem:[#allocation2] sm:$0xff] %v232
  %235 = vst [vmem:[#allocation2 + $0x8] sm:$0xff] %v233
  // Predicated region
  $region22: #{seegera_forward.18} parent=0 // pred_check
    %p236 = pneg %p17
  $region23: #{seegera_forward.18} parent=0 // pred_check_branch
    %238 = sbr.rel (%p236) target = $region25
  $region24: #{seegera_forward.18} parent=0 // pred_region
    %v239 = vld [vmem:[#allocation2] sm:$0xff]
    %v240 = vld [vmem:[#allocation2 + $0x8] sm:$0xff]
    %v241 = vld [vmem:[%s3] sm:$0x1]
    %v243 = vperm.slane %v241, 0
    %v245 = vadd.f32 %v239, %v243
    %v246 = vadd.f32 %v240, %v243
    %v247 = vmax.f32 %v245, 0.0
    %v248 = vmax.f32 %v246, 0.0
    %249 = vst [vmem:[%s4] sm:$0xff] %v247
    %250 = vst [vmem:[%s4 + $0x8] sm:$0xff] %v248
  $region25: #{seegera_forward.18} parent=0 // pred_fallthru
    _
  // Predicated region
  $region26: #{seegera_forward.18} parent=0 // pred_check
    _
  $region27: #{seegera_forward.18} parent=0 // pred_check_branch
    %252 = sbr.rel (0) target = $region29
  $region28: #{seegera_forward.18} parent=0 // pred_region
    _
  $region29: #{seegera_forward.18} parent=0 // pred_fallthru
    _
  // Predicated region
  $region30: #{seegera_forward.18} parent=0 // pred_check
    _
  $region31: #{seegera_forward.18} parent=0 // pred_check_branch
    %254 = sbr.rel (0) target = $region33
  $region32: #{seegera_forward.18} parent=0 // pred_region
    _
  $region33: #{seegera_forward.18} parent=0 // pred_fallthru
    _

// kernel: seegera_forward.20
$region0: #{seegera_forward.20}
  #allocation0 [shape = 'u32[]', space=smem, size = 0x4, offset = 0x4, fixed_abs, tag = 'smem constant byte address 0x4 - core index']
  #allocation1 [shape = 'u32[72,128]{1,0:T(1,128)}', space=vmem, size = 0x9000, scoped, tag = 'internal scratch']
  %s0 = inlined_call_operand.vmem [shape: f32[16,16], index: 0, kind: input, shape index: {}]
  %s1 = inlined_call_operand.vmem [shape: f32[16,16], index: 1, kind: input, shape index: {}]
  %s2 = inlined_call_operand.vmem [shape: f32[16,16], index: 2, kind: input, shape index: {}]
  %s3 = inlined_call_operand.vmem [shape: f32[16,16], index: 3, kind: output, shape index: {0}]
  %s4 = inlined_call_operand.vmem [shape: f32[16,16], index: 4, kind: output, shape index: {1}]
  %5 = xla_tuple %s3, %s4
  %s6 = sld [smem:[#allocation0]]
  $region30: #{seegera_forward.20} parent=0
    _
  %s8 = ssub.s32 1, %s6
  %s9 = scalar_select 0, %s8, %s6
  // Predicated region
  $region2: #{seegera_forward.20} parent=0 // pred_check
    _
  $region3: #{seegera_forward.20} parent=0 // pred_check_branch
    %11 = sbr.rel (0) target = $region5
  $region4: #{seegera_forward.20} parent=0 // pred_region
    _
  $region5: #{seegera_forward.20} parent=0 // pred_fallthru
    _
  // Predicated region
  $region6: #{seegera_forward.20} parent=0 // pred_check
    _
  $region7: #{seegera_forward.20} parent=0 // pred_check_branch
    %13 = sbr.rel (0) target = $region9
  $region8: #{seegera_forward.20} parent=0 // pred_region
    _
  $region9: #{seegera_forward.20} parent=0 // pred_fallthru
    _
  // Predicated region
  $region10: #{seegera_forward.20} parent=0 // pred_check
    _
  $region11: #{seegera_forward.20} parent=0 // pred_check_branch
    %15 = sbr.rel (0) target = $region13
  $region12: #{seegera_forward.20} parent=0 // pred_region
    _
  $region13: #{seegera_forward.20} parent=0 // pred_fallthru
    _
  %v16 = vld [vmem:[%s0] sm:$0xff]
  %v17 = vld [vmem:[%s0 + $0x8] sm:$0xff]
  %v18 = vmul.f32 %v16, 0.5
  %v19 = vmul.f32 %v17, 0.5
  %v20 = vmul.f32 %v18, 1.442695
  %v21 = vpow.pop %v20
  %v22 = vmul.f32 %v19, 1.442695
  %v23 = vpow.pop %v22
  %vm24 = vcmask 130048
  %25 = vst.msk [vmem:[%s3] sm:$0xff] %vm24, %v21
  %26 = vst.msk [vmem:[%s3 + $0x8] sm:$0xff] %vm24, %v23
  %v27 = vld [vmem:[%s1] sm:$0xff]
  %v28 = vld [vmem:[%s1 + $0x8] sm:$0xff]
  %v29 = vld [vmem:[%s2] sm:$0xff]
  %v30 = vld [vmem:[%s2 + $0x8] sm:$0xff]
  %v31 = vmul.f32 %v21, %v29
  %v32 = vmul.f32 %v23, %v30
  %v33 = vadd.f32 %v27, %v31
  %v34 = vadd.f32 %v28, %v32
  %35 = vst.msk [vmem:[%s4] sm:$0xff] %vm24, %v33
  %36 = vst.msk [vmem:[%s4 + $0x8] sm:$0xff] %vm24, %v34
  // Predicated region
  $region14: #{seegera_forward.20} parent=0 // pred_check
    _
  $region15: #{seegera_forward.20} parent=0 // pred_check_branch
    %38 = sbr.rel (0) target = $region17
  $region16: #{seegera_forward.20} parent=0 // pred_region
    _
  $region17: #{seegera_forward.20} parent=0 // pred_fallthru
    _
  // Predicated region
  $region18: #{seegera_forward.20} parent=0 // pred_check
    _
  $region19: #{seegera_forward.20} parent=0 // pred_check_branch
    %40 = sbr.rel (0) target = $region21
  $region20: #{seegera_forward.20} parent=0 // pred_region
    _
  $region21: #{seegera_forward.20} parent=0 // pred_fallthru
    _
  // Predicated region
  $region22: #{seegera_forward.20} parent=0 // pred_check
    _
  $region23: #{seegera_forward.20} parent=0 // pred_check_branch
    %42 = sbr.rel (0) target = $region25
  $region24: #{seegera_forward.20} parent=0 // pred_region
    _
  $region25: #{seegera_forward.20} parent=0 // pred_fallthru
    _
  // Predicated region
  $region26: #{seegera_forward.20} parent=0 // pred_check
    _
  $region27: #{seegera_forward.20} parent=0 // pred_check_branch
    %44 = sbr.rel (0) target = $region29
  $region28: #{seegera_forward.20} parent=0 // pred_region
    _
  $region29: #{seegera_forward.20} parent=0 // pred_fallthru
    _

// kernel: seegera_forward.19
$region0: #{seegera_forward.19}
  #allocation0 [shape = 'u32[]', space=smem, size = 0x4, offset = 0x4, fixed_abs, tag = 'smem constant byte address 0x4 - core index']
  #allocation1 [shape = 'u32[72,128]{1,0:T(1,128)}', space=vmem, size = 0x9000, scoped, tag = 'internal scratch']
  #allocation2 [shape = 'f32[1,16,128]{2,1,0:T(8,128)}', space=vmem, size = 0x2000, scoped, tag = 'scratch operand']
  %s0 = inlined_call_operand.vmem [shape: bf16[16,128], index: 0, kind: input, shape index: {}]
  %s1 = inlined_call_operand.vmem [shape: bf16[1,128,128], index: 1, kind: input, shape index: {}]
  %s2 = inlined_call_operand.vmem [shape: bf16[128,128], index: 2, kind: input, shape index: {}]
  %s3 = inlined_call_operand.vmem [shape: f32[1,128], index: 3, kind: input, shape index: {}]
  %s4 = inlined_call_operand.vmem [shape: f32[1,16,128], index: 4, kind: output, shape index: {}]
  %s5 = sld [smem:[#allocation0]]
  $region34: #{seegera_forward.19} parent=0
    _
  %s7 = ssub.s32 1, %s5
  %s8 = scalar_select 0, %s7, %s5
  // Predicated region
  $region2: #{seegera_forward.19} parent=0 // pred_check
    _
  $region3: #{seegera_forward.19} parent=0 // pred_check_branch
    %10 = sbr.rel (0) target = $region5
  $region4: #{seegera_forward.19} parent=0 // pred_region
    _
  $region5: #{seegera_forward.19} parent=0 // pred_fallthru
    _
  // Predicated region
  $region6: #{seegera_forward.19} parent=0 // pred_check
    _
  $region7: #{seegera_forward.19} parent=0 // pred_check_branch
    %12 = sbr.rel (0) target = $region9
  $region8: #{seegera_forward.19} parent=0 // pred_region
    _
  $region9: #{seegera_forward.19} parent=0 // pred_fallthru
    _
  // Predicated region
  $region10: #{seegera_forward.19} parent=0 // pred_check
    _
  $region11: #{seegera_forward.19} parent=0 // pred_check_branch
    %14 = sbr.rel (0) target = $region13
  $region12: #{seegera_forward.19} parent=0 // pred_region
    _
  $region13: #{seegera_forward.19} parent=0 // pred_fallthru
    _
  // Predicated region
  $region14: #{seegera_forward.19} parent=0 // pred_check
    _
  $region15: #{seegera_forward.19} parent=0 // pred_check_branch
    %16 = sbr.rel (0) target = $region17
  $region16: #{seegera_forward.19} parent=0 // pred_region
    _
  $region17: #{seegera_forward.19} parent=0 // pred_fallthru
    _
  %p17 = scmp.eq.s32.totalorder 0, 0
  // Predicated region
  $region18: #{seegera_forward.19} parent=0 // pred_check
    %p18 = pneg %p17
  $region19: #{seegera_forward.19} parent=0 // pred_check_branch
    %20 = sbr.rel (%p18) target = $region21
  $region20: #{seegera_forward.19} parent=0 // pred_region
    %21 = vst [vmem:[#allocation2] sm:$0xff] 0.0
    %22 = vst [vmem:[#allocation2 + $0x8] sm:$0xff] 0.0
  $region21: #{seegera_forward.19} parent=0 // pred_fallthru
    _
  %v23 = vld [vmem:[%s0] sm:$0xf]
  %v24 = vld [vmem:[%s0 + $0x4] sm:$0xf]
  %v25 = vld [vmem:[%s2] sm:$0xf]
  %v26 = vld [vmem:[%s2 + $0x4] sm:$0xf]
  %v27 = vld [vmem:[%s2 + $0x8] sm:$0xf]
  %v28 = vld [vmem:[%s2 + $0xc] sm:$0xf]
  %v29 = vld [vmem:[%s2 + $0x10] sm:$0xf]
  %v30 = vld [vmem:[%s2 + $0x14] sm:$0xf]
  %v31 = vld [vmem:[%s2 + $0x18] sm:$0xf]
  %v32 = vld [vmem:[%s2 + $0x1c] sm:$0xf]
  %v33 = vld [vmem:[%s2 + $0x20] sm:$0xf]
  %v34 = vld [vmem:[%s2 + $0x24] sm:$0xf]
  %v35 = vld [vmem:[%s2 + $0x28] sm:$0xf]
  %v36 = vld [vmem:[%s2 + $0x2c] sm:$0xf]
  %v37 = vld [vmem:[%s2 + $0x30] sm:$0xf]
  %v38 = vld [vmem:[%s2 + $0x34] sm:$0xf]
  %v39 = vld [vmem:[%s2 + $0x38] sm:$0xf]
  %v40 = vld [vmem:[%s2 + $0x3c] sm:$0xf]
  %v41 = vld [vmem:[%s1] sm:$0xf]
  %v42 = vld [vmem:[%s1 + $0x4] sm:$0xf]
  %v43 = vld [vmem:[%s1 + $0x8] sm:$0xf]
  %v44 = vld [vmem:[%s1 + $0xc] sm:$0xf]
  %v45 = vld [vmem:[%s1 + $0x10] sm:$0xf]
  %v46 = vld [vmem:[%s1 + $0x14] sm:$0xf]
  %v47 = vld [vmem:[%s1 + $0x18] sm:$0xf]
  %v48 = vld [vmem:[%s1 + $0x1c] sm:$0xf]
  %v49 = vld [vmem:[%s1 + $0x20] sm:$0xf]
  %v50 = vld [vmem:[%s1 + $0x24] sm:$0xf]
  %v51 = vld [vmem:[%s1 + $0x28] sm:$0xf]
  %v52 = vld [vmem:[%s1 + $0x2c] sm:$0xf]
  %v53 = vld [vmem:[%s1 + $0x30] sm:$0xf]
  %v54 = vld [vmem:[%s1 + $0x34] sm:$0xf]
  %v55 = vld [vmem:[%s1 + $0x38] sm:$0xf]
  %v56 = vld [vmem:[%s1 + $0x3c] sm:$0xf]
  %v73 = vunpack.c.l.b16 %v41
  %v74 = vunpack.c.l.b16 %v42
  %v75 = vunpack.c.l.b16 %v43
  %v76 = vunpack.c.l.b16 %v44
  %v77 = vunpack.c.l.b16 %v45
  %v78 = vunpack.c.l.b16 %v46
  %v79 = vunpack.c.l.b16 %v47
  %v80 = vunpack.c.l.b16 %v48
  %v81 = vunpack.c.l.b16 %v49
  %v82 = vunpack.c.l.b16 %v50
  %v83 = vunpack.c.l.b16 %v51
  %v84 = vunpack.c.l.b16 %v52
  %v85 = vunpack.c.l.b16 %v53
  %v86 = vunpack.c.l.b16 %v54
  %v87 = vunpack.c.l.b16 %v55
  %v88 = vunpack.c.l.b16 %v56
  %v89 = vpack.c.b16 %v74, %v73
  %v90 = vpack.c.b16 %v76, %v75
  %v91 = vpack.c.b16 %v78, %v77
  %v92 = vpack.c.b16 %v80, %v79
  %v93 = vpack.c.b16 %v82, %v81
  %v94 = vpack.c.b16 %v84, %v83
  %v95 = vpack.c.b16 %v86, %v85
  %v96 = vpack.c.b16 %v88, %v87
  %v121 = vunpack.c.l.b16 %v25
  %v122 = vunpack.c.l.b16 %v26
  %v123 = vunpack.c.l.b16 %v27
  %v124 = vunpack.c.l.b16 %v28
  %v125 = vunpack.c.l.b16 %v29
  %v126 = vunpack.c.l.b16 %v30
  %v127 = vunpack.c.l.b16 %v31
  %v128 = vunpack.c.l.b16 %v32
  %v129 = vunpack.c.l.b16 %v33
  %v130 = vunpack.c.l.b16 %v34
  %v131 = vunpack.c.l.b16 %v35
  %v132 = vunpack.c.l.b16 %v36
  %v133 = vunpack.c.l.b16 %v37
  %v134 = vunpack.c.l.b16 %v38
  %v135 = vunpack.c.l.b16 %v39
  %v136 = vunpack.c.l.b16 %v40
  %v137 = vpack.c.b16 %v122, %v121
  %v138 = vpack.c.b16 %v124, %v123
  %v139 = vpack.c.b16 %v126, %v125
  %v140 = vpack.c.b16 %v128, %v127
  %v141 = vpack.c.b16 %v130, %v129
  %v142 = vpack.c.b16 %v132, %v131
  %v143 = vpack.c.b16 %v134, %v133
  %v144 = vpack.c.b16 %v136, %v135
  %153 = vmatpush.bf16.msra.mxu0 %v144
  %154 = vmatpush.bf16.msra.mxu0 %v143
  %155 = vmatpush.bf16.msra.mxu0 %v142
  %156 = vmatpush.bf16.msra.mxu0 %v141
  %157 = vmatpush.bf16.msra.mxu0 %v140
  %158 = vmatpush.bf16.msra.mxu0 %v139
  %159 = vmatpush.bf16.msra.mxu0 %v138
  %160 = vmatpush.bf16.msra.mxu0 %v137
  %161 = vmatmul.bf16.gmra.mxu0 %v89
  %v162 = vpop.f32.mrf.mxu0
  %v163 = vadd.f32 0.0, %v162
  %v164 = vpop.f32.mrf.mxu0
  %v165 = vadd.f32 0.0, %v164
  %166 = vmatmul.bf16.gmra.mxu0 %v90
  %v167 = vpop.f32.mrf.mxu0
  %v168 = vadd.f32 0.0, %v167
  %v169 = vpop.f32.mrf.mxu0
  %v170 = vadd.f32 0.0, %v169
  %171 = vmatmul.bf16.gmra.mxu0 %v91
  %v172 = vpop.f32.mrf.mxu0
  %v173 = vadd.f32 0.0, %v172
  %v174 = vpop.f32.mrf.mxu0
  %v175 = vadd.f32 0.0, %v174
  %176 = vmatmul.bf16.gmra.mxu0 %v92
  %v177 = vpop.f32.mrf.mxu0
  %v178 = vadd.f32 0.0, %v177
  %v179 = vpop.f32.mrf.mxu0
  %v180 = vadd.f32 0.0, %v179
  %181 = vmatmul.bf16.gmra.mxu0 %v93
  %v182 = vpop.f32.mrf.mxu0
  %v183 = vadd.f32 0.0, %v182
  %v184 = vpop.f32.mrf.mxu0
  %v185 = vadd.f32 0.0, %v184
  %186 = vmatmul.bf16.gmra.mxu0 %v94
  %v187 = vpop.f32.mrf.mxu0
  %v188 = vadd.f32 0.0, %v187
  %v189 = vpop.f32.mrf.mxu0
  %v190 = vadd.f32 0.0, %v189
  %191 = vmatmul.bf16.gmra.mxu0 %v95
  %v192 = vpop.f32.mrf.mxu0
  %v193 = vadd.f32 0.0, %v192
  %v194 = vpop.f32.mrf.mxu0
  %v195 = vadd.f32 0.0, %v194
  %196 = vmatmul.bf16.gmra.mxu0 %v96
  %v197 = vpop.f32.mrf.mxu0
  %v198 = vadd.f32 0.0, %v197
  %v199 = vpop.f32.mrf.mxu0
  %v200 = vadd.f32 0.0, %v199
  %201 = vdwg.mxu0
  %v202 = vld [vmem:[#allocation2] sm:$0xff]
  %v203 = vld [vmem:[#allocation2 + $0x8] sm:$0xff]
  %v204 = vpack.c.bf16 %v165, %v163
  %v205 = vpack.c.bf16 %v170, %v168
  %v206 = vpack.c.bf16 %v175, %v173
  %v207 = vpack.c.bf16 %v180, %v178
  %v208 = vpack.c.bf16 %v185, %v183
  %v209 = vpack.c.bf16 %v190, %v188
  %v210 = vpack.c.bf16 %v195, %v193
  %v211 = vpack.c.bf16 %v200, %v198
  %v214 = vunpack.c.l.b16 %v23
  %v215 = vunpack.c.l.b16 %v24
  %v216 = vpack.c.b16 %v215, %v214
  %218 = vmatpush.bf16.msra.mxu0 %v211
  %219 = vmatpush.bf16.msra.mxu0 %v210
  %220 = vmatpush.bf16.msra.mxu0 %v209
  %221 = vmatpush.bf16.msra.mxu0 %v208
  %222 = vmatpush.bf16.msra.mxu0 %v207
  %223 = vmatpush.bf16.msra.mxu0 %v206
  %224 = vmatpush.bf16.msra.mxu0 %v205
  %225 = vmatpush.bf16.msra.mxu0 %v204
  %226 = vmatmul.bf16.gmra.mxu0 %v216
  %v227 = vpop.f32.mrf.mxu0
  %v228 = vadd.f32 0.0, %v227
  %v229 = vpop.f32.mrf.mxu0
  %v230 = vadd.f32 0.0, %v229
  %231 = vdwg.mxu0
  %v232 = vadd.f32 %v202, %v228
  %v233 = vadd.f32 %v203, %v230
  %234 = vst [vmem:[#allocation2] sm:$0xff] %v232
  %235 = vst [vmem:[#allocation2 + $0x8] sm:$0xff] %v233
  // Predicated region
  $region22: #{seegera_forward.19} parent=0 // pred_check
    %p236 = pneg %p17
  $region23: #{seegera_forward.19} parent=0 // pred_check_branch
    %238 = sbr.rel (%p236) target = $region25
  $region24: #{seegera_forward.19} parent=0 // pred_region
    %v239 = vld [vmem:[#allocation2] sm:$0xff]
    %v240 = vld [vmem:[#allocation2 + $0x8] sm:$0xff]
    %v241 = vld [vmem:[%s3] sm:$0x1]
    %v243 = vperm.slane %v241, 0
    %v245 = vadd.f32 %v239, %v243
    %v246 = vadd.f32 %v240, %v243
    %247 = vst [vmem:[%s4] sm:$0xff] %v245
    %248 = vst [vmem:[%s4 + $0x8] sm:$0xff] %v246
  $region25: #{seegera_forward.19} parent=0 // pred_fallthru
    _
  // Predicated region
  $region26: #{seegera_forward.19} parent=0 // pred_check
    _
  $region27: #{seegera_forward.19} parent=0 // pred_check_branch
    %250 = sbr.rel (0) target = $region29
  $region28: #{seegera_forward.19} parent=0 // pred_region
    _
  $region29: #{seegera_forward.19} parent=0 // pred_fallthru
    _
  // Predicated region
  $region30: #{seegera_forward.19} parent=0 // pred_check
    _
  $region31: #{seegera_forward.19} parent=0 // pred_check_branch
    %252 = sbr.rel (0) target = $region33
  $region32: #{seegera_forward.19} parent=0 // pred_region
    _
  $region33: #{seegera_forward.19} parent=0 // pred_fallthru
    _

// kernel: seegera_forward.22
$region0: #{seegera_forward.22}
  #allocation0 [shape = 'u32[]', space=smem, size = 0x4, offset = 0x4, fixed_abs, tag = 'smem constant byte address 0x4 - core index']
  #allocation1 [shape = 'u32[72,128]{1,0:T(1,128)}', space=vmem, size = 0x9000, scoped, tag = 'internal scratch']
  #allocation2 [shape = 'f32[24,128]{1,0:T(8,128)}', space=vmem, size = 0x3000, scoped, tag = 'scratch operand']
  %s0 = inlined_call_operand.vmem [shape: bf16[24,128], index: 0, kind: input, shape index: {}]
  %s1 = inlined_call_operand.vmem [shape: bf16[128,128], index: 1, kind: input, shape index: {}]
  %s2 = inlined_call_operand.vmem [shape: f32[1,128], index: 2, kind: input, shape index: {}]
  %s3 = inlined_call_operand.vmem [shape: f32[24,128], index: 3, kind: output, shape index: {}]
  %s4 = sld [smem:[#allocation0]]
  $region30: #{seegera_forward.22} parent=0
    _
  %s6 = ssub.s32 1, %s4
  %s7 = scalar_select 0, %s6, %s4
  // Predicated region
  $region2: #{seegera_forward.22} parent=0 // pred_check
    _
  $region3: #{seegera_forward.22} parent=0 // pred_check_branch
    %9 = sbr.rel (0) target = $region5
  $region4: #{seegera_forward.22} parent=0 // pred_region
    _
  $region5: #{seegera_forward.22} parent=0 // pred_fallthru
    _
  // Predicated region
  $region6: #{seegera_forward.22} parent=0 // pred_check
    _
  $region7: #{seegera_forward.22} parent=0 // pred_check_branch
    %11 = sbr.rel (0) target = $region9
  $region8: #{seegera_forward.22} parent=0 // pred_region
    _
  $region9: #{seegera_forward.22} parent=0 // pred_fallthru
    _
  // Predicated region
  $region10: #{seegera_forward.22} parent=0 // pred_check
    _
  $region11: #{seegera_forward.22} parent=0 // pred_check_branch
    %13 = sbr.rel (0) target = $region13
  $region12: #{seegera_forward.22} parent=0 // pred_region
    _
  $region13: #{seegera_forward.22} parent=0 // pred_fallthru
    _
  %p14 = scmp.eq.s32.totalorder 0, 0
  // Predicated region
  $region14: #{seegera_forward.22} parent=0 // pred_check
    %p15 = pneg %p14
  $region15: #{seegera_forward.22} parent=0 // pred_check_branch
    %17 = sbr.rel (%p15) target = $region17
  $region16: #{seegera_forward.22} parent=0 // pred_region
    %18 = vst [vmem:[#allocation2] sm:$0xff] 0.0
    %19 = vst [vmem:[#allocation2 + $0x8] sm:$0xff] 0.0
    %20 = vst [vmem:[#allocation2 + $0x10] sm:$0xff] 0.0
  $region17: #{seegera_forward.22} parent=0 // pred_fallthru
    _
  %v21 = vld [vmem:[#allocation2] sm:$0xff]
  %v22 = vld [vmem:[#allocation2 + $0x8] sm:$0xff]
  %v23 = vld [vmem:[#allocation2 + $0x10] sm:$0xff]
  %v24 = vld [vmem:[%s0] sm:$0xf]
  %v25 = vld [vmem:[%s0 + $0x4] sm:$0xf]
  %v26 = vld [vmem:[%s0 + $0x8] sm:$0xf]
  %v27 = vld [vmem:[%s1] sm:$0xf]
  %v28 = vld [vmem:[%s1 + $0x4] sm:$0xf]
  %v29 = vld [vmem:[%s1 + $0x8] sm:$0xf]
  %v30 = vld [vmem:[%s1 + $0xc] sm:$0xf]
  %v31 = vld [vmem:[%s1 + $0x10] sm:$0xf]
  %v32 = vld [vmem:[%s1 + $0x14] sm:$0xf]
  %v33 = vld [vmem:[%s1 + $0x18] sm:$0xf]
  %v34 = vld [vmem:[%s1 + $0x1c] sm:$0xf]
  %v35 = vld [vmem:[%s1 + $0x20] sm:$0xf]
  %v36 = vld [vmem:[%s1 + $0x24] sm:$0xf]
  %v37 = vld [vmem:[%s1 + $0x28] sm:$0xf]
  %v38 = vld [vmem:[%s1 + $0x2c] sm:$0xf]
  %v39 = vld [vmem:[%s1 + $0x30] sm:$0xf]
  %v40 = vld [vmem:[%s1 + $0x34] sm:$0xf]
  %v41 = vld [vmem:[%s1 + $0x38] sm:$0xf]
  %v42 = vld [vmem:[%s1 + $0x3c] sm:$0xf]
  %v46 = vunpack.c.l.b16 %v24
  %v47 = vunpack.c.l.b16 %v25
  %v48 = vunpack.c.l.b16 %v26
  %v49 = vpack.c.b16 %v47, %v46
  %v50 = vpack.c.b16 %v48, %v48
  %v69 = vunpack.c.l.b16 %v27
  %v70 = vunpack.c.l.b16 %v28
  %v71 = vunpack.c.l.b16 %v29
  %v72 = vunpack.c.l.b16 %v30
  %v73 = vunpack.c.l.b16 %v31
  %v74 = vunpack.c.l.b16 %v32
  %v75 = vunpack.c.l.b16 %v33
  %v76 = vunpack.c.l.b16 %v34
  %v77 = vunpack.c.l.b16 %v35
  %v78 = vunpack.c.l.b16 %v36
  %v79 = vunpack.c.l.b16 %v37
  %v80 = vunpack.c.l.b16 %v38
  %v81 = vunpack.c.l.b16 %v39
  %v82 = vunpack.c.l.b16 %v40
  %v83 = vunpack.c.l.b16 %v41
  %v84 = vunpack.c.l.b16 %v42
  %v85 = vpack.c.b16 %v70, %v69
  %v86 = vpack.c.b16 %v72, %v71
  %v87 = vpack.c.b16 %v74, %v73
  %v88 = vpack.c.b16 %v76, %v75
  %v89 = vpack.c.b16 %v78, %v77
  %v90 = vpack.c.b16 %v80, %v79
  %v91 = vpack.c.b16 %v82, %v81
  %v92 = vpack.c.b16 %v84, %v83
  %101 = vmatpush.bf16.msra.mxu0 %v92
  %102 = vmatpush.bf16.msra.mxu0 %v91
  %103 = vmatpush.bf16.msra.mxu0 %v90
  %104 = vmatpush.bf16.msra.mxu0 %v89
  %105 = vmatpush.bf16.msra.mxu0 %v88
  %106 = vmatpush.bf16.msra.mxu0 %v87
  %107 = vmatpush.bf16.msra.mxu0 %v86
  %108 = vmatpush.bf16.msra.mxu0 %v85
  %109 = vmatmul.bf16.gmra.mxu0 %v49
  %v110 = vpop.f32.mrf.mxu0
  %v111 = vadd.f32 0.0, %v110
  %v112 = vpop.f32.mrf.mxu0
  %v113 = vadd.f32 0.0, %v112
  %114 = vmatmul.bf16.gmra.mxu0 %v50
  %v115 = vpop.f32.mrf.mxu0
  %v116 = vadd.f32 0.0, %v115
  %v117 = vpop.f32.mrf.mxu0
  %118 = vdwg.mxu0
  %v119 = vadd.f32 %v21, %v111
  %v120 = vadd.f32 %v22, %v113
  %v121 = vadd.f32 %v23, %v116
  %122 = vst [vmem:[#allocation2] sm:$0xff] %v119
  %123 = vst [vmem:[#allocation2 + $0x8] sm:$0xff] %v120
  %124 = vst [vmem:[#allocation2 + $0x10] sm:$0xff] %v121
  // Predicated region
  $region18: #{seegera_forward.22} parent=0 // pred_check
    %p125 = pneg %p14
  $region19: #{seegera_forward.22} parent=0 // pred_check_branch
    %127 = sbr.rel (%p125) target = $region21
  $region20: #{seegera_forward.22} parent=0 // pred_region
    %v128 = vld [vmem:[#allocation2] sm:$0xff]
    %v129 = vld [vmem:[#allocation2 + $0x8] sm:$0xff]
    %v130 = vld [vmem:[#allocation2 + $0x10] sm:$0xff]
    %v131 = vld [vmem:[%s2] sm:$0x1]
    %v133 = vperm.slane %v131, 0
    %v135 = vadd.f32 %v128, %v133
    %v136 = vadd.f32 %v129, %v133
    %v137 = vadd.f32 %v130, %v133
    %138 = vst [vmem:[%s3] sm:$0xff] %v135
    %139 = vst [vmem:[%s3 + $0x8] sm:$0xff] %v136
    %140 = vst [vmem:[%s3 + $0x10] sm:$0xff] %v137
  $region21: #{seegera_forward.22} parent=0 // pred_fallthru
    _
  // Predicated region
  $region22: #{seegera_forward.22} parent=0 // pred_check
    _
  $region23: #{seegera_forward.22} parent=0 // pred_check_branch
    %142 = sbr.rel (0) target = $region25
  $region24: #{seegera_forward.22} parent=0 // pred_region
    _
  $region25: #{seegera_forward.22} parent=0 // pred_fallthru
    _
  // Predicated region
  $region26: #{seegera_forward.22} parent=0 // pred_check
    _
  $region27: #{seegera_forward.22} parent=0 // pred_check_branch
    %144 = sbr.rel (0) target = $region29
  $region28: #{seegera_forward.22} parent=0 // pred_region
    _
  $region29: #{seegera_forward.22} parent=0 // pred_fallthru
    _

// kernel: seegera_forward.21
$region0: #{seegera_forward.21}
  #allocation0 [shape = 'u32[]', space=smem, size = 0x4, offset = 0x4, fixed_abs, tag = 'smem constant byte address 0x4 - core index']
  #allocation1 [shape = 'u32[72,128]{1,0:T(1,128)}', space=vmem, size = 0x9000, scoped, tag = 'internal scratch']
  #allocation2 [shape = 'f32[24,128]{1,0:T(8,128)}', space=vmem, size = 0x3000, scoped, tag = 'scratch operand']
  %s0 = inlined_call_operand.vmem [shape: bf16[24,128], index: 0, kind: input, shape index: {}]
  %s1 = inlined_call_operand.vmem [shape: bf16[128,128], index: 1, kind: input, shape index: {}]
  %s2 = inlined_call_operand.vmem [shape: f32[1,128], index: 2, kind: input, shape index: {}]
  %s3 = inlined_call_operand.vmem [shape: f32[24,128], index: 3, kind: output, shape index: {}]
  %s4 = sld [smem:[#allocation0]]
  $region30: #{seegera_forward.21} parent=0
    _
  %s6 = ssub.s32 1, %s4
  %s7 = scalar_select 0, %s6, %s4
  // Predicated region
  $region2: #{seegera_forward.21} parent=0 // pred_check
    _
  $region3: #{seegera_forward.21} parent=0 // pred_check_branch
    %9 = sbr.rel (0) target = $region5
  $region4: #{seegera_forward.21} parent=0 // pred_region
    _
  $region5: #{seegera_forward.21} parent=0 // pred_fallthru
    _
  // Predicated region
  $region6: #{seegera_forward.21} parent=0 // pred_check
    _
  $region7: #{seegera_forward.21} parent=0 // pred_check_branch
    %11 = sbr.rel (0) target = $region9
  $region8: #{seegera_forward.21} parent=0 // pred_region
    _
  $region9: #{seegera_forward.21} parent=0 // pred_fallthru
    _
  // Predicated region
  $region10: #{seegera_forward.21} parent=0 // pred_check
    _
  $region11: #{seegera_forward.21} parent=0 // pred_check_branch
    %13 = sbr.rel (0) target = $region13
  $region12: #{seegera_forward.21} parent=0 // pred_region
    _
  $region13: #{seegera_forward.21} parent=0 // pred_fallthru
    _
  %p14 = scmp.eq.s32.totalorder 0, 0
  // Predicated region
  $region14: #{seegera_forward.21} parent=0 // pred_check
    %p15 = pneg %p14
  $region15: #{seegera_forward.21} parent=0 // pred_check_branch
    %17 = sbr.rel (%p15) target = $region17
  $region16: #{seegera_forward.21} parent=0 // pred_region
    %18 = vst [vmem:[#allocation2] sm:$0xff] 0.0
    %19 = vst [vmem:[#allocation2 + $0x8] sm:$0xff] 0.0
    %20 = vst [vmem:[#allocation2 + $0x10] sm:$0xff] 0.0
  $region17: #{seegera_forward.21} parent=0 // pred_fallthru
    _
  %v21 = vld [vmem:[#allocation2] sm:$0xff]
  %v22 = vld [vmem:[#allocation2 + $0x8] sm:$0xff]
  %v23 = vld [vmem:[#allocation2 + $0x10] sm:$0xff]
  %v24 = vld [vmem:[%s0] sm:$0xf]
  %v25 = vld [vmem:[%s0 + $0x4] sm:$0xf]
  %v26 = vld [vmem:[%s0 + $0x8] sm:$0xf]
  %v27 = vld [vmem:[%s1] sm:$0xf]
  %v28 = vld [vmem:[%s1 + $0x4] sm:$0xf]
  %v29 = vld [vmem:[%s1 + $0x8] sm:$0xf]
  %v30 = vld [vmem:[%s1 + $0xc] sm:$0xf]
  %v31 = vld [vmem:[%s1 + $0x10] sm:$0xf]
  %v32 = vld [vmem:[%s1 + $0x14] sm:$0xf]
  %v33 = vld [vmem:[%s1 + $0x18] sm:$0xf]
  %v34 = vld [vmem:[%s1 + $0x1c] sm:$0xf]
  %v35 = vld [vmem:[%s1 + $0x20] sm:$0xf]
  %v36 = vld [vmem:[%s1 + $0x24] sm:$0xf]
  %v37 = vld [vmem:[%s1 + $0x28] sm:$0xf]
  %v38 = vld [vmem:[%s1 + $0x2c] sm:$0xf]
  %v39 = vld [vmem:[%s1 + $0x30] sm:$0xf]
  %v40 = vld [vmem:[%s1 + $0x34] sm:$0xf]
  %v41 = vld [vmem:[%s1 + $0x38] sm:$0xf]
  %v42 = vld [vmem:[%s1 + $0x3c] sm:$0xf]
  %v46 = vunpack.c.l.b16 %v24
  %v47 = vunpack.c.l.b16 %v25
  %v48 = vunpack.c.l.b16 %v26
  %v49 = vpack.c.b16 %v47, %v46
  %v50 = vpack.c.b16 %v48, %v48
  %v69 = vunpack.c.l.b16 %v27
  %v70 = vunpack.c.l.b16 %v28
  %v71 = vunpack.c.l.b16 %v29
  %v72 = vunpack.c.l.b16 %v30
  %v73 = vunpack.c.l.b16 %v31
  %v74 = vunpack.c.l.b16 %v32
  %v75 = vunpack.c.l.b16 %v33
  %v76 = vunpack.c.l.b16 %v34
  %v77 = vunpack.c.l.b16 %v35
  %v78 = vunpack.c.l.b16 %v36
  %v79 = vunpack.c.l.b16 %v37
  %v80 = vunpack.c.l.b16 %v38
  %v81 = vunpack.c.l.b16 %v39
  %v82 = vunpack.c.l.b16 %v40
  %v83 = vunpack.c.l.b16 %v41
  %v84 = vunpack.c.l.b16 %v42
  %v85 = vpack.c.b16 %v70, %v69
  %v86 = vpack.c.b16 %v72, %v71
  %v87 = vpack.c.b16 %v74, %v73
  %v88 = vpack.c.b16 %v76, %v75
  %v89 = vpack.c.b16 %v78, %v77
  %v90 = vpack.c.b16 %v80, %v79
  %v91 = vpack.c.b16 %v82, %v81
  %v92 = vpack.c.b16 %v84, %v83
  %101 = vmatpush.bf16.msra.mxu0 %v92
  %102 = vmatpush.bf16.msra.mxu0 %v91
  %103 = vmatpush.bf16.msra.mxu0 %v90
  %104 = vmatpush.bf16.msra.mxu0 %v89
  %105 = vmatpush.bf16.msra.mxu0 %v88
  %106 = vmatpush.bf16.msra.mxu0 %v87
  %107 = vmatpush.bf16.msra.mxu0 %v86
  %108 = vmatpush.bf16.msra.mxu0 %v85
  %109 = vmatmul.bf16.gmra.mxu0 %v49
  %v110 = vpop.f32.mrf.mxu0
  %v111 = vadd.f32 0.0, %v110
  %v112 = vpop.f32.mrf.mxu0
  %v113 = vadd.f32 0.0, %v112
  %114 = vmatmul.bf16.gmra.mxu0 %v50
  %v115 = vpop.f32.mrf.mxu0
  %v116 = vadd.f32 0.0, %v115
  %v117 = vpop.f32.mrf.mxu0
  %118 = vdwg.mxu0
  %v119 = vadd.f32 %v21, %v111
  %v120 = vadd.f32 %v22, %v113
  %v121 = vadd.f32 %v23, %v116
  %122 = vst [vmem:[#allocation2] sm:$0xff] %v119
  %123 = vst [vmem:[#allocation2 + $0x8] sm:$0xff] %v120
  %124 = vst [vmem:[#allocation2 + $0x10] sm:$0xff] %v121
  // Predicated region
  $region18: #{seegera_forward.21} parent=0 // pred_check
    %p125 = pneg %p14
  $region19: #{seegera_forward.21} parent=0 // pred_check_branch
    %127 = sbr.rel (%p125) target = $region21
  $region20: #{seegera_forward.21} parent=0 // pred_region
    %v128 = vld [vmem:[#allocation2] sm:$0xff]
    %v129 = vld [vmem:[#allocation2 + $0x8] sm:$0xff]
    %v130 = vld [vmem:[#allocation2 + $0x10] sm:$0xff]
    %v131 = vld [vmem:[%s2] sm:$0x1]
    %v133 = vperm.slane %v131, 0
    %v135 = vadd.f32 %v128, %v133
    %v136 = vadd.f32 %v129, %v133
    %v137 = vadd.f32 %v130, %v133
    %v138 = vmax.f32 %v135, 0.0
    %v139 = vmax.f32 %v136, 0.0
    %v140 = vmax.f32 %v137, 0.0
    %141 = vst [vmem:[%s3] sm:$0xff] %v138
    %142 = vst [vmem:[%s3 + $0x8] sm:$0xff] %v139
    %143 = vst [vmem:[%s3 + $0x10] sm:$0xff] %v140
  $region21: #{seegera_forward.21} parent=0 // pred_fallthru
    _
  // Predicated region
  $region22: #{seegera_forward.21} parent=0 // pred_check
    _
  $region23: #{seegera_forward.21} parent=0 // pred_check_branch
    %145 = sbr.rel (0) target = $region25
  $region24: #{seegera_forward.21} parent=0 // pred_region
    _
  $region25: #{seegera_forward.21} parent=0 // pred_fallthru
    _
  // Predicated region
  $region26: #{seegera_forward.21} parent=0 // pred_check
    _
  $region27: #{seegera_forward.21} parent=0 // pred_check_branch
    %147 = sbr.rel (0) target = $region29
  $region28: #{seegera_forward.21} parent=0 // pred_region
    _
  $region29: #{seegera_forward.21} parent=0 // pred_fallthru
    _

// kernel: seegera_forward.23
$region0: #{seegera_forward.23}
  #allocation0 [shape = 'u32[]', space=smem, size = 0x4, offset = 0x4, fixed_abs, tag = 'smem constant byte address 0x4 - core index']
  #allocation1 [shape = 'u32[72,128]{1,0:T(1,128)}', space=vmem, size = 0x9000, scoped, tag = 'internal scratch']
  #allocation2 [shape = 'f32[16,128]{1,0:T(8,128)}', space=vmem, size = 0x2000, scoped, tag = 'scratch operand']
  %s0 = inlined_call_operand.vmem [shape: bf16[16,128], index: 0, kind: input, shape index: {}]
  %s1 = inlined_call_operand.vmem [shape: bf16[128,128], index: 1, kind: input, shape index: {}]
  %s2 = inlined_call_operand.vmem [shape: f32[1,128], index: 2, kind: input, shape index: {}]
  %s3 = inlined_call_operand.vmem [shape: f32[16,128], index: 3, kind: output, shape index: {}]
  %s4 = sld [smem:[#allocation0]]
  $region30: #{seegera_forward.23} parent=0
    _
  %s6 = ssub.s32 1, %s4
  %s7 = scalar_select 0, %s6, %s4
  // Predicated region
  $region2: #{seegera_forward.23} parent=0 // pred_check
    _
  $region3: #{seegera_forward.23} parent=0 // pred_check_branch
    %9 = sbr.rel (0) target = $region5
  $region4: #{seegera_forward.23} parent=0 // pred_region
    _
  $region5: #{seegera_forward.23} parent=0 // pred_fallthru
    _
  // Predicated region
  $region6: #{seegera_forward.23} parent=0 // pred_check
    _
  $region7: #{seegera_forward.23} parent=0 // pred_check_branch
    %11 = sbr.rel (0) target = $region9
  $region8: #{seegera_forward.23} parent=0 // pred_region
    _
  $region9: #{seegera_forward.23} parent=0 // pred_fallthru
    _
  // Predicated region
  $region10: #{seegera_forward.23} parent=0 // pred_check
    _
  $region11: #{seegera_forward.23} parent=0 // pred_check_branch
    %13 = sbr.rel (0) target = $region13
  $region12: #{seegera_forward.23} parent=0 // pred_region
    _
  $region13: #{seegera_forward.23} parent=0 // pred_fallthru
    _
  %p14 = scmp.eq.s32.totalorder 0, 0
  // Predicated region
  $region14: #{seegera_forward.23} parent=0 // pred_check
    %p15 = pneg %p14
  $region15: #{seegera_forward.23} parent=0 // pred_check_branch
    %17 = sbr.rel (%p15) target = $region17
  $region16: #{seegera_forward.23} parent=0 // pred_region
    %18 = vst [vmem:[#allocation2] sm:$0xff] 0.0
    %19 = vst [vmem:[#allocation2 + $0x8] sm:$0xff] 0.0
  $region17: #{seegera_forward.23} parent=0 // pred_fallthru
    _
  %v20 = vld [vmem:[#allocation2] sm:$0xff]
  %v21 = vld [vmem:[#allocation2 + $0x8] sm:$0xff]
  %v22 = vld [vmem:[%s0] sm:$0xf]
  %v23 = vld [vmem:[%s0 + $0x4] sm:$0xf]
  %v24 = vld [vmem:[%s1] sm:$0xf]
  %v25 = vld [vmem:[%s1 + $0x4] sm:$0xf]
  %v26 = vld [vmem:[%s1 + $0x8] sm:$0xf]
  %v27 = vld [vmem:[%s1 + $0xc] sm:$0xf]
  %v28 = vld [vmem:[%s1 + $0x10] sm:$0xf]
  %v29 = vld [vmem:[%s1 + $0x14] sm:$0xf]
  %v30 = vld [vmem:[%s1 + $0x18] sm:$0xf]
  %v31 = vld [vmem:[%s1 + $0x1c] sm:$0xf]
  %v32 = vld [vmem:[%s1 + $0x20] sm:$0xf]
  %v33 = vld [vmem:[%s1 + $0x24] sm:$0xf]
  %v34 = vld [vmem:[%s1 + $0x28] sm:$0xf]
  %v35 = vld [vmem:[%s1 + $0x2c] sm:$0xf]
  %v36 = vld [vmem:[%s1 + $0x30] sm:$0xf]
  %v37 = vld [vmem:[%s1 + $0x34] sm:$0xf]
  %v38 = vld [vmem:[%s1 + $0x38] sm:$0xf]
  %v39 = vld [vmem:[%s1 + $0x3c] sm:$0xf]
  %v42 = vunpack.c.l.b16 %v22
  %v43 = vunpack.c.l.b16 %v23
  %v44 = vpack.c.b16 %v43, %v42
  %v62 = vunpack.c.l.b16 %v24
  %v63 = vunpack.c.l.b16 %v25
  %v64 = vunpack.c.l.b16 %v26
  %v65 = vunpack.c.l.b16 %v27
  %v66 = vunpack.c.l.b16 %v28
  %v67 = vunpack.c.l.b16 %v29
  %v68 = vunpack.c.l.b16 %v30
  %v69 = vunpack.c.l.b16 %v31
  %v70 = vunpack.c.l.b16 %v32
  %v71 = vunpack.c.l.b16 %v33
  %v72 = vunpack.c.l.b16 %v34
  %v73 = vunpack.c.l.b16 %v35
  %v74 = vunpack.c.l.b16 %v36
  %v75 = vunpack.c.l.b16 %v37
  %v76 = vunpack.c.l.b16 %v38
  %v77 = vunpack.c.l.b16 %v39
  %v78 = vpack.c.b16 %v63, %v62
  %v79 = vpack.c.b16 %v65, %v64
  %v80 = vpack.c.b16 %v67, %v66
  %v81 = vpack.c.b16 %v69, %v68
  %v82 = vpack.c.b16 %v71, %v70
  %v83 = vpack.c.b16 %v73, %v72
  %v84 = vpack.c.b16 %v75, %v74
  %v85 = vpack.c.b16 %v77, %v76
  %94 = vmatpush.bf16.msra.mxu0 %v85
  %95 = vmatpush.bf16.msra.mxu0 %v84
  %96 = vmatpush.bf16.msra.mxu0 %v83
  %97 = vmatpush.bf16.msra.mxu0 %v82
  %98 = vmatpush.bf16.msra.mxu0 %v81
  %99 = vmatpush.bf16.msra.mxu0 %v80
  %100 = vmatpush.bf16.msra.mxu0 %v79
  %101 = vmatpush.bf16.msra.mxu0 %v78
  %102 = vmatmul.bf16.gmra.mxu0 %v44
  %v103 = vpop.f32.mrf.mxu0
  %v104 = vadd.f32 0.0, %v103
  %v105 = vpop.f32.mrf.mxu0
  %v106 = vadd.f32 0.0, %v105
  %107 = vdwg.mxu0
  %v108 = vadd.f32 %v20, %v104
  %v109 = vadd.f32 %v21, %v106
  %110 = vst [vmem:[#allocation2] sm:$0xff] %v108
  %111 = vst [vmem:[#allocation2 + $0x8] sm:$0xff] %v109
  // Predicated region
  $region18: #{seegera_forward.23} parent=0 // pred_check
    %p112 = pneg %p14
  $region19: #{seegera_forward.23} parent=0 // pred_check_branch
    %114 = sbr.rel (%p112) target = $region21
  $region20: #{seegera_forward.23} parent=0 // pred_region
    %v115 = vld [vmem:[#allocation2] sm:$0xff]
    %v116 = vld [vmem:[#allocation2 + $0x8] sm:$0xff]
    %v117 = vld [vmem:[%s2] sm:$0x1]
    %v119 = vperm.slane %v117, 0
    %v121 = vadd.f32 %v115, %v119
    %v122 = vadd.f32 %v116, %v119
    %v123 = vmax.f32 %v121, 0.0
    %v124 = vmax.f32 %v122, 0.0
    %125 = vst [vmem:[%s3] sm:$0xff] %v123
    %126 = vst [vmem:[%s3 + $0x8] sm:$0xff] %v124
  $region21: #{seegera_forward.23} parent=0 // pred_fallthru
    _
  // Predicated region
  $region22: #{seegera_forward.23} parent=0 // pred_check
    _
  $region23: #{seegera_forward.23} parent=0 // pred_check_branch
    %128 = sbr.rel (0) target = $region25
  $region24: #{seegera_forward.23} parent=0 // pred_region
    _
  $region25: #{seegera_forward.23} parent=0 // pred_fallthru
    _
  // Predicated region
  $region26: #{seegera_forward.23} parent=0 // pred_check
    _
  $region27: #{seegera_forward.23} parent=0 // pred_check_branch
    %130 = sbr.rel (0) target = $region29
  $region28: #{seegera_forward.23} parent=0 // pred_region
    _
  $region29: #{seegera_forward.23} parent=0 // pred_fallthru
    _

// kernel: seegera_forward.24
$region0: #{seegera_forward.24}
  #allocation0 [shape = 'u32[]', space=smem, size = 0x4, offset = 0x4, fixed_abs, tag = 'smem constant byte address 0x4 - core index']
  #allocation1 [shape = 'u32[72,128]{1,0:T(1,128)}', space=vmem, size = 0x9000, scoped, tag = 'internal scratch']
  #allocation2 [shape = 'f32[16,128]{1,0:T(8,128)}', space=vmem, size = 0x2000, scoped, tag = 'scratch operand']
  %s0 = inlined_call_operand.vmem [shape: bf16[16,128], index: 0, kind: input, shape index: {}]
  %s1 = inlined_call_operand.vmem [shape: bf16[128,128], index: 1, kind: input, shape index: {}]
  %s2 = inlined_call_operand.vmem [shape: f32[1,128], index: 2, kind: input, shape index: {}]
  %s3 = inlined_call_operand.vmem [shape: f32[16,128], index: 3, kind: output, shape index: {}]
  %s4 = sld [smem:[#allocation0]]
  $region30: #{seegera_forward.24} parent=0
    _
  %s6 = ssub.s32 1, %s4
  %s7 = scalar_select 0, %s6, %s4
  // Predicated region
  $region2: #{seegera_forward.24} parent=0 // pred_check
    _
  $region3: #{seegera_forward.24} parent=0 // pred_check_branch
    %9 = sbr.rel (0) target = $region5
  $region4: #{seegera_forward.24} parent=0 // pred_region
    _
  $region5: #{seegera_forward.24} parent=0 // pred_fallthru
    _
  // Predicated region
  $region6: #{seegera_forward.24} parent=0 // pred_check
    _
  $region7: #{seegera_forward.24} parent=0 // pred_check_branch
    %11 = sbr.rel (0) target = $region9
  $region8: #{seegera_forward.24} parent=0 // pred_region
    _
  $region9: #{seegera_forward.24} parent=0 // pred_fallthru
    _
  // Predicated region
  $region10: #{seegera_forward.24} parent=0 // pred_check
    _
  $region11: #{seegera_forward.24} parent=0 // pred_check_branch
    %13 = sbr.rel (0) target = $region13
  $region12: #{seegera_forward.24} parent=0 // pred_region
    _
  $region13: #{seegera_forward.24} parent=0 // pred_fallthru
    _
  %p14 = scmp.eq.s32.totalorder 0, 0
  // Predicated region
  $region14: #{seegera_forward.24} parent=0 // pred_check
    %p15 = pneg %p14
  $region15: #{seegera_forward.24} parent=0 // pred_check_branch
    %17 = sbr.rel (%p15) target = $region17
  $region16: #{seegera_forward.24} parent=0 // pred_region
    %18 = vst [vmem:[#allocation2] sm:$0xff] 0.0
    %19 = vst [vmem:[#allocation2 + $0x8] sm:$0xff] 0.0
  $region17: #{seegera_forward.24} parent=0 // pred_fallthru
    _
  %v20 = vld [vmem:[#allocation2] sm:$0xff]
  %v21 = vld [vmem:[#allocation2 + $0x8] sm:$0xff]
  %v22 = vld [vmem:[%s0] sm:$0xf]
  %v23 = vld [vmem:[%s0 + $0x4] sm:$0xf]
  %v24 = vld [vmem:[%s1] sm:$0xf]
  %v25 = vld [vmem:[%s1 + $0x4] sm:$0xf]
  %v26 = vld [vmem:[%s1 + $0x8] sm:$0xf]
  %v27 = vld [vmem:[%s1 + $0xc] sm:$0xf]
  %v28 = vld [vmem:[%s1 + $0x10] sm:$0xf]
  %v29 = vld [vmem:[%s1 + $0x14] sm:$0xf]
  %v30 = vld [vmem:[%s1 + $0x18] sm:$0xf]
  %v31 = vld [vmem:[%s1 + $0x1c] sm:$0xf]
  %v32 = vld [vmem:[%s1 + $0x20] sm:$0xf]
  %v33 = vld [vmem:[%s1 + $0x24] sm:$0xf]
  %v34 = vld [vmem:[%s1 + $0x28] sm:$0xf]
  %v35 = vld [vmem:[%s1 + $0x2c] sm:$0xf]
  %v36 = vld [vmem:[%s1 + $0x30] sm:$0xf]
  %v37 = vld [vmem:[%s1 + $0x34] sm:$0xf]
  %v38 = vld [vmem:[%s1 + $0x38] sm:$0xf]
  %v39 = vld [vmem:[%s1 + $0x3c] sm:$0xf]
  %v42 = vunpack.c.l.b16 %v22
  %v43 = vunpack.c.l.b16 %v23
  %v44 = vpack.c.b16 %v43, %v42
  %v62 = vunpack.c.l.b16 %v24
  %v63 = vunpack.c.l.b16 %v25
  %v64 = vunpack.c.l.b16 %v26
  %v65 = vunpack.c.l.b16 %v27
  %v66 = vunpack.c.l.b16 %v28
  %v67 = vunpack.c.l.b16 %v29
  %v68 = vunpack.c.l.b16 %v30
  %v69 = vunpack.c.l.b16 %v31
  %v70 = vunpack.c.l.b16 %v32
  %v71 = vunpack.c.l.b16 %v33
  %v72 = vunpack.c.l.b16 %v34
  %v73 = vunpack.c.l.b16 %v35
  %v74 = vunpack.c.l.b16 %v36
  %v75 = vunpack.c.l.b16 %v37
  %v76 = vunpack.c.l.b16 %v38
  %v77 = vunpack.c.l.b16 %v39
  %v78 = vpack.c.b16 %v63, %v62
  %v79 = vpack.c.b16 %v65, %v64
  %v80 = vpack.c.b16 %v67, %v66
  %v81 = vpack.c.b16 %v69, %v68
  %v82 = vpack.c.b16 %v71, %v70
  %v83 = vpack.c.b16 %v73, %v72
  %v84 = vpack.c.b16 %v75, %v74
  %v85 = vpack.c.b16 %v77, %v76
  %94 = vmatpush.bf16.msra.mxu0 %v85
  %95 = vmatpush.bf16.msra.mxu0 %v84
  %96 = vmatpush.bf16.msra.mxu0 %v83
  %97 = vmatpush.bf16.msra.mxu0 %v82
  %98 = vmatpush.bf16.msra.mxu0 %v81
  %99 = vmatpush.bf16.msra.mxu0 %v80
  %100 = vmatpush.bf16.msra.mxu0 %v79
  %101 = vmatpush.bf16.msra.mxu0 %v78
  %102 = vmatmul.bf16.gmra.mxu0 %v44
  %v103 = vpop.f32.mrf.mxu0
  %v104 = vadd.f32 0.0, %v103
  %v105 = vpop.f32.mrf.mxu0
  %v106 = vadd.f32 0.0, %v105
  %107 = vdwg.mxu0
  %v108 = vadd.f32 %v20, %v104
  %v109 = vadd.f32 %v21, %v106
  %110 = vst [vmem:[#allocation2] sm:$0xff] %v108
  %111 = vst [vmem:[#allocation2 + $0x8] sm:$0xff] %v109
  // Predicated region
  $region18: #{seegera_forward.24} parent=0 // pred_check
    %p112 = pneg %p14
  $region19: #{seegera_forward.24} parent=0 // pred_check_branch
    %114 = sbr.rel (%p112) target = $region21
  $region20: #{seegera_forward.24} parent=0 // pred_region
    %v115 = vld [vmem:[#allocation2] sm:$0xff]
    %v116 = vld [vmem:[#allocation2 + $0x8] sm:$0xff]
    %v117 = vld [vmem:[%s2] sm:$0x1]
    %v119 = vperm.slane %v117, 0
    %v121 = vadd.f32 %v115, %v119
    %v122 = vadd.f32 %v116, %v119
    %123 = vst [vmem:[%s3] sm:$0xff] %v121
    %124 = vst [vmem:[%s3 + $0x8] sm:$0xff] %v122
  $region21: #{seegera_forward.24} parent=0 // pred_fallthru
    _
  // Predicated region
  $region22: #{seegera_forward.24} parent=0 // pred_check
    _
  $region23: #{seegera_forward.24} parent=0 // pred_check_branch
    %126 = sbr.rel (0) target = $region25
  $region24: #{seegera_forward.24} parent=0 // pred_region
    _
  $region25: #{seegera_forward.24} parent=0 // pred_fallthru
    _
  // Predicated region
  $region26: #{seegera_forward.24} parent=0 // pred_check
    _
  $region27: #{seegera_forward.24} parent=0 // pred_check_branch
    %128 = sbr.rel (0) target = $region29
  $region28: #{seegera_forward.24} parent=0 // pred_region
    _
  $region29: #{seegera_forward.24} parent=0 // pred_fallthru
    _

// kernel: seegera_forward.27
$region0: #{seegera_forward.27}
  #allocation0 [shape = 'u32[]', space=smem, size = 0x4, offset = 0x4, fixed_abs, tag = 'smem constant byte address 0x4 - core index']
  #allocation1 [shape = 'u32[72,128]{1,0:T(1,128)}', space=vmem, size = 0x9000, scoped, tag = 'internal scratch']
  %s0 = inlined_call_operand.vmem [shape: f32[16,128], index: 0, kind: input, shape index: {}]
  %s1 = inlined_call_operand.vmem [shape: bf16[1,128,128], index: 1, kind: input, shape index: {}]
  %s2 = inlined_call_operand.vmem [shape: f32[1,16,128], index: 2, kind: output, shape index: {}]
  %s3 = sld [smem:[#allocation0]]
  $region18: #{seegera_forward.27} parent=0
    _
  %s5 = ssub.s32 1, %s3
  %s6 = scalar_select 0, %s5, %s3
  // Predicated region
  $region2: #{seegera_forward.27} parent=0 // pred_check
    _
  $region3: #{seegera_forward.27} parent=0 // pred_check_branch
    %8 = sbr.rel (0) target = $region5
  $region4: #{seegera_forward.27} parent=0 // pred_region
    _
  $region5: #{seegera_forward.27} parent=0 // pred_fallthru
    _
  // Predicated region
  $region6: #{seegera_forward.27} parent=0 // pred_check
    _
  $region7: #{seegera_forward.27} parent=0 // pred_check_branch
    %10 = sbr.rel (0) target = $region9
  $region8: #{seegera_forward.27} parent=0 // pred_region
    _
  $region9: #{seegera_forward.27} parent=0 // pred_fallthru
    _
  %v11 = vld [vmem:[%s0] sm:$0xff]
  %v12 = vld [vmem:[%s0 + $0x8] sm:$0xff]
  %v13 = vand.u32 2147483647, %v11
  %v14 = vand.u32 2147483647, %v12
  %15 = vadd.xlane.f32.xlu0 %v13
  %v16 = vpop.xlane.xlu0 %15
  %17 = vadd.xlane.f32.xlu0 %v14
  %v18 = vpop.xlane.xlu0 %17
  %v19 = vmax.f32 %v16, 1e-12
  %v20 = vmax.f32 %v18, 1e-12
  %v21 = vrcp.pop %v19
  %v22 = vmul.f32 %v19, %v21
  %v23 = vsub.f32 1.0, %v22
  %v24 = vmul.f32 %v21, %v23
  %v25 = vadd.f32 %v21, %v24
  %vm26 = vweird.f32 %v19
  %vm27 = vweird.f32 %v21
  %vm28 = vmor %vm26, %vm27
  %v29 = vsel %vm28, %v21, %v25
  %v30 = vand.u32 2147483647, %v19
  %vm31 = vcmp.eq.f32.partialorder %v30, 8.507059e+37
  %v32 = vand.u32 %v19, 2147483648
  %v33 = vor.u32 1.1754944e-38, %v32
  %v34 = vsel %vm31, %v33, %v29
  %v35 = vmul.f32 %v11, %v34
  %v36 = vrcp.pop %v20
  %v37 = vmul.f32 %v20, %v36
  %v38 = vsub.f32 1.0, %v37
  %v39 = vmul.f32 %v36, %v38
  %v40 = vadd.f32 %v36, %v39
  %vm41 = vweird.f32 %v20
  %vm42 = vweird.f32 %v36
  %vm43 = vmor %vm41, %vm42
  %v44 = vsel %vm43, %v36, %v40
  %v45 = vand.u32 2147483647, %v20
  %vm46 = vcmp.eq.f32.partialorder %v45, 8.507059e+37
  %v47 = vand.u32 %v20, 2147483648
  %v48 = vor.u32 1.1754944e-38, %v47
  %v49 = vsel %vm46, %v48, %v44
  %v50 = vmul.f32 %v12, %v49
  %v51 = vpack.c.bf16 %v50, %v35
  %v52 = vld [vmem:[%s1] sm:$0xf]
  %v53 = vld [vmem:[%s1 + $0x4] sm:$0xf]
  %v54 = vld [vmem:[%s1 + $0x8] sm:$0xf]
  %v55 = vld [vmem:[%s1 + $0xc] sm:$0xf]
  %v56 = vld [vmem:[%s1 + $0x10] sm:$0xf]
  %v57 = vld [vmem:[%s1 + $0x14] sm:$0xf]
  %v58 = vld [vmem:[%s1 + $0x18] sm:$0xf]
  %v59 = vld [vmem:[%s1 + $0x1c] sm:$0xf]
  %v60 = vld [vmem:[%s1 + $0x20] sm:$0xf]
  %v61 = vld [vmem:[%s1 + $0x24] sm:$0xf]
  %v62 = vld [vmem:[%s1 + $0x28] sm:$0xf]
  %v63 = vld [vmem:[%s1 + $0x2c] sm:$0xf]
  %v64 = vld [vmem:[%s1 + $0x30] sm:$0xf]
  %v65 = vld [vmem:[%s1 + $0x34] sm:$0xf]
  %v66 = vld [vmem:[%s1 + $0x38] sm:$0xf]
  %v67 = vld [vmem:[%s1 + $0x3c] sm:$0xf]
  %v84 = vunpack.c.l.b16 %v52
  %v85 = vunpack.c.l.b16 %v53
  %v86 = vunpack.c.l.b16 %v54
  %v87 = vunpack.c.l.b16 %v55
  %v88 = vunpack.c.l.b16 %v56
  %v89 = vunpack.c.l.b16 %v57
  %v90 = vunpack.c.l.b16 %v58
  %v91 = vunpack.c.l.b16 %v59
  %v92 = vunpack.c.l.b16 %v60
  %v93 = vunpack.c.l.b16 %v61
  %v94 = vunpack.c.l.b16 %v62
  %v95 = vunpack.c.l.b16 %v63
  %v96 = vunpack.c.l.b16 %v64
  %v97 = vunpack.c.l.b16 %v65
  %v98 = vunpack.c.l.b16 %v66
  %v99 = vunpack.c.l.b16 %v67
  %v100 = vpack.c.b16 %v85, %v84
  %v101 = vpack.c.b16 %v87, %v86
  %v102 = vpack.c.b16 %v89, %v88
  %v103 = vpack.c.b16 %v91, %v90
  %v104 = vpack.c.b16 %v93, %v92
  %v105 = vpack.c.b16 %v95, %v94
  %v106 = vpack.c.b16 %v97, %v96
  %v107 = vpack.c.b16 %v99, %v98
  %116 = vmatpush.bf16.msra.mxu0 %v107
  %117 = vmatpush.bf16.msra.mxu0 %v106
  %118 = vmatpush.bf16.msra.mxu0 %v105
  %119 = vmatpush.bf16.msra.mxu0 %v104
  %120 = vmatpush.bf16.msra.mxu0 %v103
  %121 = vmatpush.bf16.msra.mxu0 %v102
  %122 = vmatpush.bf16.msra.mxu0 %v101
  %123 = vmatpush.bf16.msra.mxu0 %v100
  %124 = vmatmul.bf16.gmra.mxu0 %v51
  %v125 = vpop.f32.mrf.mxu0
  %v126 = vadd.f32 0.0, %v125
  %v127 = vpop.f32.mrf.mxu0
  %v128 = vadd.f32 0.0, %v127
  %129 = vdwg.mxu0
  %130 = vst [vmem:[%s2] sm:$0xff] %v126
  %131 = vst [vmem:[%s2 + $0x8] sm:$0xff] %v128
  // Predicated region
  $region10: #{seegera_forward.27} parent=0 // pred_check
    _
  $region11: #{seegera_forward.27} parent=0 // pred_check_branch
    %133 = sbr.rel (0) target = $region13
  $region12: #{seegera_forward.27} parent=0 // pred_region
    _
  $region13: #{seegera_forward.27} parent=0 // pred_fallthru
    _
  // Predicated region
  $region14: #{seegera_forward.27} parent=0 // pred_check
    _
  $region15: #{seegera_forward.27} parent=0 // pred_check_branch
    %135 = sbr.rel (0) target = $region17
  $region16: #{seegera_forward.27} parent=0 // pred_region
    _
  $region17: #{seegera_forward.27} parent=0 // pred_fallthru
    _

// kernel: seegera_forward.26
$region0: #{seegera_forward.26}
  #allocation0 [shape = 'u32[]', space=smem, size = 0x4, offset = 0x4, fixed_abs, tag = 'smem constant byte address 0x4 - core index']
  #allocation1 [shape = 'u32[72,128]{1,0:T(1,128)}', space=vmem, size = 0x9000, scoped, tag = 'internal scratch']
  %s0 = inlined_call_operand.vmem [shape: bf16[1,128,128], index: 0, kind: input, shape index: {}, may-alias: {0,1}]
  %s1 = inlined_call_operand.vmem [shape: bf16[1,128,128], index: 1, kind: input, shape index: {}, may-alias: {0,1}]
  %s2 = inlined_call_operand.vmem [shape: f32[1,128,128], index: 2, kind: output, shape index: {}]
  %s3 = sld [smem:[#allocation0]]
  $region18: #{seegera_forward.26} parent=0
    _
  %s5 = ssub.s32 1, %s3
  %s6 = scalar_select 0, %s5, %s3
  // Predicated region
  $region2: #{seegera_forward.26} parent=0 // pred_check
    _
  $region3: #{seegera_forward.26} parent=0 // pred_check_branch
    %8 = sbr.rel (0) target = $region5
  $region4: #{seegera_forward.26} parent=0 // pred_region
    _
  $region5: #{seegera_forward.26} parent=0 // pred_fallthru
    _
  // Predicated region
  $region6: #{seegera_forward.26} parent=0 // pred_check
    _
  $region7: #{seegera_forward.26} parent=0 // pred_check_branch
    %10 = sbr.rel (0) target = $region9
  $region8: #{seegera_forward.26} parent=0 // pred_region
    _
  $region9: #{seegera_forward.26} parent=0 // pred_fallthru
    _
  %v11 = vld [vmem:[%s0] sm:$0xf]
  %v12 = vld [vmem:[%s0 + $0x4] sm:$0xf]
  %v13 = vld [vmem:[%s0 + $0x8] sm:$0xf]
  %v14 = vld [vmem:[%s0 + $0xc] sm:$0xf]
  %v15 = vld [vmem:[%s0 + $0x10] sm:$0xf]
  %v16 = vld [vmem:[%s0 + $0x14] sm:$0xf]
  %v17 = vld [vmem:[%s0 + $0x18] sm:$0xf]
  %v18 = vld [vmem:[%s0 + $0x1c] sm:$0xf]
  %v19 = vld [vmem:[%s0 + $0x20] sm:$0xf]
  %v20 = vld [vmem:[%s0 + $0x24] sm:$0xf]
  %v21 = vld [vmem:[%s0 + $0x28] sm:$0xf]
  %v22 = vld [vmem:[%s0 + $0x2c] sm:$0xf]
  %v23 = vld [vmem:[%s0 + $0x30] sm:$0xf]
  %v24 = vld [vmem:[%s0 + $0x34] sm:$0xf]
  %v25 = vld [vmem:[%s0 + $0x38] sm:$0xf]
  %v26 = vld [vmem:[%s0 + $0x3c] sm:$0xf]
  %v27 = vld [vmem:[%s1] sm:$0xf]
  %v28 = vld [vmem:[%s1 + $0x4] sm:$0xf]
  %v29 = vld [vmem:[%s1 + $0x8] sm:$0xf]
  %v30 = vld [vmem:[%s1 + $0xc] sm:$0xf]
  %v31 = vld [vmem:[%s1 + $0x10] sm:$0xf]
  %v32 = vld [vmem:[%s1 + $0x14] sm:$0xf]
  %v33 = vld [vmem:[%s1 + $0x18] sm:$0xf]
  %v34 = vld [vmem:[%s1 + $0x1c] sm:$0xf]
  %v35 = vld [vmem:[%s1 + $0x20] sm:$0xf]
  %v36 = vld [vmem:[%s1 + $0x24] sm:$0xf]
  %v37 = vld [vmem:[%s1 + $0x28] sm:$0xf]
  %v38 = vld [vmem:[%s1 + $0x2c] sm:$0xf]
  %v39 = vld [vmem:[%s1 + $0x30] sm:$0xf]
  %v40 = vld [vmem:[%s1 + $0x34] sm:$0xf]
  %v41 = vld [vmem:[%s1 + $0x38] sm:$0xf]
  %v42 = vld [vmem:[%s1 + $0x3c] sm:$0xf]
  %v59 = vunpack.c.l.b16 %v11
  %v60 = vunpack.c.l.b16 %v12
  %v61 = vunpack.c.l.b16 %v13
  %v62 = vunpack.c.l.b16 %v14
  %v63 = vunpack.c.l.b16 %v15
  %v64 = vunpack.c.l.b16 %v16
  %v65 = vunpack.c.l.b16 %v17
  %v66 = vunpack.c.l.b16 %v18
  %v67 = vunpack.c.l.b16 %v19
  %v68 = vunpack.c.l.b16 %v20
  %v69 = vunpack.c.l.b16 %v21
  %v70 = vunpack.c.l.b16 %v22
  %v71 = vunpack.c.l.b16 %v23
  %v72 = vunpack.c.l.b16 %v24
  %v73 = vunpack.c.l.b16 %v25
  %v74 = vunpack.c.l.b16 %v26
  %v75 = vpack.c.b16 %v60, %v59
  %v76 = vpack.c.b16 %v62, %v61
  %v77 = vpack.c.b16 %v64, %v63
  %v78 = vpack.c.b16 %v66, %v65
  %v79 = vpack.c.b16 %v68, %v67
  %v80 = vpack.c.b16 %v70, %v69
  %v81 = vpack.c.b16 %v72, %v71
  %v82 = vpack.c.b16 %v74, %v73
  %v107 = vunpack.c.l.b16 %v27
  %v108 = vunpack.c.l.b16 %v28
  %v109 = vunpack.c.l.b16 %v29
  %v110 = vunpack.c.l.b16 %v30
  %v111 = vunpack.c.l.b16 %v31
  %v112 = vunpack.c.l.b16 %v32
  %v113 = vunpack.c.l.b16 %v33
  %v114 = vunpack.c.l.b16 %v34
  %v115 = vunpack.c.l.b16 %v35
  %v116 = vunpack.c.l.b16 %v36
  %v117 = vunpack.c.l.b16 %v37
  %v118 = vunpack.c.l.b16 %v38
  %v119 = vunpack.c.l.b16 %v39
  %v120 = vunpack.c.l.b16 %v40
  %v121 = vunpack.c.l.b16 %v41
  %v122 = vunpack.c.l.b16 %v42
  %v123 = vpack.c.b16 %v108, %v107
  %v124 = vpack.c.b16 %v110, %v109
  %v125 = vpack.c.b16 %v112, %v111
  %v126 = vpack.c.b16 %v114, %v113
  %v127 = vpack.c.b16 %v116, %v115
  %v128 = vpack.c.b16 %v118, %v117
  %v129 = vpack.c.b16 %v120, %v119
  %v130 = vpack.c.b16 %v122, %v121
  %139 = vmatpush.bf16.xpose.msra.mxu0 %v130
  %140 = vmatpush.bf16.xpose.msra.mxu0 %v129
  %141 = vmatpush.bf16.xpose.msra.mxu0 %v128
  %142 = vmatpush.bf16.xpose.msra.mxu0 %v127
  %143 = vmatpush.bf16.xpose.msra.mxu0 %v126
  %144 = vmatpush.bf16.xpose.msra.mxu0 %v125
  %145 = vmatpush.bf16.xpose.msra.mxu0 %v124
  %146 = vmatpush.bf16.xpose.msra.mxu0 %v123
  %147 = vmatmul.bf16.gmra.mxu0 %v75
  %v148 = vpop.f32.mrf.mxu0
  %v149 = vadd.f32 0.0, %v148
  %v150 = vpop.f32.mrf.mxu0
  %v151 = vadd.f32 0.0, %v150
  %152 = vmatmul.bf16.gmra.mxu0 %v76
  %v153 = vpop.f32.mrf.mxu0
  %v154 = vadd.f32 0.0, %v153
  %v155 = vpop.f32.mrf.mxu0
  %v156 = vadd.f32 0.0, %v155
  %157 = vmatmul.bf16.gmra.mxu0 %v77
  %v158 = vpop.f32.mrf.mxu0
  %v159 = vadd.f32 0.0, %v158
  %v160 = vpop.f32.mrf.mxu0
  %v161 = vadd.f32 0.0, %v160
  %162 = vmatmul.bf16.gmra.mxu0 %v78
  %v163 = vpop.f32.mrf.mxu0
  %v164 = vadd.f32 0.0, %v163
  %v165 = vpop.f32.mrf.mxu0
  %v166 = vadd.f32 0.0, %v165
  %167 = vmatmul.bf16.gmra.mxu0 %v79
  %v168 = vpop.f32.mrf.mxu0
  %v169 = vadd.f32 0.0, %v168
  %v170 = vpop.f32.mrf.mxu0
  %v171 = vadd.f32 0.0, %v170
  %172 = vmatmul.bf16.gmra.mxu0 %v80
  %v173 = vpop.f32.mrf.mxu0
  %v174 = vadd.f32 0.0, %v173
  %v175 = vpop.f32.mrf.mxu0
  %v176 = vadd.f32 0.0, %v175
  %177 = vmatmul.bf16.gmra.mxu0 %v81
  %v178 = vpop.f32.mrf.mxu0
  %v179 = vadd.f32 0.0, %v178
  %v180 = vpop.f32.mrf.mxu0
  %v181 = vadd.f32 0.0, %v180
  %182 = vmatmul.bf16.gmra.mxu0 %v82
  %v183 = vpop.f32.mrf.mxu0
  %v184 = vadd.f32 0.0, %v183
  %v185 = vpop.f32.mrf.mxu0
  %v186 = vadd.f32 0.0, %v185
  %187 = vdwg.mxu0
  %188 = vst [vmem:[%s2] sm:$0xff] %v149
  %189 = vst [vmem:[%s2 + $0x8] sm:$0xff] %v151
  %190 = vst [vmem:[%s2 + $0x10] sm:$0xff] %v154
  %191 = vst [vmem:[%s2 + $0x18] sm:$0xff] %v156
  %192 = vst [vmem:[%s2 + $0x20] sm:$0xff] %v159
  %193 = vst [vmem:[%s2 + $0x28] sm:$0xff] %v161
  %194 = vst [vmem:[%s2 + $0x30] sm:$0xff] %v164
  %195 = vst [vmem:[%s2 + $0x38] sm:$0xff] %v166
  %196 = vst [vmem:[%s2 + $0x40] sm:$0xff] %v169
  %197 = vst [vmem:[%s2 + $0x48] sm:$0xff] %v171
  %198 = vst [vmem:[%s2 + $0x50] sm:$0xff] %v174
  %199 = vst [vmem:[%s2 + $0x58] sm:$0xff] %v176
  %200 = vst [vmem:[%s2 + $0x60] sm:$0xff] %v179
  %201 = vst [vmem:[%s2 + $0x68] sm:$0xff] %v181
  %202 = vst [vmem:[%s2 + $0x70] sm:$0xff] %v184
  %203 = vst [vmem:[%s2 + $0x78] sm:$0xff] %v186
  // Predicated region
  $region10: #{seegera_forward.26} parent=0 // pred_check
    _
  $region11: #{seegera_forward.26} parent=0 // pred_check_branch
    %205 = sbr.rel (0) target = $region13
  $region12: #{seegera_forward.26} parent=0 // pred_region
    _
  $region13: #{seegera_forward.26} parent=0 // pred_fallthru
    _
  // Predicated region
  $region14: #{seegera_forward.26} parent=0 // pred_check
    _
  $region15: #{seegera_forward.26} parent=0 // pred_check_branch
    %207 = sbr.rel (0) target = $region17
  $region16: #{seegera_forward.26} parent=0 // pred_region
    _
  $region17: #{seegera_forward.26} parent=0 // pred_fallthru
    _

</llo_original>
